<compile_context>
chip_gen: v7x
topology: tpu7x:2x2x1
jax: 0.10.0
libtpu: 0.0.40
codegen_flags: <defaults>
</compile_context>

<pallas_src>
import functools

import jax
import jax.numpy as jnp
from jax.experimental import pallas as pl
from jax.experimental.pallas import tpu as pltpu


def _mac_kernel(max_step, dim,
                context_ref, question_ref, know_ref,
                pa_w_ref, pa_b_ref,
                cq_w_ref, cq_b_ref,
                ca_w_ref, ca_b_ref,
                rm_w_ref, rm_b_ref,
                rcT_m_ref, rcT_k_ref, rc_b_ref,
                ra_w_ref, ra_b_ref,
                wc_w_ref, wc_b_ref,
                cls1_w_ref, cls1_b_ref, cls2_w_ref, cls2_b_ref,
                mem_out_ref, logits_out_ref):
    D = dim
    ctx = context_ref[...]                    # (Bb, S, D)
    q = question_ref[...]                     # (Bb, 2D)
    know = know_ref[...]                      # (Bb, N, D)
    Bb = ctx.shape[0]

    # Loop-invariant weights.  Static half-slices of each "concat" weight replace
    # torch.cat(...) @ W with two matmuls summed (no concat temps).
    cq_w_c = cq_w_ref[:D, :]                  # acts on control
    cq_w_p = cq_w_ref[D:, :]                  # acts on the position-aware projection
    cq_b = cq_b_ref[...]                      # (1, D)
    ca_w = ca_w_ref[...]                      # (1, D)  context-attn weight (D -> 1)
    ca_b = ca_b_ref[...]                      # (1, 1)
    rm_w = rm_w_ref[...]                      # (D, D)
    rm_b = rm_b_ref[...]                      # (1, D)
    rcT_m = rcT_m_ref[...]                    # (D, D) = rc_w[:D].T  (acts on mem*know)
    rcT_k = rcT_k_ref[...]                    # (D, D) = rc_w[D:].T  (acts on know)
    rc_b = rc_b_ref[...]                      # (1, D)
    ra_w = ra_w_ref[...]                      # (1, D)  read-attn weight (D -> 1)
    ra_b = ra_b_ref[...]                      # (1, 1)
    wc_w_r = wc_w_ref[:D, :]                  # acts on read
    wc_w_m = wc_w_ref[D:, :]                  # acts on previous memory
    wc_b = wc_b_ref[...]                      # (1, D)

    # mem_0 / control_0 are zero nn.Parameters expanded over the batch (eval mode).
    control0 = jnp.zeros((Bb, D), jnp.float32)
    memory0 = jnp.zeros((Bb, D), jnp.float32)

    def step(i, carry):
        control, memory = carry

        # -------- ControlUnit --------
        pa = (jnp.dot(q, pa_w_ref[i], preferred_element_type=jnp.float32)
              + pa_b_ref[i])                                                   # (Bb, D)
        cq = (jnp.dot(control, cq_w_c, preferred_element_type=jnp.float32)
              + jnp.dot(pa, cq_w_p, preferred_element_type=jnp.float32)
              + cq_b)                                                          # (Bb, D)
        # Fold the D->1 attention weight into the query vector before the (B,S,D)
        # broadcast: sum_d cq_d*ctx_d*w_d == sum_d ctx_d*(cq_d*w_d).
        cqw = cq * ca_w                                                        # (Bb, D)
        aw = jnp.sum(ctx * cqw[:, None, :], axis=-1) + ca_b                    # (Bb, S)
        aw = aw - jnp.max(aw, axis=1, keepdims=True)
        e = jnp.exp(aw)
        attn = e * pl.reciprocal(jnp.sum(e, axis=1, keepdims=True), approx=True)
        new_control = jnp.sum(attn[:, :, None] * ctx, axis=1)                  # (Bb, D)

        # -------- ReadUnit (algebraically refactored) --------
        # attn2_{bn} = sum_e know_{bne} * (memp_{be}*u_{be} + u2_{be}) + (cw·rc_b + ra_b)
        # with cw = control*ra_w, u = cw @ rc_w[:D].T, u2 = cw @ rc_w[D:].T.
        memp = jnp.dot(memory, rm_w, preferred_element_type=jnp.float32) + rm_b
        cw = new_control * ra_w                                                # (Bb, D)
        u_mk = jnp.dot(cw, rcT_m, preferred_element_type=jnp.float32)          # (Bb, D)
        u_k = jnp.dot(cw, rcT_k, preferred_element_type=jnp.float32)           # (Bb, D)
        wvec = memp * u_mk + u_k                                               # (Bb, D)
        bias = jnp.sum(cw * rc_b, axis=-1, keepdims=True) + ra_b               # (Bb, 1)
        aw2 = jnp.sum(know * wvec[:, None, :], axis=-1) + bias                 # (Bb, N)
        aw2 = aw2 - jnp.max(aw2, axis=1, keepdims=True)
        e2 = jnp.exp(aw2)
        attn2 = e2 * pl.reciprocal(jnp.sum(e2, axis=1, keepdims=True), approx=True)
        read = jnp.sum(attn2[:, :, None] * know, axis=1)                       # (Bb, D)

        # -------- WriteUnit (self_attention=False, memory_gate=False) --------
        new_memory = (jnp.dot(read, wc_w_r, preferred_element_type=jnp.float32)
                      + jnp.dot(memory, wc_w_m, preferred_element_type=jnp.float32)
                      + wc_b)                                                  # (Bb, D)
        return new_control, new_memory

    _, memory = jax.lax.fori_loop(0, max_step, step, (control0, memory0),
                                  unroll=True)
    mem_out_ref[...] = memory

    # -------- Classifier head: linear(3D->D) -> ELU -> linear(D->classes) --------
    # cat([memory, h], 1) @ W1 is computed as split-weight sums.
    h1 = (jnp.dot(memory, cls1_w_ref[:D, :], preferred_element_type=jnp.float32)
          + jnp.dot(q, cls1_w_ref[D:, :], preferred_element_type=jnp.float32)
          + cls1_b_ref[...])
    h1 = jnp.where(h1 > 0, h1, jnp.exp(jnp.minimum(h1, 0.0)) - 1.0)            # ELU
    logits_out_ref[...] = (jnp.dot(h1, cls2_w_ref[...],
                                   preferred_element_type=jnp.float32)
                           + cls2_b_ref[...])


def mac_network_tail_forward(context, question, knowledge, params, max_step,
                             block_b=None):
    """context: (B,S,D)  question: (B,2D)  knowledge: (B,D,N) (PyTorch layout)."""
    know = jnp.transpose(knowledge, (0, 2, 1)).astype(jnp.float32)   # -> (B, N, D)
    context = context.astype(jnp.float32)
    question = question.astype(jnp.float32)
    B, S, D = context.shape
    N = know.shape[1]
    C = params["cls2_w"].shape[1]

    # Pre-transpose the ReadUnit concat weight halves once (XLA-side, free)
    # so the kernel never transposes inside the recurrence.
    rcT_m = jnp.transpose(params["rc_w"][:D, :])      # (D, D)
    rcT_k = jnp.transpose(params["rc_w"][D:, :])      # (D, D)

    if block_b is None:
        block_b = B if B <= 8 else 8          # keep sublane-facing block dims aligned
    grid = (pl.cdiv(B, block_b),)

    batch3 = lambda i: (i, 0, 0)
    batch2 = lambda i: (i, 0)
    full3 = lambda i: (0, 0, 0)
    full2 = lambda i: (0, 0)

    in_specs = [
        pl.BlockSpec((block_b, S, D), batch3),          # context
        pl.BlockSpec((block_b, 2 * D), batch2),         # question (h)
        pl.BlockSpec((block_b, N, D), batch3),          # knowledge
        pl.BlockSpec((max_step, 2 * D, D), full3),      # pa_w
        pl.BlockSpec((max_step, 1, D), full3),          # pa_b
        pl.BlockSpec((2 * D, D), full2),                # cq_w
        pl.BlockSpec((1, D), full2),                    # cq_b
        pl.BlockSpec((1, D), full2),                    # ca_w
        pl.BlockSpec((1, 1), full2),                    # ca_b
        pl.BlockSpec((D, D), full2),                    # rm_w
        pl.BlockSpec((1, D), full2),                    # rm_b
        pl.BlockSpec((D, D), full2),                    # rcT_m
        pl.BlockSpec((D, D), full2),                    # rcT_k
        pl.BlockSpec((1, D), full2),                    # rc_b
        pl.BlockSpec((1, D), full2),                    # ra_w
        pl.BlockSpec((1, 1), full2),                    # ra_b
        pl.BlockSpec((2 * D, D), full2),                # wc_w
        pl.BlockSpec((1, D), full2),                    # wc_b
        pl.BlockSpec((3 * D, D), full2),                # cls1_w
        pl.BlockSpec((1, D), full2),                    # cls1_b
        pl.BlockSpec((D, C), full2),                    # cls2_w
        pl.BlockSpec((1, C), full2),                    # cls2_b
    ]

    inputs = [context, question, know,
              params["pa_w"], params["pa_b"],
              params["cq_w"], params["cq_b"],
              params["ca_w"], params["ca_b"],
              params["rm_w"], params["rm_b"],
              rcT_m, rcT_k, params["rc_b"],
              params["ra_w"], params["ra_b"],
              params["wc_w"], params["wc_b"],
              params["cls1_w"], params["cls1_b"],
              params["cls2_w"], params["cls2_b"]]

    out_shape = (jax.ShapeDtypeStruct((B, D), jnp.float32),
                 jax.ShapeDtypeStruct((B, C), jnp.float32))
    out_specs = (pl.BlockSpec((block_b, D), batch2),
                 pl.BlockSpec((block_b, C), batch2))

    return pl.pallas_call(
        functools.partial(_mac_kernel, max_step, D),
        out_shape=out_shape,
        grid=grid,
        in_specs=in_specs,
        out_specs=out_specs,
        compiler_params=pltpu.CompilerParams(
            dimension_semantics=("parallel",)),
    )(*inputs)


def init_params(key, dim, max_step, classes=28):
    """Deterministic xavier-uniform weights (biases zero), stored as (in, out)."""
    def xav(k, in_dim, out_dim):
        bound = (6.0 / (in_dim + out_dim)) ** 0.5
        w = jax.random.uniform(k, (out_dim, in_dim), jnp.float32, -bound, bound)
        return jnp.transpose(w)        # (in, out)

    keys = jax.random.split(key, max_step + 8)
    pa_w = jnp.stack([xav(keys[i], 2 * dim, dim) for i in range(max_step)])  # (T,2D,D)
    pa_b = jnp.zeros((max_step, 1, dim), jnp.float32)
    return dict(
        pa_w=pa_w, pa_b=pa_b,
        cq_w=xav(keys[max_step + 0], 2 * dim, dim), cq_b=jnp.zeros((1, dim), jnp.float32),
        ca_w=xav(keys[max_step + 1], dim, 1).reshape(1, dim), ca_b=jnp.zeros((1, 1), jnp.float32),
        rm_w=xav(keys[max_step + 2], dim, dim), rm_b=jnp.zeros((1, dim), jnp.float32),
        rc_w=xav(keys[max_step + 3], 2 * dim, dim), rc_b=jnp.zeros((1, dim), jnp.float32),
        ra_w=xav(keys[max_step + 4], dim, 1).reshape(1, dim), ra_b=jnp.zeros((1, 1), jnp.float32),
        wc_w=xav(keys[max_step + 5], 2 * dim, dim), wc_b=jnp.zeros((1, dim), jnp.float32),
        cls1_w=xav(keys[max_step + 6], 3 * dim, dim), cls1_b=jnp.zeros((1, dim), jnp.float32),
        cls2_w=xav(keys[max_step + 7], dim, classes), cls2_b=jnp.zeros((1, classes), jnp.float32),
    )


def mac_network_tail_reference(context, question, knowledge, p, max_step):
    """Pure-JAX literal mirror of the PyTorch forward (eval mode)."""
    know = jnp.transpose(knowledge, (0, 2, 1))
    B, S, D = context.shape
    control = jnp.zeros((B, D), jnp.float32)
    memory = jnp.zeros((B, D), jnp.float32)
    for i in range(max_step):
        pa = question @ p["pa_w"][i] + p["pa_b"][i]
        cq = jnp.concatenate([control, pa], 1) @ p["cq_w"] + p["cq_b"]
        aw = jnp.sum(cq[:, None, :] * context * p["ca_w"][None], -1) + p["ca_b"][0, 0]
        attn = jax.nn.softmax(aw, axis=1)
        control = jnp.sum(attn[:, :, None] * context, 1)

        memp = memory @ p["rm_w"] + p["rm_b"]
        cat2 = jnp.concatenate([memp[:, None, :] * know, know], 2)
        conc = cat2 @ p["rc_w"] + p["rc_b"]
        aw2 = jnp.sum(conc * control[:, None, :] * p["ra_w"][None], -1) + p["ra_b"][0, 0]
        attn2 = jax.nn.softmax(aw2, axis=1)
        read = jnp.sum(attn2[:, :, None] * know, 1)

        memory = jnp.concatenate([read, memory], 1) @ p["wc_w"] + p["wc_b"]

    cls_in = jnp.concatenate([memory, question], 1)
    h1 = jax.nn.elu(cls_in @ p["cls1_w"] + p["cls1_b"])
    logits = h1 @ p["cls2_w"] + p["cls2_b"]
    return memory, logits


if __name__ == "__main__":
    B, S, D, N, C = 2, 8, 32, 16, 28
    MAX_STEP = 4

    key = jax.random.PRNGKey(0)
    k_ctx, k_q, k_know, k_par = jax.random.split(key, 4)
    context = jax.random.normal(k_ctx, (B, S, D), jnp.float32)      # lstm_proj output
    question = jax.random.normal(k_q, (B, 2 * D), jnp.float32)      # LSTM hidden h
    knowledge = jax.random.normal(k_know, (B, D, N), jnp.float32)   # PyTorch (B, dim, HW)

    params = init_params(k_par, D, MAX_STEP, classes=C)

    memory, logits = mac_network_tail_forward(context, question, knowledge,
                                              params, MAX_STEP)
    memory, logits = jax.block_until_ready((memory, logits))

    mem_ref, log_ref = mac_network_tail_reference(context, question, knowledge,
                                                  params, MAX_STEP)
    assert memory.shape == (B, D) and logits.shape == (B, C)
    # Tolerances relaxed vs. exact math because the kernel uses the EUP approximate
    # reciprocal for softmax denominators (and reassociates the read-attention sum).
    assert jnp.allclose(memory, mem_ref, atol=5e-3, rtol=5e-3), "memory mismatch vs reference"
    assert jnp.allclose(logits, log_ref, atol=1e-2, rtol=1e-2), "logits mismatch vs reference"

    print("KERNEL_OK")
</pallas_src>

<mosaic_0001>
module attributes {stable_mosaic.version = 11 : i64} {
  func.func @_mac_kernel(%arg0: i32, %arg1: memref<2x8x32xf32, #tpu.memory_space<vmem>>, %arg2: memref<2x64xf32, #tpu.memory_space<vmem>>, %arg3: memref<2x16x32xf32, #tpu.memory_space<vmem>>, %arg4: memref<4x64x32xf32, #tpu.memory_space<vmem>>, %arg5: memref<4x1x32xf32, #tpu.memory_space<vmem>>, %arg6: memref<64x32xf32, #tpu.memory_space<vmem>>, %arg7: memref<1x32xf32, #tpu.memory_space<vmem>>, %arg8: memref<1x32xf32, #tpu.memory_space<vmem>>, %arg9: memref<1x1xf32, #tpu.memory_space<vmem>>, %arg10: memref<32x32xf32, #tpu.memory_space<vmem>>, %arg11: memref<1x32xf32, #tpu.memory_space<vmem>>, %arg12: memref<32x32xf32, #tpu.memory_space<vmem>>, %arg13: memref<32x32xf32, #tpu.memory_space<vmem>>, %arg14: memref<1x32xf32, #tpu.memory_space<vmem>>, %arg15: memref<1x32xf32, #tpu.memory_space<vmem>>, %arg16: memref<1x1xf32, #tpu.memory_space<vmem>>, %arg17: memref<64x32xf32, #tpu.memory_space<vmem>>, %arg18: memref<1x32xf32, #tpu.memory_space<vmem>>, %arg19: memref<96x32xf32, #tpu.memory_space<vmem>>, %arg20: memref<1x32xf32, #tpu.memory_space<vmem>>, %arg21: memref<32x28xf32, #tpu.memory_space<vmem>>, %arg22: memref<1x28xf32, #tpu.memory_space<vmem>>, %arg23: memref<2x32xf32, #tpu.memory_space<vmem>>, %arg24: memref<2x28xf32, #tpu.memory_space<vmem>>) attributes {dimension_semantics = [#tpu.dimension_semantics<parallel>], iteration_bounds = array<i64: 1>, scalar_prefetch = 0 : i64, scratch_operands = 0 : i64, tpu.core_type = #tpu.core_type<tc>, window_params = [{transform_indices = @transform_0, window_bounds = array<i64: 2, 8, 32>}, {transform_indices = @transform_1, window_bounds = array<i64: 2, 64>}, {transform_indices = @transform_2, window_bounds = array<i64: 2, 16, 32>}, {pipeline_mode = #tpu.pipeline_mode<synchronous>, transform_indices = @transform_3, window_bounds = array<i64: 4, 64, 32>}, {pipeline_mode = #tpu.pipeline_mode<synchronous>, transform_indices = @transform_4, window_bounds = array<i64: 4, 1, 32>}, {pipeline_mode = #tpu.pipeline_mode<synchronous>, transform_indices = @transform_5, window_bounds = array<i64: 64, 32>}, {pipeline_mode = #tpu.pipeline_mode<synchronous>, transform_indices = @transform_6, window_bounds = array<i64: 1, 32>}, {pipeline_mode = #tpu.pipeline_mode<synchronous>, transform_indices = @transform_7, window_bounds = array<i64: 1, 32>}, {pipeline_mode = #tpu.pipeline_mode<synchronous>, transform_indices = @transform_8, window_bounds = array<i64: 1, 1>}, {pipeline_mode = #tpu.pipeline_mode<synchronous>, transform_indices = @transform_9, window_bounds = array<i64: 32, 32>}, {pipeline_mode = #tpu.pipeline_mode<synchronous>, transform_indices = @transform_10, window_bounds = array<i64: 1, 32>}, {pipeline_mode = #tpu.pipeline_mode<synchronous>, transform_indices = @transform_11, window_bounds = array<i64: 32, 32>}, {pipeline_mode = #tpu.pipeline_mode<synchronous>, transform_indices = @transform_12, window_bounds = array<i64: 32, 32>}, {pipeline_mode = #tpu.pipeline_mode<synchronous>, transform_indices = @transform_13, window_bounds = array<i64: 1, 32>}, {pipeline_mode = #tpu.pipeline_mode<synchronous>, transform_indices = @transform_14, window_bounds = array<i64: 1, 32>}, {pipeline_mode = #tpu.pipeline_mode<synchronous>, transform_indices = @transform_15, window_bounds = array<i64: 1, 1>}, {pipeline_mode = #tpu.pipeline_mode<synchronous>, transform_indices = @transform_16, window_bounds = array<i64: 64, 32>}, {pipeline_mode = #tpu.pipeline_mode<synchronous>, transform_indices = @transform_17, window_bounds = array<i64: 1, 32>}, {pipeline_mode = #tpu.pipeline_mode<synchronous>, transform_indices = @transform_18, window_bounds = array<i64: 96, 32>}, {pipeline_mode = #tpu.pipeline_mode<synchronous>, transform_indices = @transform_19, window_bounds = array<i64: 1, 32>}, {pipeline_mode = #tpu.pipeline_mode<synchronous>, transform_indices = @transform_20, window_bounds = array<i64: 32, 28>}, {pipeline_mode = #tpu.pipeline_mode<synchronous>, transform_indices = @transform_21, window_bounds = array<i64: 1, 28>}, {transform_indices = @transform_22, window_bounds = array<i64: 2, 32>}, {transform_indices = @transform_23, window_bounds = array<i64: 2, 28>}]} {
    %c0 = arith.constant 0 : index
    %c0_0 = arith.constant 0 : index
    %c0_1 = arith.constant 0 : index
    %0 = vector.load %arg1[%c0, %c0_0, %c0_1] : memref<2x8x32xf32, #tpu.memory_space<vmem>>, vector<2x8x32xf32>
    %c0_2 = arith.constant 0 : index
    %c0_3 = arith.constant 0 : index
    %1 = vector.load %arg2[%c0_2, %c0_3] : memref<2x64xf32, #tpu.memory_space<vmem>>, vector<2x64xf32>
    %c0_4 = arith.constant 0 : index
    %c0_5 = arith.constant 0 : index
    %c0_6 = arith.constant 0 : index
    %2 = vector.load %arg3[%c0_4, %c0_5, %c0_6] : memref<2x16x32xf32, #tpu.memory_space<vmem>>, vector<2x16x32xf32>
    %c0_7 = arith.constant 0 : index
    %c0_8 = arith.constant 0 : index
    %3 = vector.load %arg6[%c0_7, %c0_8] : memref<64x32xf32, #tpu.memory_space<vmem>>, vector<32x32xf32>
    %c32 = arith.constant 32 : index
    %c0_9 = arith.constant 0 : index
    %4 = vector.load %arg6[%c32, %c0_9] : memref<64x32xf32, #tpu.memory_space<vmem>>, vector<32x32xf32>
    %c0_10 = arith.constant 0 : index
    %c0_11 = arith.constant 0 : index
    %5 = vector.load %arg7[%c0_10, %c0_11] : memref<1x32xf32, #tpu.memory_space<vmem>>, vector<1x32xf32>
    %c0_12 = arith.constant 0 : index
    %c0_13 = arith.constant 0 : index
    %6 = vector.load %arg8[%c0_12, %c0_13] : memref<1x32xf32, #tpu.memory_space<vmem>>, vector<1x32xf32>
    %c0_14 = arith.constant 0 : index
    %c0_15 = arith.constant 0 : index
    %7 = vector.load %arg9[%c0_14, %c0_15] : memref<1x1xf32, #tpu.memory_space<vmem>>, vector<1x1xf32>
    %c0_16 = arith.constant 0 : index
    %c0_17 = arith.constant 0 : index
    %8 = vector.load %arg10[%c0_16, %c0_17] : memref<32x32xf32, #tpu.memory_space<vmem>>, vector<32x32xf32>
    %c0_18 = arith.constant 0 : index
    %c0_19 = arith.constant 0 : index
    %9 = vector.load %arg11[%c0_18, %c0_19] : memref<1x32xf32, #tpu.memory_space<vmem>>, vector<1x32xf32>
    %c0_20 = arith.constant 0 : index
    %c0_21 = arith.constant 0 : index
    %10 = vector.load %arg12[%c0_20, %c0_21] : memref<32x32xf32, #tpu.memory_space<vmem>>, vector<32x32xf32>
    %c0_22 = arith.constant 0 : index
    %c0_23 = arith.constant 0 : index
    %11 = vector.load %arg13[%c0_22, %c0_23] : memref<32x32xf32, #tpu.memory_space<vmem>>, vector<32x32xf32>
    %c0_24 = arith.constant 0 : index
    %c0_25 = arith.constant 0 : index
    %12 = vector.load %arg14[%c0_24, %c0_25] : memref<1x32xf32, #tpu.memory_space<vmem>>, vector<1x32xf32>
    %c0_26 = arith.constant 0 : index
    %c0_27 = arith.constant 0 : index
    %13 = vector.load %arg15[%c0_26, %c0_27] : memref<1x32xf32, #tpu.memory_space<vmem>>, vector<1x32xf32>
    %c0_28 = arith.constant 0 : index
    %c0_29 = arith.constant 0 : index
    %14 = vector.load %arg16[%c0_28, %c0_29] : memref<1x1xf32, #tpu.memory_space<vmem>>, vector<1x1xf32>
    %c0_30 = arith.constant 0 : index
    %c0_31 = arith.constant 0 : index
    %15 = vector.load %arg17[%c0_30, %c0_31] : memref<64x32xf32, #tpu.memory_space<vmem>>, vector<32x32xf32>
    %c32_32 = arith.constant 32 : index
    %c0_33 = arith.constant 0 : index
    %16 = vector.load %arg17[%c32_32, %c0_33] : memref<64x32xf32, #tpu.memory_space<vmem>>, vector<32x32xf32>
    %c0_34 = arith.constant 0 : index
    %c0_35 = arith.constant 0 : index
    %17 = vector.load %arg18[%c0_34, %c0_35] : memref<1x32xf32, #tpu.memory_space<vmem>>, vector<1x32xf32>
    %cst = arith.constant 0.000000e+00 : f32
    %18 = vector.broadcast %cst : f32 to vector<2x32xf32>
    %cst_36 = arith.constant 0.000000e+00 : f32
    %19 = vector.broadcast %cst_36 : f32 to vector<2x32xf32>
    %c0_i32 = arith.constant 0 : i32
    %20 = arith.index_cast %c0_i32 : i32 to index
    %c0_37 = arith.constant 0 : index
    %c0_38 = arith.constant 0 : index
    %21 = vector.load %arg4[%20, %c0_37, %c0_38] : memref<4x64x32xf32, #tpu.memory_space<vmem>>, vector<1x64x32xf32>
    %22 = vector.shape_cast %21 : vector<1x64x32xf32> to vector<64x32xf32>
    %cst_39 = arith.constant dense<0.000000e+00> : vector<2x32xf32>
    %23 = tpu.matmul %1, %22, %cst_39 {dimension_numbers = #tpu.dot_dimension_numbers<[1], [0], [0], [1], [0, 0, 1, 1], [], []>} : vector<2x64xf32>, vector<64x32xf32>, vector<2x32xf32> -> vector<2x32xf32>
    %24 = arith.index_cast %c0_i32 : i32 to index
    %c0_40 = arith.constant 0 : index
    %c0_41 = arith.constant 0 : index
    %25 = vector.load %arg5[%24, %c0_40, %c0_41] : memref<4x1x32xf32, #tpu.memory_space<vmem>>, vector<1x1x32xf32>
    %26 = vector.shape_cast %25 : vector<1x1x32xf32> to vector<1x32xf32>
    %27 = vector.broadcast %26 : vector<1x32xf32> to vector<2x32xf32>
    %28 = arith.addf %23, %27 : vector<2x32xf32>
    %cst_42 = arith.constant dense<0.000000e+00> : vector<2x32xf32>
    %29 = tpu.matmul %18, %3, %cst_42 {dimension_numbers = #tpu.dot_dimension_numbers<[1], [0], [0], [1], [0, 0, 1, 1], [], []>} : vector<2x32xf32>, vector<32x32xf32>, vector<2x32xf32> -> vector<2x32xf32>
    %cst_43 = arith.constant dense<0.000000e+00> : vector<2x32xf32>
    %30 = tpu.matmul %28, %4, %cst_43 {dimension_numbers = #tpu.dot_dimension_numbers<[1], [0], [0], [1], [0, 0, 1, 1], [], []>} : vector<2x32xf32>, vector<32x32xf32>, vector<2x32xf32> -> vector<2x32xf32>
    %31 = arith.addf %29, %30 : vector<2x32xf32>
    %32 = vector.broadcast %5 : vector<1x32xf32> to vector<2x32xf32>
    %33 = arith.addf %31, %32 : vector<2x32xf32>
    %34 = vector.broadcast %6 : vector<1x32xf32> to vector<2x32xf32>
    %35 = arith.mulf %33, %34 : vector<2x32xf32>
    %36 = vector.shape_cast %35 : vector<2x32xf32> to vector<2x1x32xf32>
    %37 = vector.broadcast %36 : vector<2x1x32xf32> to vector<2x8x32xf32>
    %38 = arith.mulf %0, %37 : vector<2x8x32xf32>
    %cst_44 = arith.constant dense<0.000000e+00> : vector<2x8xf32>
    %39 = vector.multi_reduction <add>, %38, %cst_44 [2] : vector<2x8x32xf32> to vector<2x8xf32>
    %40 = vector.broadcast %7 : vector<1x1xf32> to vector<2x8xf32>
    %41 = arith.addf %39, %40 : vector<2x8xf32>
    %cst_45 = arith.constant dense<0xFF800000> : vector<2xf32>
    %42 = vector.multi_reduction <maximumf>, %41, %cst_45 [1] : vector<2x8xf32> to vector<2xf32>
    %43 = vector.shape_cast %42 : vector<2xf32> to vector<2x1xf32>
    %44 = vector.broadcast %43 : vector<2x1xf32> to vector<2x8xf32>
    %45 = arith.subf %41, %44 : vector<2x8xf32>
    %46 = math.exp %45 : vector<2x8xf32>
    %cst_46 = arith.constant dense<0.000000e+00> : vector<2xf32>
    %47 = vector.multi_reduction <add>, %46, %cst_46 [1] : vector<2x8xf32> to vector<2xf32>
    %48 = vector.shape_cast %47 : vector<2xf32> to vector<2x1xf32>
    %49 = tpu.reciprocal %48 {approx = true} : vector<2x1xf32> -> vector<2x1xf32>
    %50 = vector.broadcast %49 : vector<2x1xf32> to vector<2x8xf32>
    %51 = arith.mulf %46, %50 : vector<2x8xf32>
    %52 = vector.shape_cast %51 : vector<2x8xf32> to vector<2x8x1xf32>
    %53 = vector.broadcast %52 : vector<2x8x1xf32> to vector<2x8x32xf32>
    %54 = arith.mulf %53, %0 : vector<2x8x32xf32>
    %cst_47 = arith.constant dense<0.000000e+00> : vector<2x32xf32>
    %55 = vector.multi_reduction <add>, %54, %cst_47 [1] : vector<2x8x32xf32> to vector<2x32xf32>
    %cst_48 = arith.constant dense<0.000000e+00> : vector<2x32xf32>
    %56 = tpu.matmul %19, %8, %cst_48 {dimension_numbers = #tpu.dot_dimension_numbers<[1], [0], [0], [1], [0, 0, 1, 1], [], []>} : vector<2x32xf32>, vector<32x32xf32>, vector<2x32xf32> -> vector<2x32xf32>
    %57 = vector.broadcast %9 : vector<1x32xf32> to vector<2x32xf32>
    %58 = arith.addf %56, %57 : vector<2x32xf32>
    %59 = vector.broadcast %13 : vector<1x32xf32> to vector<2x32xf32>
    %60 = arith.mulf %55, %59 : vector<2x32xf32>
    %cst_49 = arith.constant dense<0.000000e+00> : vector<2x32xf32>
    %61 = tpu.matmul %60, %10, %cst_49 {dimension_numbers = #tpu.dot_dimension_numbers<[1], [0], [0], [1], [0, 0, 1, 1], [], []>} : vector<2x32xf32>, vector<32x32xf32>, vector<2x32xf32> -> vector<2x32xf32>
    %cst_50 = arith.constant dense<0.000000e+00> : vector<2x32xf32>
    %62 = tpu.matmul %60, %11, %cst_50 {dimension_numbers = #tpu.dot_dimension_numbers<[1], [0], [0], [1], [0, 0, 1, 1], [], []>} : vector<2x32xf32>, vector<32x32xf32>, vector<2x32xf32> -> vector<2x32xf32>
    %63 = arith.mulf %58, %61 : vector<2x32xf32>
    %64 = arith.addf %63, %62 : vector<2x32xf32>
    %65 = vector.broadcast %12 : vector<1x32xf32> to vector<2x32xf32>
    %66 = arith.mulf %60, %65 : vector<2x32xf32>
    %cst_51 = arith.constant dense<0.000000e+00> : vector<2xf32>
    %67 = vector.multi_reduction <add>, %66, %cst_51 [1] : vector<2x32xf32> to vector<2xf32>
    %68 = vector.shape_cast %67 : vector<2xf32> to vector<2x1xf32>
    %69 = vector.broadcast %14 : vector<1x1xf32> to vector<2x1xf32>
    %70 = arith.addf %68, %69 : vector<2x1xf32>
    %71 = vector.shape_cast %64 : vector<2x32xf32> to vector<2x1x32xf32>
    %72 = vector.broadcast %71 : vector<2x1x32xf32> to vector<2x16x32xf32>
    %73 = arith.mulf %2, %72 : vector<2x16x32xf32>
    %cst_52 = arith.constant dense<0.000000e+00> : vector<2x16xf32>
    %74 = vector.multi_reduction <add>, %73, %cst_52 [2] : vector<2x16x32xf32> to vector<2x16xf32>
    %75 = vector.broadcast %70 : vector<2x1xf32> to vector<2x16xf32>
    %76 = arith.addf %74, %75 : vector<2x16xf32>
    %cst_53 = arith.constant dense<0xFF800000> : vector<2xf32>
    %77 = vector.multi_reduction <maximumf>, %76, %cst_53 [1] : vector<2x16xf32> to vector<2xf32>
    %78 = vector.shape_cast %77 : vector<2xf32> to vector<2x1xf32>
    %79 = vector.broadcast %78 : vector<2x1xf32> to vector<2x16xf32>
    %80 = arith.subf %76, %79 : vector<2x16xf32>
    %81 = math.exp %80 : vector<2x16xf32>
    %cst_54 = arith.constant dense<0.000000e+00> : vector<2xf32>
    %82 = vector.multi_reduction <add>, %81, %cst_54 [1] : vector<2x16xf32> to vector<2xf32>
    %83 = vector.shape_cast %82 : vector<2xf32> to vector<2x1xf32>
    %84 = tpu.reciprocal %83 {approx = true} : vector<2x1xf32> -> vector<2x1xf32>
    %85 = vector.broadcast %84 : vector<2x1xf32> to vector<2x16xf32>
    %86 = arith.mulf %81, %85 : vector<2x16xf32>
    %87 = vector.shape_cast %86 : vector<2x16xf32> to vector<2x16x1xf32>
    %88 = vector.broadcast %87 : vector<2x16x1xf32> to vector<2x16x32xf32>
    %89 = arith.mulf %88, %2 : vector<2x16x32xf32>
    %cst_55 = arith.constant dense<0.000000e+00> : vector<2x32xf32>
    %90 = vector.multi_reduction <add>, %89, %cst_55 [1] : vector<2x16x32xf32> to vector<2x32xf32>
    %cst_56 = arith.constant dense<0.000000e+00> : vector<2x32xf32>
    %91 = tpu.matmul %90, %15, %cst_56 {dimension_numbers = #tpu.dot_dimension_numbers<[1], [0], [0], [1], [0, 0, 1, 1], [], []>} : vector<2x32xf32>, vector<32x32xf32>, vector<2x32xf32> -> vector<2x32xf32>
    %cst_57 = arith.constant dense<0.000000e+00> : vector<2x32xf32>
    %92 = tpu.matmul %19, %16, %cst_57 {dimension_numbers = #tpu.dot_dimension_numbers<[1], [0], [0], [1], [0, 0, 1, 1], [], []>} : vector<2x32xf32>, vector<32x32xf32>, vector<2x32xf32> -> vector<2x32xf32>
    %93 = arith.addf %91, %92 : vector<2x32xf32>
    %94 = vector.broadcast %17 : vector<1x32xf32> to vector<2x32xf32>
    %95 = arith.addf %93, %94 : vector<2x32xf32>
    %c1_i32 = arith.constant 1 : i32
    %96 = arith.index_cast %c1_i32 : i32 to index
    %c0_58 = arith.constant 0 : index
    %c0_59 = arith.constant 0 : index
    %97 = vector.load %arg4[%96, %c0_58, %c0_59] : memref<4x64x32xf32, #tpu.memory_space<vmem>>, vector<1x64x32xf32>
    %98 = vector.shape_cast %97 : vector<1x64x32xf32> to vector<64x32xf32>
    %cst_60 = arith.constant dense<0.000000e+00> : vector<2x32xf32>
    %99 = tpu.matmul %1, %98, %cst_60 {dimension_numbers = #tpu.dot_dimension_numbers<[1], [0], [0], [1], [0, 0, 1, 1], [], []>} : vector<2x64xf32>, vector<64x32xf32>, vector<2x32xf32> -> vector<2x32xf32>
    %100 = arith.index_cast %c1_i32 : i32 to index
    %c0_61 = arith.constant 0 : index
    %c0_62 = arith.constant 0 : index
    %101 = vector.load %arg5[%100, %c0_61, %c0_62] : memref<4x1x32xf32, #tpu.memory_space<vmem>>, vector<1x1x32xf32>
    %102 = vector.shape_cast %101 : vector<1x1x32xf32> to vector<1x32xf32>
    %103 = vector.broadcast %102 : vector<1x32xf32> to vector<2x32xf32>
    %104 = arith.addf %99, %103 : vector<2x32xf32>
    %cst_63 = arith.constant dense<0.000000e+00> : vector<2x32xf32>
    %105 = tpu.matmul %55, %3, %cst_63 {dimension_numbers = #tpu.dot_dimension_numbers<[1], [0], [0], [1], [0, 0, 1, 1], [], []>} : vector<2x32xf32>, vector<32x32xf32>, vector<2x32xf32> -> vector<2x32xf32>
    %cst_64 = arith.constant dense<0.000000e+00> : vector<2x32xf32>
    %106 = tpu.matmul %104, %4, %cst_64 {dimension_numbers = #tpu.dot_dimension_numbers<[1], [0], [0], [1], [0, 0, 1, 1], [], []>} : vector<2x32xf32>, vector<32x32xf32>, vector<2x32xf32> -> vector<2x32xf32>
    %107 = arith.addf %105, %106 : vector<2x32xf32>
    %108 = vector.broadcast %5 : vector<1x32xf32> to vector<2x32xf32>
    %109 = arith.addf %107, %108 : vector<2x32xf32>
    %110 = vector.broadcast %6 : vector<1x32xf32> to vector<2x32xf32>
    %111 = arith.mulf %109, %110 : vector<2x32xf32>
    %112 = vector.shape_cast %111 : vector<2x32xf32> to vector<2x1x32xf32>
    %113 = vector.broadcast %112 : vector<2x1x32xf32> to vector<2x8x32xf32>
    %114 = arith.mulf %0, %113 : vector<2x8x32xf32>
    %cst_65 = arith.constant dense<0.000000e+00> : vector<2x8xf32>
    %115 = vector.multi_reduction <add>, %114, %cst_65 [2] : vector<2x8x32xf32> to vector<2x8xf32>
    %116 = vector.broadcast %7 : vector<1x1xf32> to vector<2x8xf32>
    %117 = arith.addf %115, %116 : vector<2x8xf32>
    %cst_66 = arith.constant dense<0xFF800000> : vector<2xf32>
    %118 = vector.multi_reduction <maximumf>, %117, %cst_66 [1] : vector<2x8xf32> to vector<2xf32>
    %119 = vector.shape_cast %118 : vector<2xf32> to vector<2x1xf32>
    %120 = vector.broadcast %119 : vector<2x1xf32> to vector<2x8xf32>
    %121 = arith.subf %117, %120 : vector<2x8xf32>
    %122 = math.exp %121 : vector<2x8xf32>
    %cst_67 = arith.constant dense<0.000000e+00> : vector<2xf32>
    %123 = vector.multi_reduction <add>, %122, %cst_67 [1] : vector<2x8xf32> to vector<2xf32>
    %124 = vector.shape_cast %123 : vector<2xf32> to vector<2x1xf32>
    %125 = tpu.reciprocal %124 {approx = true} : vector<2x1xf32> -> vector<2x1xf32>
    %126 = vector.broadcast %125 : vector<2x1xf32> to vector<2x8xf32>
    %127 = arith.mulf %122, %126 : vector<2x8xf32>
    %128 = vector.shape_cast %127 : vector<2x8xf32> to vector<2x8x1xf32>
    %129 = vector.broadcast %128 : vector<2x8x1xf32> to vector<2x8x32xf32>
    %130 = arith.mulf %129, %0 : vector<2x8x32xf32>
    %cst_68 = arith.constant dense<0.000000e+00> : vector<2x32xf32>
    %131 = vector.multi_reduction <add>, %130, %cst_68 [1] : vector<2x8x32xf32> to vector<2x32xf32>
    %cst_69 = arith.constant dense<0.000000e+00> : vector<2x32xf32>
    %132 = tpu.matmul %95, %8, %cst_69 {dimension_numbers = #tpu.dot_dimension_numbers<[1], [0], [0], [1], [0, 0, 1, 1], [], []>} : vector<2x32xf32>, vector<32x32xf32>, vector<2x32xf32> -> vector<2x32xf32>
    %133 = vector.broadcast %9 : vector<1x32xf32> to vector<2x32xf32>
    %134 = arith.addf %132, %133 : vector<2x32xf32>
    %135 = vector.broadcast %13 : vector<1x32xf32> to vector<2x32xf32>
    %136 = arith.mulf %131, %135 : vector<2x32xf32>
    %cst_70 = arith.constant dense<0.000000e+00> : vector<2x32xf32>
    %137 = tpu.matmul %136, %10, %cst_70 {dimension_numbers = #tpu.dot_dimension_numbers<[1], [0], [0], [1], [0, 0, 1, 1], [], []>} : vector<2x32xf32>, vector<32x32xf32>, vector<2x32xf32> -> vector<2x32xf32>
    %cst_71 = arith.constant dense<0.000000e+00> : vector<2x32xf32>
    %138 = tpu.matmul %136, %11, %cst_71 {dimension_numbers = #tpu.dot_dimension_numbers<[1], [0], [0], [1], [0, 0, 1, 1], [], []>} : vector<2x32xf32>, vector<32x32xf32>, vector<2x32xf32> -> vector<2x32xf32>
    %139 = arith.mulf %134, %137 : vector<2x32xf32>
    %140 = arith.addf %139, %138 : vector<2x32xf32>
    %141 = vector.broadcast %12 : vector<1x32xf32> to vector<2x32xf32>
    %142 = arith.mulf %136, %141 : vector<2x32xf32>
    %cst_72 = arith.constant dense<0.000000e+00> : vector<2xf32>
    %143 = vector.multi_reduction <add>, %142, %cst_72 [1] : vector<2x32xf32> to vector<2xf32>
    %144 = vector.shape_cast %143 : vector<2xf32> to vector<2x1xf32>
    %145 = vector.broadcast %14 : vector<1x1xf32> to vector<2x1xf32>
    %146 = arith.addf %144, %145 : vector<2x1xf32>
    %147 = vector.shape_cast %140 : vector<2x32xf32> to vector<2x1x32xf32>
    %148 = vector.broadcast %147 : vector<2x1x32xf32> to vector<2x16x32xf32>
    %149 = arith.mulf %2, %148 : vector<2x16x32xf32>
    %cst_73 = arith.constant dense<0.000000e+00> : vector<2x16xf32>
    %150 = vector.multi_reduction <add>, %149, %cst_73 [2] : vector<2x16x32xf32> to vector<2x16xf32>
    %151 = vector.broadcast %146 : vector<2x1xf32> to vector<2x16xf32>
    %152 = arith.addf %150, %151 : vector<2x16xf32>
    %cst_74 = arith.constant dense<0xFF800000> : vector<2xf32>
    %153 = vector.multi_reduction <maximumf>, %152, %cst_74 [1] : vector<2x16xf32> to vector<2xf32>
    %154 = vector.shape_cast %153 : vector<2xf32> to vector<2x1xf32>
    %155 = vector.broadcast %154 : vector<2x1xf32> to vector<2x16xf32>
    %156 = arith.subf %152, %155 : vector<2x16xf32>
    %157 = math.exp %156 : vector<2x16xf32>
    %cst_75 = arith.constant dense<0.000000e+00> : vector<2xf32>
    %158 = vector.multi_reduction <add>, %157, %cst_75 [1] : vector<2x16xf32> to vector<2xf32>
    %159 = vector.shape_cast %158 : vector<2xf32> to vector<2x1xf32>
    %160 = tpu.reciprocal %159 {approx = true} : vector<2x1xf32> -> vector<2x1xf32>
    %161 = vector.broadcast %160 : vector<2x1xf32> to vector<2x16xf32>
    %162 = arith.mulf %157, %161 : vector<2x16xf32>
    %163 = vector.shape_cast %162 : vector<2x16xf32> to vector<2x16x1xf32>
    %164 = vector.broadcast %163 : vector<2x16x1xf32> to vector<2x16x32xf32>
    %165 = arith.mulf %164, %2 : vector<2x16x32xf32>
    %cst_76 = arith.constant dense<0.000000e+00> : vector<2x32xf32>
    %166 = vector.multi_reduction <add>, %165, %cst_76 [1] : vector<2x16x32xf32> to vector<2x32xf32>
    %cst_77 = arith.constant dense<0.000000e+00> : vector<2x32xf32>
    %167 = tpu.matmul %166, %15, %cst_77 {dimension_numbers = #tpu.dot_dimension_numbers<[1], [0], [0], [1], [0, 0, 1, 1], [], []>} : vector<2x32xf32>, vector<32x32xf32>, vector<2x32xf32> -> vector<2x32xf32>
    %cst_78 = arith.constant dense<0.000000e+00> : vector<2x32xf32>
    %168 = tpu.matmul %95, %16, %cst_78 {dimension_numbers = #tpu.dot_dimension_numbers<[1], [0], [0], [1], [0, 0, 1, 1], [], []>} : vector<2x32xf32>, vector<32x32xf32>, vector<2x32xf32> -> vector<2x32xf32>
    %169 = arith.addf %167, %168 : vector<2x32xf32>
    %170 = vector.broadcast %17 : vector<1x32xf32> to vector<2x32xf32>
    %171 = arith.addf %169, %170 : vector<2x32xf32>
    %c2_i32 = arith.constant 2 : i32
    %172 = arith.index_cast %c2_i32 : i32 to index
    %c0_79 = arith.constant 0 : index
    %c0_80 = arith.constant 0 : index
    %173 = vector.load %arg4[%172, %c0_79, %c0_80] : memref<4x64x32xf32, #tpu.memory_space<vmem>>, vector<1x64x32xf32>
    %174 = vector.shape_cast %173 : vector<1x64x32xf32> to vector<64x32xf32>
    %cst_81 = arith.constant dense<0.000000e+00> : vector<2x32xf32>
    %175 = tpu.matmul %1, %174, %cst_81 {dimension_numbers = #tpu.dot_dimension_numbers<[1], [0], [0], [1], [0, 0, 1, 1], [], []>} : vector<2x64xf32>, vector<64x32xf32>, vector<2x32xf32> -> vector<2x32xf32>
    %176 = arith.index_cast %c2_i32 : i32 to index
    %c0_82 = arith.constant 0 : index
    %c0_83 = arith.constant 0 : index
    %177 = vector.load %arg5[%176, %c0_82, %c0_83] : memref<4x1x32xf32, #tpu.memory_space<vmem>>, vector<1x1x32xf32>
    %178 = vector.shape_cast %177 : vector<1x1x32xf32> to vector<1x32xf32>
    %179 = vector.broadcast %178 : vector<1x32xf32> to vector<2x32xf32>
    %180 = arith.addf %175, %179 : vector<2x32xf32>
    %cst_84 = arith.constant dense<0.000000e+00> : vector<2x32xf32>
    %181 = tpu.matmul %131, %3, %cst_84 {dimension_numbers = #tpu.dot_dimension_numbers<[1], [0], [0], [1], [0, 0, 1, 1], [], []>} : vector<2x32xf32>, vector<32x32xf32>, vector<2x32xf32> -> vector<2x32xf32>
    %cst_85 = arith.constant dense<0.000000e+00> : vector<2x32xf32>
    %182 = tpu.matmul %180, %4, %cst_85 {dimension_numbers = #tpu.dot_dimension_numbers<[1], [0], [0], [1], [0, 0, 1, 1], [], []>} : vector<2x32xf32>, vector<32x32xf32>, vector<2x32xf32> -> vector<2x32xf32>
    %183 = arith.addf %181, %182 : vector<2x32xf32>
    %184 = vector.broadcast %5 : vector<1x32xf32> to vector<2x32xf32>
    %185 = arith.addf %183, %184 : vector<2x32xf32>
    %186 = vector.broadcast %6 : vector<1x32xf32> to vector<2x32xf32>
    %187 = arith.mulf %185, %186 : vector<2x32xf32>
    %188 = vector.shape_cast %187 : vector<2x32xf32> to vector<2x1x32xf32>
    %189 = vector.broadcast %188 : vector<2x1x32xf32> to vector<2x8x32xf32>
    %190 = arith.mulf %0, %189 : vector<2x8x32xf32>
    %cst_86 = arith.constant dense<0.000000e+00> : vector<2x8xf32>
    %191 = vector.multi_reduction <add>, %190, %cst_86 [2] : vector<2x8x32xf32> to vector<2x8xf32>
    %192 = vector.broadcast %7 : vector<1x1xf32> to vector<2x8xf32>
    %193 = arith.addf %191, %192 : vector<2x8xf32>
    %cst_87 = arith.constant dense<0xFF800000> : vector<2xf32>
    %194 = vector.multi_reduction <maximumf>, %193, %cst_87 [1] : vector<2x8xf32> to vector<2xf32>
    %195 = vector.shape_cast %194 : vector<2xf32> to vector<2x1xf32>
    %196 = vector.broadcast %195 : vector<2x1xf32> to vector<2x8xf32>
    %197 = arith.subf %193, %196 : vector<2x8xf32>
    %198 = math.exp %197 : vector<2x8xf32>
    %cst_88 = arith.constant dense<0.000000e+00> : vector<2xf32>
    %199 = vector.multi_reduction <add>, %198, %cst_88 [1] : vector<2x8xf32> to vector<2xf32>
    %200 = vector.shape_cast %199 : vector<2xf32> to vector<2x1xf32>
    %201 = tpu.reciprocal %200 {approx = true} : vector<2x1xf32> -> vector<2x1xf32>
    %202 = vector.broadcast %201 : vector<2x1xf32> to vector<2x8xf32>
    %203 = arith.mulf %198, %202 : vector<2x8xf32>
    %204 = vector.shape_cast %203 : vector<2x8xf32> to vector<2x8x1xf32>
    %205 = vector.broadcast %204 : vector<2x8x1xf32> to vector<2x8x32xf32>
    %206 = arith.mulf %205, %0 : vector<2x8x32xf32>
    %cst_89 = arith.constant dense<0.000000e+00> : vector<2x32xf32>
    %207 = vector.multi_reduction <add>, %206, %cst_89 [1] : vector<2x8x32xf32> to vector<2x32xf32>
    %cst_90 = arith.constant dense<0.000000e+00> : vector<2x32xf32>
    %208 = tpu.matmul %171, %8, %cst_90 {dimension_numbers = #tpu.dot_dimension_numbers<[1], [0], [0], [1], [0, 0, 1, 1], [], []>} : vector<2x32xf32>, vector<32x32xf32>, vector<2x32xf32> -> vector<2x32xf32>
    %209 = vector.broadcast %9 : vector<1x32xf32> to vector<2x32xf32>
    %210 = arith.addf %208, %209 : vector<2x32xf32>
    %211 = vector.broadcast %13 : vector<1x32xf32> to vector<2x32xf32>
    %212 = arith.mulf %207, %211 : vector<2x32xf32>
    %cst_91 = arith.constant dense<0.000000e+00> : vector<2x32xf32>
    %213 = tpu.matmul %212, %10, %cst_91 {dimension_numbers = #tpu.dot_dimension_numbers<[1], [0], [0], [1], [0, 0, 1, 1], [], []>} : vector<2x32xf32>, vector<32x32xf32>, vector<2x32xf32> -> vector<2x32xf32>
    %cst_92 = arith.constant dense<0.000000e+00> : vector<2x32xf32>
    %214 = tpu.matmul %212, %11, %cst_92 {dimension_numbers = #tpu.dot_dimension_numbers<[1], [0], [0], [1], [0, 0, 1, 1], [], []>} : vector<2x32xf32>, vector<32x32xf32>, vector<2x32xf32> -> vector<2x32xf32>
    %215 = arith.mulf %210, %213 : vector<2x32xf32>
    %216 = arith.addf %215, %214 : vector<2x32xf32>
    %217 = vector.broadcast %12 : vector<1x32xf32> to vector<2x32xf32>
    %218 = arith.mulf %212, %217 : vector<2x32xf32>
    %cst_93 = arith.constant dense<0.000000e+00> : vector<2xf32>
    %219 = vector.multi_reduction <add>, %218, %cst_93 [1] : vector<2x32xf32> to vector<2xf32>
    %220 = vector.shape_cast %219 : vector<2xf32> to vector<2x1xf32>
    %221 = vector.broadcast %14 : vector<1x1xf32> to vector<2x1xf32>
    %222 = arith.addf %220, %221 : vector<2x1xf32>
    %223 = vector.shape_cast %216 : vector<2x32xf32> to vector<2x1x32xf32>
    %224 = vector.broadcast %223 : vector<2x1x32xf32> to vector<2x16x32xf32>
    %225 = arith.mulf %2, %224 : vector<2x16x32xf32>
    %cst_94 = arith.constant dense<0.000000e+00> : vector<2x16xf32>
    %226 = vector.multi_reduction <add>, %225, %cst_94 [2] : vector<2x16x32xf32> to vector<2x16xf32>
    %227 = vector.broadcast %222 : vector<2x1xf32> to vector<2x16xf32>
    %228 = arith.addf %226, %227 : vector<2x16xf32>
    %cst_95 = arith.constant dense<0xFF800000> : vector<2xf32>
    %229 = vector.multi_reduction <maximumf>, %228, %cst_95 [1] : vector<2x16xf32> to vector<2xf32>
    %230 = vector.shape_cast %229 : vector<2xf32> to vector<2x1xf32>
    %231 = vector.broadcast %230 : vector<2x1xf32> to vector<2x16xf32>
    %232 = arith.subf %228, %231 : vector<2x16xf32>
    %233 = math.exp %232 : vector<2x16xf32>
    %cst_96 = arith.constant dense<0.000000e+00> : vector<2xf32>
    %234 = vector.multi_reduction <add>, %233, %cst_96 [1] : vector<2x16xf32> to vector<2xf32>
    %235 = vector.shape_cast %234 : vector<2xf32> to vector<2x1xf32>
    %236 = tpu.reciprocal %235 {approx = true} : vector<2x1xf32> -> vector<2x1xf32>
    %237 = vector.broadcast %236 : vector<2x1xf32> to vector<2x16xf32>
    %238 = arith.mulf %233, %237 : vector<2x16xf32>
    %239 = vector.shape_cast %238 : vector<2x16xf32> to vector<2x16x1xf32>
    %240 = vector.broadcast %239 : vector<2x16x1xf32> to vector<2x16x32xf32>
    %241 = arith.mulf %240, %2 : vector<2x16x32xf32>
    %cst_97 = arith.constant dense<0.000000e+00> : vector<2x32xf32>
    %242 = vector.multi_reduction <add>, %241, %cst_97 [1] : vector<2x16x32xf32> to vector<2x32xf32>
    %cst_98 = arith.constant dense<0.000000e+00> : vector<2x32xf32>
    %243 = tpu.matmul %242, %15, %cst_98 {dimension_numbers = #tpu.dot_dimension_numbers<[1], [0], [0], [1], [0, 0, 1, 1], [], []>} : vector<2x32xf32>, vector<32x32xf32>, vector<2x32xf32> -> vector<2x32xf32>
    %cst_99 = arith.constant dense<0.000000e+00> : vector<2x32xf32>
    %244 = tpu.matmul %171, %16, %cst_99 {dimension_numbers = #tpu.dot_dimension_numbers<[1], [0], [0], [1], [0, 0, 1, 1], [], []>} : vector<2x32xf32>, vector<32x32xf32>, vector<2x32xf32> -> vector<2x32xf32>
    %245 = arith.addf %243, %244 : vector<2x32xf32>
    %246 = vector.broadcast %17 : vector<1x32xf32> to vector<2x32xf32>
    %247 = arith.addf %245, %246 : vector<2x32xf32>
    %c3_i32 = arith.constant 3 : i32
    %248 = arith.index_cast %c3_i32 : i32 to index
    %c0_100 = arith.constant 0 : index
    %c0_101 = arith.constant 0 : index
    %249 = vector.load %arg4[%248, %c0_100, %c0_101] : memref<4x64x32xf32, #tpu.memory_space<vmem>>, vector<1x64x32xf32>
    %250 = vector.shape_cast %249 : vector<1x64x32xf32> to vector<64x32xf32>
    %cst_102 = arith.constant dense<0.000000e+00> : vector<2x32xf32>
    %251 = tpu.matmul %1, %250, %cst_102 {dimension_numbers = #tpu.dot_dimension_numbers<[1], [0], [0], [1], [0, 0, 1, 1], [], []>} : vector<2x64xf32>, vector<64x32xf32>, vector<2x32xf32> -> vector<2x32xf32>
    %252 = arith.index_cast %c3_i32 : i32 to index
    %c0_103 = arith.constant 0 : index
    %c0_104 = arith.constant 0 : index
    %253 = vector.load %arg5[%252, %c0_103, %c0_104] : memref<4x1x32xf32, #tpu.memory_space<vmem>>, vector<1x1x32xf32>
    %254 = vector.shape_cast %253 : vector<1x1x32xf32> to vector<1x32xf32>
    %255 = vector.broadcast %254 : vector<1x32xf32> to vector<2x32xf32>
    %256 = arith.addf %251, %255 : vector<2x32xf32>
    %cst_105 = arith.constant dense<0.000000e+00> : vector<2x32xf32>
    %257 = tpu.matmul %207, %3, %cst_105 {dimension_numbers = #tpu.dot_dimension_numbers<[1], [0], [0], [1], [0, 0, 1, 1], [], []>} : vector<2x32xf32>, vector<32x32xf32>, vector<2x32xf32> -> vector<2x32xf32>
    %cst_106 = arith.constant dense<0.000000e+00> : vector<2x32xf32>
    %258 = tpu.matmul %256, %4, %cst_106 {dimension_numbers = #tpu.dot_dimension_numbers<[1], [0], [0], [1], [0, 0, 1, 1], [], []>} : vector<2x32xf32>, vector<32x32xf32>, vector<2x32xf32> -> vector<2x32xf32>
    %259 = arith.addf %257, %258 : vector<2x32xf32>
    %260 = vector.broadcast %5 : vector<1x32xf32> to vector<2x32xf32>
    %261 = arith.addf %259, %260 : vector<2x32xf32>
    %262 = vector.broadcast %6 : vector<1x32xf32> to vector<2x32xf32>
    %263 = arith.mulf %261, %262 : vector<2x32xf32>
    %264 = vector.shape_cast %263 : vector<2x32xf32> to vector<2x1x32xf32>
    %265 = vector.broadcast %264 : vector<2x1x32xf32> to vector<2x8x32xf32>
    %266 = arith.mulf %0, %265 : vector<2x8x32xf32>
    %cst_107 = arith.constant dense<0.000000e+00> : vector<2x8xf32>
    %267 = vector.multi_reduction <add>, %266, %cst_107 [2] : vector<2x8x32xf32> to vector<2x8xf32>
    %268 = vector.broadcast %7 : vector<1x1xf32> to vector<2x8xf32>
    %269 = arith.addf %267, %268 : vector<2x8xf32>
    %cst_108 = arith.constant dense<0xFF800000> : vector<2xf32>
    %270 = vector.multi_reduction <maximumf>, %269, %cst_108 [1] : vector<2x8xf32> to vector<2xf32>
    %271 = vector.shape_cast %270 : vector<2xf32> to vector<2x1xf32>
    %272 = vector.broadcast %271 : vector<2x1xf32> to vector<2x8xf32>
    %273 = arith.subf %269, %272 : vector<2x8xf32>
    %274 = math.exp %273 : vector<2x8xf32>
    %cst_109 = arith.constant dense<0.000000e+00> : vector<2xf32>
    %275 = vector.multi_reduction <add>, %274, %cst_109 [1] : vector<2x8xf32> to vector<2xf32>
    %276 = vector.shape_cast %275 : vector<2xf32> to vector<2x1xf32>
    %277 = tpu.reciprocal %276 {approx = true} : vector<2x1xf32> -> vector<2x1xf32>
    %278 = vector.broadcast %277 : vector<2x1xf32> to vector<2x8xf32>
    %279 = arith.mulf %274, %278 : vector<2x8xf32>
    %280 = vector.shape_cast %279 : vector<2x8xf32> to vector<2x8x1xf32>
    %281 = vector.broadcast %280 : vector<2x8x1xf32> to vector<2x8x32xf32>
    %282 = arith.mulf %281, %0 : vector<2x8x32xf32>
    %cst_110 = arith.constant dense<0.000000e+00> : vector<2x32xf32>
    %283 = vector.multi_reduction <add>, %282, %cst_110 [1] : vector<2x8x32xf32> to vector<2x32xf32>
    %cst_111 = arith.constant dense<0.000000e+00> : vector<2x32xf32>
    %284 = tpu.matmul %247, %8, %cst_111 {dimension_numbers = #tpu.dot_dimension_numbers<[1], [0], [0], [1], [0, 0, 1, 1], [], []>} : vector<2x32xf32>, vector<32x32xf32>, vector<2x32xf32> -> vector<2x32xf32>
    %285 = vector.broadcast %9 : vector<1x32xf32> to vector<2x32xf32>
    %286 = arith.addf %284, %285 : vector<2x32xf32>
    %287 = vector.broadcast %13 : vector<1x32xf32> to vector<2x32xf32>
    %288 = arith.mulf %283, %287 : vector<2x32xf32>
    %cst_112 = arith.constant dense<0.000000e+00> : vector<2x32xf32>
    %289 = tpu.matmul %288, %10, %cst_112 {dimension_numbers = #tpu.dot_dimension_numbers<[1], [0], [0], [1], [0, 0, 1, 1], [], []>} : vector<2x32xf32>, vector<32x32xf32>, vector<2x32xf32> -> vector<2x32xf32>
    %cst_113 = arith.constant dense<0.000000e+00> : vector<2x32xf32>
    %290 = tpu.matmul %288, %11, %cst_113 {dimension_numbers = #tpu.dot_dimension_numbers<[1], [0], [0], [1], [0, 0, 1, 1], [], []>} : vector<2x32xf32>, vector<32x32xf32>, vector<2x32xf32> -> vector<2x32xf32>
    %291 = arith.mulf %286, %289 : vector<2x32xf32>
    %292 = arith.addf %291, %290 : vector<2x32xf32>
    %293 = vector.broadcast %12 : vector<1x32xf32> to vector<2x32xf32>
    %294 = arith.mulf %288, %293 : vector<2x32xf32>
    %cst_114 = arith.constant dense<0.000000e+00> : vector<2xf32>
    %295 = vector.multi_reduction <add>, %294, %cst_114 [1] : vector<2x32xf32> to vector<2xf32>
    %296 = vector.shape_cast %295 : vector<2xf32> to vector<2x1xf32>
    %297 = vector.broadcast %14 : vector<1x1xf32> to vector<2x1xf32>
    %298 = arith.addf %296, %297 : vector<2x1xf32>
    %299 = vector.shape_cast %292 : vector<2x32xf32> to vector<2x1x32xf32>
    %300 = vector.broadcast %299 : vector<2x1x32xf32> to vector<2x16x32xf32>
    %301 = arith.mulf %2, %300 : vector<2x16x32xf32>
    %cst_115 = arith.constant dense<0.000000e+00> : vector<2x16xf32>
    %302 = vector.multi_reduction <add>, %301, %cst_115 [2] : vector<2x16x32xf32> to vector<2x16xf32>
    %303 = vector.broadcast %298 : vector<2x1xf32> to vector<2x16xf32>
    %304 = arith.addf %302, %303 : vector<2x16xf32>
    %cst_116 = arith.constant dense<0xFF800000> : vector<2xf32>
    %305 = vector.multi_reduction <maximumf>, %304, %cst_116 [1] : vector<2x16xf32> to vector<2xf32>
    %306 = vector.shape_cast %305 : vector<2xf32> to vector<2x1xf32>
    %307 = vector.broadcast %306 : vector<2x1xf32> to vector<2x16xf32>
    %308 = arith.subf %304, %307 : vector<2x16xf32>
    %309 = math.exp %308 : vector<2x16xf32>
    %cst_117 = arith.constant dense<0.000000e+00> : vector<2xf32>
    %310 = vector.multi_reduction <add>, %309, %cst_117 [1] : vector<2x16xf32> to vector<2xf32>
    %311 = vector.shape_cast %310 : vector<2xf32> to vector<2x1xf32>
    %312 = tpu.reciprocal %311 {approx = true} : vector<2x1xf32> -> vector<2x1xf32>
    %313 = vector.broadcast %312 : vector<2x1xf32> to vector<2x16xf32>
    %314 = arith.mulf %309, %313 : vector<2x16xf32>
    %315 = vector.shape_cast %314 : vector<2x16xf32> to vector<2x16x1xf32>
    %316 = vector.broadcast %315 : vector<2x16x1xf32> to vector<2x16x32xf32>
    %317 = arith.mulf %316, %2 : vector<2x16x32xf32>
    %cst_118 = arith.constant dense<0.000000e+00> : vector<2x32xf32>
    %318 = vector.multi_reduction <add>, %317, %cst_118 [1] : vector<2x16x32xf32> to vector<2x32xf32>
    %cst_119 = arith.constant dense<0.000000e+00> : vector<2x32xf32>
    %319 = tpu.matmul %318, %15, %cst_119 {dimension_numbers = #tpu.dot_dimension_numbers<[1], [0], [0], [1], [0, 0, 1, 1], [], []>} : vector<2x32xf32>, vector<32x32xf32>, vector<2x32xf32> -> vector<2x32xf32>
    %cst_120 = arith.constant dense<0.000000e+00> : vector<2x32xf32>
    %320 = tpu.matmul %247, %16, %cst_120 {dimension_numbers = #tpu.dot_dimension_numbers<[1], [0], [0], [1], [0, 0, 1, 1], [], []>} : vector<2x32xf32>, vector<32x32xf32>, vector<2x32xf32> -> vector<2x32xf32>
    %321 = arith.addf %319, %320 : vector<2x32xf32>
    %322 = vector.broadcast %17 : vector<1x32xf32> to vector<2x32xf32>
    %323 = arith.addf %321, %322 : vector<2x32xf32>
    %c4_i32 = arith.constant 4 : i32
    %c0_121 = arith.constant 0 : index
    %c0_122 = arith.constant 0 : index
    %324 = vector.load %arg23[%c0_121, %c0_122] : memref<2x32xf32, #tpu.memory_space<vmem>>, vector<2x32xf32>
    tpu.vector_store %arg23[%c0_121, %c0_122], %323 {strides = array<i32>} : memref<2x32xf32, #tpu.memory_space<vmem>>, vector<2x32xf32>,
    %c0_123 = arith.constant 0 : index
    %c0_124 = arith.constant 0 : index
    %325 = vector.load %arg19[%c0_123, %c0_124] : memref<96x32xf32, #tpu.memory_space<vmem>>, vector<32x32xf32>
    %cst_125 = arith.constant dense<0.000000e+00> : vector<2x32xf32>
    %326 = tpu.matmul %323, %325, %cst_125 {dimension_numbers = #tpu.dot_dimension_numbers<[1], [0], [0], [1], [0, 0, 1, 1], [], []>} : vector<2x32xf32>, vector<32x32xf32>, vector<2x32xf32> -> vector<2x32xf32>
    %c32_126 = arith.constant 32 : index
    %c0_127 = arith.constant 0 : index
    %327 = vector.load %arg19[%c32_126, %c0_127] : memref<96x32xf32, #tpu.memory_space<vmem>>, vector<64x32xf32>
    %cst_128 = arith.constant dense<0.000000e+00> : vector<2x32xf32>
    %328 = tpu.matmul %1, %327, %cst_128 {dimension_numbers = #tpu.dot_dimension_numbers<[1], [0], [0], [1], [0, 0, 1, 1], [], []>} : vector<2x64xf32>, vector<64x32xf32>, vector<2x32xf32> -> vector<2x32xf32>
    %329 = arith.addf %326, %328 : vector<2x32xf32>
    %c0_129 = arith.constant 0 : index
    %c0_130 = arith.constant 0 : index
    %330 = vector.load %arg20[%c0_129, %c0_130] : memref<1x32xf32, #tpu.memory_space<vmem>>, vector<1x32xf32>
    %331 = vector.broadcast %330 : vector<1x32xf32> to vector<2x32xf32>
    %332 = arith.addf %329, %331 : vector<2x32xf32>
    %cst_131 = arith.constant 0.000000e+00 : f32
    %333 = vector.broadcast %cst_131 : f32 to vector<2x32xf32>
    %334 = arith.cmpf ogt, %332, %333 : vector<2x32xf32>
    %cst_132 = arith.constant 0.000000e+00 : f32
    %335 = vector.broadcast %cst_132 : f32 to vector<2x32xf32>
    %336 = arith.minimumf %332, %335 : vector<2x32xf32>
    %337 = math.exp %336 : vector<2x32xf32>
    %cst_133 = arith.constant 1.000000e+00 : f32
    %338 = vector.broadcast %cst_133 : f32 to vector<2x32xf32>
    %339 = arith.subf %337, %338 : vector<2x32xf32>
    %340 = arith.select %334, %332, %339 : vector<2x32xi1>, vector<2x32xf32>
    %c0_134 = arith.constant 0 : index
    %c0_135 = arith.constant 0 : index
    %341 = vector.load %arg21[%c0_134, %c0_135] : memref<32x28xf32, #tpu.memory_space<vmem>>, vector<32x28xf32>
    %cst_136 = arith.constant dense<0.000000e+00> : vector<2x28xf32>
    %342 = tpu.matmul %340, %341, %cst_136 {dimension_numbers = #tpu.dot_dimension_numbers<[1], [0], [0], [1], [0, 0, 1, 1], [], []>} : vector<2x32xf32>, vector<32x28xf32>, vector<2x28xf32> -> vector<2x28xf32>
    %c0_137 = arith.constant 0 : index
    %c0_138 = arith.constant 0 : index
    %343 = vector.load %arg22[%c0_137, %c0_138] : memref<1x28xf32, #tpu.memory_space<vmem>>, vector<1x28xf32>
    %344 = vector.broadcast %343 : vector<1x28xf32> to vector<2x28xf32>
    %345 = arith.addf %342, %344 : vector<2x28xf32>
    %c0_139 = arith.constant 0 : index
    %c0_140 = arith.constant 0 : index
    %346 = vector.load %arg24[%c0_139, %c0_140] : memref<2x28xf32, #tpu.memory_space<vmem>>, vector<2x28xf32>
    tpu.vector_store %arg24[%c0_139, %c0_140], %345 {strides = array<i32>} : memref<2x28xf32, #tpu.memory_space<vmem>>, vector<2x28xf32>,
    return
  }
  func.func @transform_0(%arg0: i32) -> (i32, i32, i32) {
    %c0_i32 = arith.constant 0 : i32
    %c0_i32_0 = arith.constant 0 : i32
    %c0_i32_1 = arith.constant 0 : i32
    return %arg0, %c0_i32, %c0_i32_0 : i32, i32, i32
  }
  func.func @transform_1(%arg0: i32) -> (i32, i32) {
    %c0_i32 = arith.constant 0 : i32
    %c0_i32_0 = arith.constant 0 : i32
    return %arg0, %c0_i32 : i32, i32
  }
  func.func @transform_2(%arg0: i32) -> (i32, i32, i32) {
    %c0_i32 = arith.constant 0 : i32
    %c0_i32_0 = arith.constant 0 : i32
    %c0_i32_1 = arith.constant 0 : i32
    return %arg0, %c0_i32, %c0_i32_0 : i32, i32, i32
  }
  func.func @transform_3(%arg0: i32) -> (i32, i32, i32) {
    %c0_i32 = arith.constant 0 : i32
    %c0_i32_0 = arith.constant 0 : i32
    %c0_i32_1 = arith.constant 0 : i32
    %c0_i32_2 = arith.constant 0 : i32
    return %c0_i32, %c0_i32_0, %c0_i32_1 : i32, i32, i32
  }
  func.func @transform_4(%arg0: i32) -> (i32, i32, i32) {
    %c0_i32 = arith.constant 0 : i32
    %c0_i32_0 = arith.constant 0 : i32
    %c0_i32_1 = arith.constant 0 : i32
    %c0_i32_2 = arith.constant 0 : i32
    return %c0_i32, %c0_i32_0, %c0_i32_1 : i32, i32, i32
  }
  func.func @transform_5(%arg0: i32) -> (i32, i32) {
    %c0_i32 = arith.constant 0 : i32
    %c0_i32_0 = arith.constant 0 : i32
    %c0_i32_1 = arith.constant 0 : i32
    return %c0_i32, %c0_i32_0 : i32, i32
  }
  func.func @transform_6(%arg0: i32) -> (i32, i32) {
    %c0_i32 = arith.constant 0 : i32
    %c0_i32_0 = arith.constant 0 : i32
    %c0_i32_1 = arith.constant 0 : i32
    return %c0_i32, %c0_i32_0 : i32, i32
  }
  func.func @transform_7(%arg0: i32) -> (i32, i32) {
    %c0_i32 = arith.constant 0 : i32
    %c0_i32_0 = arith.constant 0 : i32
    %c0_i32_1 = arith.constant 0 : i32
    return %c0_i32, %c0_i32_0 : i32, i32
  }
  func.func @transform_8(%arg0: i32) -> (i32, i32) {
    %c0_i32 = arith.constant 0 : i32
    %c0_i32_0 = arith.constant 0 : i32
    %c0_i32_1 = arith.constant 0 : i32
    return %c0_i32, %c0_i32_0 : i32, i32
  }
  func.func @transform_9(%arg0: i32) -> (i32, i32) {
    %c0_i32 = arith.constant 0 : i32
    %c0_i32_0 = arith.constant 0 : i32
    %c0_i32_1 = arith.constant 0 : i32
    return %c0_i32, %c0_i32_0 : i32, i32
  }
  func.func @transform_10(%arg0: i32) -> (i32, i32) {
    %c0_i32 = arith.constant 0 : i32
    %c0_i32_0 = arith.constant 0 : i32
    %c0_i32_1 = arith.constant 0 : i32
    return %c0_i32, %c0_i32_0 : i32, i32
  }
  func.func @transform_11(%arg0: i32) -> (i32, i32) {
    %c0_i32 = arith.constant 0 : i32
    %c0_i32_0 = arith.constant 0 : i32
    %c0_i32_1 = arith.constant 0 : i32
    return %c0_i32, %c0_i32_0 : i32, i32
  }
  func.func @transform_12(%arg0: i32) -> (i32, i32) {
    %c0_i32 = arith.constant 0 : i32
    %c0_i32_0 = arith.constant 0 : i32
    %c0_i32_1 = arith.constant 0 : i32
    return %c0_i32, %c0_i32_0 : i32, i32
  }
  func.func @transform_13(%arg0: i32) -> (i32, i32) {
    %c0_i32 = arith.constant 0 : i32
    %c0_i32_0 = arith.constant 0 : i32
    %c0_i32_1 = arith.constant 0 : i32
    return %c0_i32, %c0_i32_0 : i32, i32
  }
  func.func @transform_14(%arg0: i32) -> (i32, i32) {
    %c0_i32 = arith.constant 0 : i32
    %c0_i32_0 = arith.constant 0 : i32
    %c0_i32_1 = arith.constant 0 : i32
    return %c0_i32, %c0_i32_0 : i32, i32
  }
  func.func @transform_15(%arg0: i32) -> (i32, i32) {
    %c0_i32 = arith.constant 0 : i32
    %c0_i32_0 = arith.constant 0 : i32
    %c0_i32_1 = arith.constant 0 : i32
    return %c0_i32, %c0_i32_0 : i32, i32
  }
  func.func @transform_16(%arg0: i32) -> (i32, i32) {
    %c0_i32 = arith.constant 0 : i32
    %c0_i32_0 = arith.constant 0 : i32
    %c0_i32_1 = arith.constant 0 : i32
    return %c0_i32, %c0_i32_0 : i32, i32
  }
  func.func @transform_17(%arg0: i32) -> (i32, i32) {
    %c0_i32 = arith.constant 0 : i32
    %c0_i32_0 = arith.constant 0 : i32
    %c0_i32_1 = arith.constant 0 : i32
    return %c0_i32, %c0_i32_0 : i32, i32
  }
  func.func @transform_18(%arg0: i32) -> (i32, i32) {
    %c0_i32 = arith.constant 0 : i32
    %c0_i32_0 = arith.constant 0 : i32
    %c0_i32_1 = arith.constant 0 : i32
    return %c0_i32, %c0_i32_0 : i32, i32
  }
  func.func @transform_19(%arg0: i32) -> (i32, i32) {
    %c0_i32 = arith.constant 0 : i32
    %c0_i32_0 = arith.constant 0 : i32
    %c0_i32_1 = arith.constant 0 : i32
    return %c0_i32, %c0_i32_0 : i32, i32
  }
  func.func @transform_20(%arg0: i32) -> (i32, i32) {
    %c0_i32 = arith.constant 0 : i32
    %c0_i32_0 = arith.constant 0 : i32
    %c0_i32_1 = arith.constant 0 : i32
    return %c0_i32, %c0_i32_0 : i32, i32
  }
  func.func @transform_21(%arg0: i32) -> (i32, i32) {
    %c0_i32 = arith.constant 0 : i32
    %c0_i32_0 = arith.constant 0 : i32
    %c0_i32_1 = arith.constant 0 : i32
    return %c0_i32, %c0_i32_0 : i32, i32
  }
  func.func @transform_22(%arg0: i32) -> (i32, i32) {
    %c0_i32 = arith.constant 0 : i32
    %c0_i32_0 = arith.constant 0 : i32
    return %arg0, %c0_i32 : i32, i32
  }
  func.func @transform_23(%arg0: i32) -> (i32, i32) {
    %c0_i32 = arith.constant 0 : i32
    %c0_i32_0 = arith.constant 0 : i32
    return %arg0, %c0_i32 : i32, i32
  }
}

</mosaic_0001>

<llo_original>
// kernel: tpu_custom_call.1
$region0: #{tpu_custom_call.1}
  #allocation0 [shape = 'u32[]', space=smem, size = 0x4, offset = 0x4, fixed_abs, tag = 'smem constant byte address 0x4 - core index']
  #allocation1 [shape = 'u32[144,128]{1,0:T(1,128)}', space=vmem, size = 0x12000, scoped, tag = 'internal scratch']
  #allocation2 [shape = 'f32[1,1]{1,0:T(1,128)S(1)}', space=vmem, size = 0x200, scoped, tag = 'scoped memory for tpu_custom_call.1']
  #allocation3 [shape = 'f32[1,1]{1,0:T(1,128)S(1)}', space=vmem, size = 0x200, scoped, tag = 'scoped memory for tpu_custom_call.1']
  %s0 = inlined_call_operand.vmem [shape: f32[2,8,32], index: 0, kind: input, shape index: {}]
  %s1 = inlined_call_operand.vmem [shape: f32[2,64], index: 1, kind: input, shape index: {}]
  %s2 = inlined_call_operand.vmem [shape: f32[2,16,32], index: 2, kind: input, shape index: {}]
  %s3 = inlined_call_operand.vmem [shape: f32[4,64,32], index: 3, kind: input, shape index: {}]
  %s4 = inlined_call_operand.vmem [shape: f32[4,1,32], index: 4, kind: input, shape index: {}]
  %s5 = inlined_call_operand.vmem [shape: f32[64,32], index: 5, kind: input, shape index: {}]
  %s6 = inlined_call_operand.vmem [shape: f32[1,32], index: 6, kind: input, shape index: {}]
  %s7 = inlined_call_operand.vmem [shape: f32[1,32], index: 7, kind: input, shape index: {}]
  %s8 = inlined_call_operand.<no memory space> [shape: f32[1,1], index: 8, kind: input, shape index: {}]
  %s9 = inlined_call_operand.vmem [shape: f32[32,32], index: 9, kind: input, shape index: {}]
  %s10 = inlined_call_operand.vmem [shape: f32[1,32], index: 10, kind: input, shape index: {}]
  %s11 = inlined_call_operand.vmem [shape: f32[32,32], index: 11, kind: input, shape index: {}]
  %s12 = inlined_call_operand.vmem [shape: f32[32,32], index: 12, kind: input, shape index: {}]
  %s13 = inlined_call_operand.vmem [shape: f32[1,32], index: 13, kind: input, shape index: {}]
  %s14 = inlined_call_operand.vmem [shape: f32[1,32], index: 14, kind: input, shape index: {}]
  %s15 = inlined_call_operand.<no memory space> [shape: f32[1,1], index: 15, kind: input, shape index: {}]
  %s16 = inlined_call_operand.vmem [shape: f32[64,32], index: 16, kind: input, shape index: {}]
  %s17 = inlined_call_operand.vmem [shape: f32[1,32], index: 17, kind: input, shape index: {}]
  %s18 = inlined_call_operand.vmem [shape: f32[96,32], index: 18, kind: input, shape index: {}]
  %s19 = inlined_call_operand.vmem [shape: f32[1,32], index: 19, kind: input, shape index: {}]
  %s20 = inlined_call_operand.vmem [shape: f32[32,28], index: 20, kind: input, shape index: {}]
  %s21 = inlined_call_operand.vmem [shape: f32[1,28], index: 21, kind: input, shape index: {}]
  %s22 = inlined_call_operand.hbm [shape: f32[2,32], index: 22, kind: output, shape index: {0}]
  %s23 = inlined_call_operand.hbm [shape: f32[2,28], index: 23, kind: output, shape index: {1}]
  %24 = xla_tuple %s22, %s23
  %s25 = sld [smem:[#allocation0]]
  $region106: #{tpu_custom_call.1} parent=0
    _
  %s27 = ssub.s32 1, %s25
  %s28 = scalar_select 0, %s27, %s25
  %v29 = vstv %s8
  %30 = vst [vmem:[#allocation2] sm:$0x1] %v29
  %v31 = vstv %s15
  %32 = vst [vmem:[#allocation3] sm:$0x1] %v31
  $region1: #{tpu_custom_call.1} parent=0
    #allocation4 [shape = 'u8[1024]{0}', space=vmem, size = 0x400, scoped, tag = 'output window, operand 0, single buffered']
    #allocation5 [shape = 's32[1]{0}', space=sflag, size = 0x4, scoped, tag = 'scoped memory for tpu_custom_call.1']
    #allocation6 [shape = 'u8[1024]{0}', space=vmem, size = 0x400, scoped, tag = 'output window, operand 1, single buffered']
    #allocation7 [shape = 's32[1]{0}', space=sflag, size = 0x4, scoped, tag = 'scoped memory for tpu_custom_call.1']
    %33 = vsyncpa [#allocation5], 0
    %34 = vsyncpa [#allocation7], 0
    // Predicated region
    $region2: #{tpu_custom_call.1} parent=1 // pred_check
      _
    $region3: #{tpu_custom_call.1} parent=1 // pred_check_branch
      %36 = sbr.rel (0) target = $region5
    $region4: #{tpu_custom_call.1} parent=1 // pred_region
      _
    $region5: #{tpu_custom_call.1} parent=1 // pred_fallthru
      _
    // Predicated region
    $region6: #{tpu_custom_call.1} parent=1 // pred_check
      _
    $region7: #{tpu_custom_call.1} parent=1 // pred_check_branch
      %38 = sbr.rel (0) target = $region9
    $region8: #{tpu_custom_call.1} parent=1 // pred_region
      _
    $region9: #{tpu_custom_call.1} parent=1 // pred_fallthru
      _
    // Predicated region
    $region10: #{tpu_custom_call.1} parent=1 // pred_check
      _
    $region11: #{tpu_custom_call.1} parent=1 // pred_check_branch
      %40 = sbr.rel (0) target = $region13
    $region12: #{tpu_custom_call.1} parent=1 // pred_region
      _
    $region13: #{tpu_custom_call.1} parent=1 // pred_fallthru
      _
    // Predicated region
    $region14: #{tpu_custom_call.1} parent=1 // pred_check
      _
    $region15: #{tpu_custom_call.1} parent=1 // pred_check_branch
      %42 = sbr.rel (0) target = $region17
    $region16: #{tpu_custom_call.1} parent=1 // pred_region
      _
    $region17: #{tpu_custom_call.1} parent=1 // pred_fallthru
      _
    // Predicated region
    $region18: #{tpu_custom_call.1} parent=1 // pred_check
      _
    $region19: #{tpu_custom_call.1} parent=1 // pred_check_branch
      %44 = sbr.rel (0) target = $region21
    $region20: #{tpu_custom_call.1} parent=1 // pred_region
      _
    $region21: #{tpu_custom_call.1} parent=1 // pred_fallthru
      _
    // Predicated region
    $region22: #{tpu_custom_call.1} parent=1 // pred_check
      _
    $region23: #{tpu_custom_call.1} parent=1 // pred_check_branch
      %46 = sbr.rel (0) target = $region25
    $region24: #{tpu_custom_call.1} parent=1 // pred_region
      _
    $region25: #{tpu_custom_call.1} parent=1 // pred_fallthru
      _
    // Predicated region
    $region26: #{tpu_custom_call.1} parent=1 // pred_check
      _
    $region27: #{tpu_custom_call.1} parent=1 // pred_check_branch
      %48 = sbr.rel (0) target = $region29
    $region28: #{tpu_custom_call.1} parent=1 // pred_region
      _
    $region29: #{tpu_custom_call.1} parent=1 // pred_fallthru
      _
    // Predicated region
    $region30: #{tpu_custom_call.1} parent=1 // pred_check
      _
    $region31: #{tpu_custom_call.1} parent=1 // pred_check_branch
      %50 = sbr.rel (0) target = $region33
    $region32: #{tpu_custom_call.1} parent=1 // pred_region
      _
    $region33: #{tpu_custom_call.1} parent=1 // pred_fallthru
      _
    // Predicated region
    $region34: #{tpu_custom_call.1} parent=1 // pred_check
      _
    $region35: #{tpu_custom_call.1} parent=1 // pred_check_branch
      %52 = sbr.rel (0) target = $region37
    $region36: #{tpu_custom_call.1} parent=1 // pred_region
      _
    $region37: #{tpu_custom_call.1} parent=1 // pred_fallthru
      _
    // Predicated region
    $region38: #{tpu_custom_call.1} parent=1 // pred_check
      _
    $region39: #{tpu_custom_call.1} parent=1 // pred_check_branch
      %54 = sbr.rel (0) target = $region41
    $region40: #{tpu_custom_call.1} parent=1 // pred_region
      _
    $region41: #{tpu_custom_call.1} parent=1 // pred_fallthru
      _
    // Predicated region
    $region42: #{tpu_custom_call.1} parent=1 // pred_check
      _
    $region43: #{tpu_custom_call.1} parent=1 // pred_check_branch
      %56 = sbr.rel (0) target = $region45
    $region44: #{tpu_custom_call.1} parent=1 // pred_region
      _
    $region45: #{tpu_custom_call.1} parent=1 // pred_fallthru
      _
    // Predicated region
    $region46: #{tpu_custom_call.1} parent=1 // pred_check
      _
    $region47: #{tpu_custom_call.1} parent=1 // pred_check_branch
      %58 = sbr.rel (0) target = $region49
    $region48: #{tpu_custom_call.1} parent=1 // pred_region
      _
    $region49: #{tpu_custom_call.1} parent=1 // pred_fallthru
      _
    // Predicated region
    $region50: #{tpu_custom_call.1} parent=1 // pred_check
      _
    $region51: #{tpu_custom_call.1} parent=1 // pred_check_branch
      %60 = sbr.rel (0) target = $region53
    $region52: #{tpu_custom_call.1} parent=1 // pred_region
      _
    $region53: #{tpu_custom_call.1} parent=1 // pred_fallthru
      _
    // Predicated region
    $region54: #{tpu_custom_call.1} parent=1 // pred_check
      _
    $region55: #{tpu_custom_call.1} parent=1 // pred_check_branch
      %62 = sbr.rel (0) target = $region57
    $region56: #{tpu_custom_call.1} parent=1 // pred_region
      _
    $region57: #{tpu_custom_call.1} parent=1 // pred_fallthru
      _
    // Predicated region
    $region58: #{tpu_custom_call.1} parent=1 // pred_check
      _
    $region59: #{tpu_custom_call.1} parent=1 // pred_check_branch
      %64 = sbr.rel (0) target = $region61
    $region60: #{tpu_custom_call.1} parent=1 // pred_region
      _
    $region61: #{tpu_custom_call.1} parent=1 // pred_fallthru
      _
    // Predicated region
    $region62: #{tpu_custom_call.1} parent=1 // pred_check
      _
    $region63: #{tpu_custom_call.1} parent=1 // pred_check_branch
      %66 = sbr.rel (0) target = $region65
    $region64: #{tpu_custom_call.1} parent=1 // pred_region
      _
    $region65: #{tpu_custom_call.1} parent=1 // pred_fallthru
      _
    // Predicated region
    $region66: #{tpu_custom_call.1} parent=1 // pred_check
      _
    $region67: #{tpu_custom_call.1} parent=1 // pred_check_branch
      %68 = sbr.rel (0) target = $region69
    $region68: #{tpu_custom_call.1} parent=1 // pred_region
      _
    $region69: #{tpu_custom_call.1} parent=1 // pred_fallthru
      _
    // Predicated region
    $region70: #{tpu_custom_call.1} parent=1 // pred_check
      _
    $region71: #{tpu_custom_call.1} parent=1 // pred_check_branch
      %70 = sbr.rel (0) target = $region73
    $region72: #{tpu_custom_call.1} parent=1 // pred_region
      _
    $region73: #{tpu_custom_call.1} parent=1 // pred_fallthru
      _
    // Predicated region
    $region74: #{tpu_custom_call.1} parent=1 // pred_check
      _
    $region75: #{tpu_custom_call.1} parent=1 // pred_check_branch
      %72 = sbr.rel (0) target = $region77
    $region76: #{tpu_custom_call.1} parent=1 // pred_region
      _
    $region77: #{tpu_custom_call.1} parent=1 // pred_fallthru
      _
    // Predicated region
    $region78: #{tpu_custom_call.1} parent=1 // pred_check
      _
    $region79: #{tpu_custom_call.1} parent=1 // pred_check_branch
      %74 = sbr.rel (0) target = $region81
    $region80: #{tpu_custom_call.1} parent=1 // pred_region
      _
    $region81: #{tpu_custom_call.1} parent=1 // pred_fallthru
      _
    // Predicated region
    $region82: #{tpu_custom_call.1} parent=1 // pred_check
      _
    $region83: #{tpu_custom_call.1} parent=1 // pred_check_branch
      %76 = sbr.rel (0) target = $region85
    $region84: #{tpu_custom_call.1} parent=1 // pred_region
      _
    $region85: #{tpu_custom_call.1} parent=1 // pred_fallthru
      _
    // Predicated region
    $region86: #{tpu_custom_call.1} parent=1 // pred_check
      _
    $region87: #{tpu_custom_call.1} parent=1 // pred_check_branch
      %78 = sbr.rel (0) target = $region89
    $region88: #{tpu_custom_call.1} parent=1 // pred_region
      _
    $region89: #{tpu_custom_call.1} parent=1 // pred_fallthru
      _
    %v79 = vld [vmem:[%s0] sm:$0xff]
    %v80 = vld [vmem:[%s0 + $0x8] sm:$0xff]
    %v81 = vld [vmem:[%s1] sm:$0x3]
    %v82 = vld [vmem:[%s2] sm:$0xff]
    %v83 = vld [vmem:[%s2 + $0x8] sm:$0xff]
    %v84 = vld [vmem:[%s2 + $0x10] sm:$0xff]
    %v85 = vld [vmem:[%s2 + $0x18] sm:$0xff]
    %v86 = vld [vmem:[%s5] sm:$0xff]
    %v87 = vld [vmem:[%s5 + $0x8] sm:$0xff]
    %v88 = vld [vmem:[%s5 + $0x10] sm:$0xff]
    %v89 = vld [vmem:[%s5 + $0x18] sm:$0xff]
    %v90 = vld [vmem:[%s5 + $0x20] sm:$0xff]
    %v91 = vld [vmem:[%s5 + $0x28] sm:$0xff]
    %v92 = vld [vmem:[%s5 + $0x30] sm:$0xff]
    %v93 = vld [vmem:[%s5 + $0x38] sm:$0xff]
    %v94 = vld [vmem:[%s6] sm:$0x1]
    %v95 = vld [vmem:[%s7] sm:$0x1]
    %v96 = vld [vmem:[#allocation2] sm:$0x1]
    %v97 = vld [vmem:[%s9] sm:$0xff]
    %v98 = vld [vmem:[%s9 + $0x8] sm:$0xff]
    %v99 = vld [vmem:[%s9 + $0x10] sm:$0xff]
    %v100 = vld [vmem:[%s9 + $0x18] sm:$0xff]
    %v101 = vld [vmem:[%s10] sm:$0x1]
    %v102 = vld [vmem:[%s11] sm:$0xff]
    %v103 = vld [vmem:[%s11 + $0x8] sm:$0xff]
    %v104 = vld [vmem:[%s11 + $0x10] sm:$0xff]
    %v105 = vld [vmem:[%s11 + $0x18] sm:$0xff]
    %v106 = vld [vmem:[%s12] sm:$0xff]
    %v107 = vld [vmem:[%s12 + $0x8] sm:$0xff]
    %v108 = vld [vmem:[%s12 + $0x10] sm:$0xff]
    %v109 = vld [vmem:[%s12 + $0x18] sm:$0xff]
    %v110 = vld [vmem:[%s13] sm:$0x1]
    %v111 = vld [vmem:[%s14] sm:$0x1]
    %v112 = vld [vmem:[#allocation3] sm:$0x1]
    %v113 = vld [vmem:[%s16] sm:$0xff]
    %v114 = vld [vmem:[%s16 + $0x8] sm:$0xff]
    %v115 = vld [vmem:[%s16 + $0x10] sm:$0xff]
    %v116 = vld [vmem:[%s16 + $0x18] sm:$0xff]
    %v117 = vld [vmem:[%s16 + $0x20] sm:$0xff]
    %v118 = vld [vmem:[%s16 + $0x28] sm:$0xff]
    %v119 = vld [vmem:[%s16 + $0x30] sm:$0xff]
    %v120 = vld [vmem:[%s16 + $0x38] sm:$0xff]
    %v121 = vld [vmem:[%s17] sm:$0x1]
    %v122 = vld [vmem:[%s3] sm:$0xff]
    %v123 = vld [vmem:[%s3 + $0x8] sm:$0xff]
    %v124 = vld [vmem:[%s3 + $0x10] sm:$0xff]
    %v125 = vld [vmem:[%s3 + $0x18] sm:$0xff]
    %v126 = vld [vmem:[%s3 + $0x20] sm:$0xff]
    %v127 = vld [vmem:[%s3 + $0x28] sm:$0xff]
    %v128 = vld [vmem:[%s3 + $0x30] sm:$0xff]
    %v129 = vld [vmem:[%s3 + $0x38] sm:$0xff]
    %v130 = vld [vmem:[%s4] sm:$0x1]
    %v132 = vlaneseq
    %v133 = vshrl.u32 %v132, 7
    %v134 = vsub.s32 0, %v133
    %v135 = vrot.slane %v130, %v134
    %vm137 = vcmask 523264
    %v139 = vsel %vm137, %v81, 0
    %141 = vmatprep.subr.mxu0 0.0
    %142 = vmatpush1.msra.mxu0 %v122
    %143 = vmatprep.subr.mxu0 0.0
    %144 = vmatpush1.msra.mxu0 %v123
    %145 = vmatprep.subr.mxu0 0.0
    %146 = vmatpush1.msra.mxu0 %v124
    %147 = vmatprep.subr.mxu0 0.0
    %148 = vmatpush1.msra.mxu0 %v125
    %149 = vmatprep.subr.mxu0 0.0
    %150 = vmatpush1.msra.mxu0 %v126
    %151 = vmatprep.subr.mxu0 0.0
    %152 = vmatpush1.msra.mxu0 %v127
    %153 = vmatprep.subr.mxu0 0.0
    %154 = vmatpush1.msra.mxu0 %v128
    %155 = vmatprep.subr.mxu0 0.0
    %156 = vmatpush1.msra.mxu0 %v129
    %157 = vmatprep.subr.mxu0 0.0
    %158 = vmatpush1.msra.mxu0 0.0
    %159 = vmatprep.subr.mxu0 0.0
    %160 = vmatpush1.msra.mxu0 0.0
    %161 = vmatprep.subr.mxu0 0.0
    %162 = vmatpush1.msra.mxu0 0.0
    %163 = vmatprep.subr.mxu0 0.0
    %164 = vmatpush1.msra.mxu0 0.0
    %165 = vmatprep.subr.mxu0 0.0
    %166 = vmatpush1.msra.mxu0 0.0
    %167 = vmatprep.subr.mxu0 0.0
    %168 = vmatpush1.msra.mxu0 0.0
    %169 = vmatprep.subr.mxu0 0.0
    %170 = vmatpush1.msra.mxu0 0.0
    %171 = vmatprep.subr.mxu0 0.0
    %172 = vmatpush1.msra.mxu0 0.0
    %173 = vmatprep.subr.mxu0 0.0
    %174 = vmatpush1.msra.mxu0 0.0
    %175 = vmatprep.subr.mxu0 0.0
    %176 = vmatpush1.msra.mxu0 0.0
    %177 = vmatprep.subr.mxu0 0.0
    %178 = vmatpush1.msra.mxu0 0.0
    %179 = vmatprep.subr.mxu0 0.0
    %180 = vmatpush1.msra.mxu0 0.0
    %181 = vmatprep.subr.mxu0 0.0
    %182 = vmatpush1.msra.mxu0 0.0
    %183 = vmatprep.subr.mxu0 0.0
    %184 = vmatpush1.msra.mxu0 0.0
    %185 = vmatprep.subr.mxu0 0.0
    %186 = vmatpush1.msra.mxu0 0.0
    %187 = vmatprep.subr.mxu0 0.0
    %188 = vmatpush1.msra.mxu0 0.0
    %189 = vmatprep.subr.mxu0 0.0
    %190 = vmatpush1.msra.mxu0 0.0
    %191 = vmatprep.subr.mxu0 0.0
    %192 = vmatpush1.msra.mxu0 0.0
    %193 = vmatprep.subr.mxu0 0.0
    %194 = vmatpush1.msra.mxu0 0.0
    %195 = vmatprep.subr.mxu0 0.0
    %196 = vmatpush1.msra.mxu0 0.0
    %197 = vmatprep.subr.mxu0 0.0
    %198 = vmatpush1.msra.mxu0 0.0
    %199 = vmatprep.subr.mxu0 0.0
    %200 = vmatpush1.msra.mxu0 0.0
    %201 = vmatprep.subr.mxu0 0.0
    %202 = vmatpush1.msra.mxu0 0.0
    %203 = vmatprep.subr.mxu0 0.0
    %204 = vmatpush1.msra.mxu0 0.0
    %205 = vmatprep.mubr.f32.mxu0 0.0
    %206 = vmatmul.mubr.f32.gmra.mrb[0].mxu0 %v139
    %v207 = vpop.f32.mrb[0].mxu0
    %v208 = vadd.f32 %v135, %v207
    %v209 = vpop.f32.mrb[0].mxu0
    %210 = vdwg.mxu0
    %vm211 = vcmask 261120
    %v213 = vsel %vm211, %v208, 0
    %215 = vmatprep.subr.mxu0 0.0
    %216 = vmatpush1.msra.mxu0 %v90
    %217 = vmatprep.subr.mxu0 0.0
    %218 = vmatpush1.msra.mxu0 %v91
    %219 = vmatprep.subr.mxu0 0.0
    %220 = vmatpush1.msra.mxu0 %v92
    %221 = vmatprep.subr.mxu0 0.0
    %222 = vmatpush1.msra.mxu0 %v93
    %223 = vmatprep.subr.mxu0 0.0
    %224 = vmatpush1.msra.mxu0 0.0
    %225 = vmatprep.subr.mxu0 0.0
    %226 = vmatpush1.msra.mxu0 0.0
    %227 = vmatprep.subr.mxu0 0.0
    %228 = vmatpush1.msra.mxu0 0.0
    %229 = vmatprep.subr.mxu0 0.0
    %230 = vmatpush1.msra.mxu0 0.0
    %231 = vmatprep.subr.mxu0 0.0
    %232 = vmatpush1.msra.mxu0 0.0
    %233 = vmatprep.subr.mxu0 0.0
    %234 = vmatpush1.msra.mxu0 0.0
    %235 = vmatprep.subr.mxu0 0.0
    %236 = vmatpush1.msra.mxu0 0.0
    %237 = vmatprep.subr.mxu0 0.0
    %238 = vmatpush1.msra.mxu0 0.0
    %239 = vmatprep.subr.mxu0 0.0
    %240 = vmatpush1.msra.mxu0 0.0
    %241 = vmatprep.subr.mxu0 0.0
    %242 = vmatpush1.msra.mxu0 0.0
    %243 = vmatprep.subr.mxu0 0.0
    %244 = vmatpush1.msra.mxu0 0.0
    %245 = vmatprep.subr.mxu0 0.0
    %246 = vmatpush1.msra.mxu0 0.0
    %247 = vmatprep.subr.mxu0 0.0
    %248 = vmatpush1.msra.mxu0 0.0
    %249 = vmatprep.subr.mxu0 0.0
    %250 = vmatpush1.msra.mxu0 0.0
    %251 = vmatprep.subr.mxu0 0.0
    %252 = vmatpush1.msra.mxu0 0.0
    %253 = vmatprep.subr.mxu0 0.0
    %254 = vmatpush1.msra.mxu0 0.0
    %255 = vmatprep.subr.mxu0 0.0
    %256 = vmatpush1.msra.mxu0 0.0
    %257 = vmatprep.subr.mxu0 0.0
    %258 = vmatpush1.msra.mxu0 0.0
    %259 = vmatprep.subr.mxu0 0.0
    %260 = vmatpush1.msra.mxu0 0.0
    %261 = vmatprep.subr.mxu0 0.0
    %262 = vmatpush1.msra.mxu0 0.0
    %263 = vmatprep.subr.mxu0 0.0
    %264 = vmatpush1.msra.mxu0 0.0
    %265 = vmatprep.subr.mxu0 0.0
    %266 = vmatpush1.msra.mxu0 0.0
    %267 = vmatprep.subr.mxu0 0.0
    %268 = vmatpush1.msra.mxu0 0.0
    %269 = vmatprep.subr.mxu0 0.0
    %270 = vmatpush1.msra.mxu0 0.0
    %271 = vmatprep.subr.mxu0 0.0
    %272 = vmatpush1.msra.mxu0 0.0
    %273 = vmatprep.subr.mxu0 0.0
    %274 = vmatpush1.msra.mxu0 0.0
    %275 = vmatprep.subr.mxu0 0.0
    %276 = vmatpush1.msra.mxu0 0.0
    %277 = vmatprep.subr.mxu0 0.0
    %278 = vmatpush1.msra.mxu0 0.0
    %279 = vmatprep.mubr.f32.mxu0 0.0
    %280 = vmatmul.mubr.f32.gmra.mrb[0].mxu0 %v213
    %v281 = vpop.f32.mrb[0].mxu0
    %v282 = vadd.f32 0.0, %v281
    %v283 = vpop.f32.mrb[0].mxu0
    %284 = vdwg.mxu0
    %v286 = vsel %vm211, 0.0, 0
    %288 = vmatprep.subr.mxu0 0.0
    %289 = vmatpush1.msra.mxu0 %v86
    %290 = vmatprep.subr.mxu0 0.0
    %291 = vmatpush1.msra.mxu0 %v87
    %292 = vmatprep.subr.mxu0 0.0
    %293 = vmatpush1.msra.mxu0 %v88
    %294 = vmatprep.subr.mxu0 0.0
    %295 = vmatpush1.msra.mxu0 %v89
    %296 = vmatprep.subr.mxu0 0.0
    %297 = vmatpush1.msra.mxu0 0.0
    %298 = vmatprep.subr.mxu0 0.0
    %299 = vmatpush1.msra.mxu0 0.0
    %300 = vmatprep.subr.mxu0 0.0
    %301 = vmatpush1.msra.mxu0 0.0
    %302 = vmatprep.subr.mxu0 0.0
    %303 = vmatpush1.msra.mxu0 0.0
    %304 = vmatprep.subr.mxu0 0.0
    %305 = vmatpush1.msra.mxu0 0.0
    %306 = vmatprep.subr.mxu0 0.0
    %307 = vmatpush1.msra.mxu0 0.0
    %308 = vmatprep.subr.mxu0 0.0
    %309 = vmatpush1.msra.mxu0 0.0
    %310 = vmatprep.subr.mxu0 0.0
    %311 = vmatpush1.msra.mxu0 0.0
    %312 = vmatprep.subr.mxu0 0.0
    %313 = vmatpush1.msra.mxu0 0.0
    %314 = vmatprep.subr.mxu0 0.0
    %315 = vmatpush1.msra.mxu0 0.0
    %316 = vmatprep.subr.mxu0 0.0
    %317 = vmatpush1.msra.mxu0 0.0
    %318 = vmatprep.subr.mxu0 0.0
    %319 = vmatpush1.msra.mxu0 0.0
    %320 = vmatprep.subr.mxu0 0.0
    %321 = vmatpush1.msra.mxu0 0.0
    %322 = vmatprep.subr.mxu0 0.0
    %323 = vmatpush1.msra.mxu0 0.0
    %324 = vmatprep.subr.mxu0 0.0
    %325 = vmatpush1.msra.mxu0 0.0
    %326 = vmatprep.subr.mxu0 0.0
    %327 = vmatpush1.msra.mxu0 0.0
    %328 = vmatprep.subr.mxu0 0.0
    %329 = vmatpush1.msra.mxu0 0.0
    %330 = vmatprep.subr.mxu0 0.0
    %331 = vmatpush1.msra.mxu0 0.0
    %332 = vmatprep.subr.mxu0 0.0
    %333 = vmatpush1.msra.mxu0 0.0
    %334 = vmatprep.subr.mxu0 0.0
    %335 = vmatpush1.msra.mxu0 0.0
    %336 = vmatprep.subr.mxu0 0.0
    %337 = vmatpush1.msra.mxu0 0.0
    %338 = vmatprep.subr.mxu0 0.0
    %339 = vmatpush1.msra.mxu0 0.0
    %340 = vmatprep.subr.mxu0 0.0
    %341 = vmatpush1.msra.mxu0 0.0
    %342 = vmatprep.subr.mxu0 0.0
    %343 = vmatpush1.msra.mxu0 0.0
    %344 = vmatprep.subr.mxu0 0.0
    %345 = vmatpush1.msra.mxu0 0.0
    %346 = vmatprep.subr.mxu0 0.0
    %347 = vmatpush1.msra.mxu0 0.0
    %348 = vmatprep.subr.mxu0 0.0
    %349 = vmatpush1.msra.mxu0 0.0
    %350 = vmatprep.subr.mxu0 0.0
    %351 = vmatpush1.msra.mxu0 0.0
    %352 = vmatprep.mubr.f32.mxu0 0.0
    %353 = vmatmul.mubr.f32.gmra.mrb[0].mxu0 %v286
    %v354 = vpop.f32.mrb[0].mxu0
    %v355 = vadd.f32 %v282, %v354
    %v356 = vpop.f32.mrb[0].mxu0
    %357 = vdwg.mxu0
    %v359 = vlaneseq
    %v360 = vshrl.u32 %v359, 7
    %v361 = vsub.s32 0, %v360
    %v362 = vrot.slane %v94, %v361
    %v364 = vadd.f32 %v355, %v362
    %v366 = vlaneseq
    %v367 = vshrl.u32 %v366, 7
    %v368 = vsub.s32 0, %v367
    %v369 = vrot.slane %v95, %v368
    %v371 = vmul.f32 %v364, %v369
    %v374 = vunpack.c.l.s4 1966171168
    %v375 = vunpack.c.0.s8 %v374
    %v376 = vlaneseq
    %v377 = vshrl.u32 %v376, 7
    %v378 = vsub.s32 %v375, %v377
    %v379 = vrot.slane %v371, %v378
    %v380 = vcombine.high %v379, %v379
    %v382 = vunpack.c.l.s4 1966171168
    %v383 = vunpack.c.0.s8 %v382
    %v384 = vlaneseq
    %v385 = vshrl.u32 %v384, 7
    %v386 = vsub.s32 %v383, %v385
    %v387 = vrot.slane %v379, %v386
    %v389 = vunpack.c.l.s4 1966171168
    %v390 = vunpack.c.0.s8 %v389
    %v391 = vlaneseq
    %v392 = vshrl.u32 %v391, 7
    %v393 = vsub.s32 %v390, %v392
    %v394 = vrot.slane %v380, %v393
    %v395 = vlaneseq
    %v396 = vshrl.u32 %v395, 7
    %v397 = vsub.s32 0, %v396
    %v398 = vrot.slane %v387, %v397
    %v399 = vlaneseq
    %v400 = vshrl.u32 %v399, 7
    %v401 = vsub.s32 0, %v400
    %v402 = vrot.slane %v394, %v401
    %v405 = vmul.f32 %v79, %v398
    %v406 = vmul.f32 %v80, %v402
    %v407 = vsel %vm211, %v405, 0.0
    %408 = vadd.xlane.f32.xlu0 %v407
    %v409 = vpop.xlane.xlu0 %408
    %v410 = vsel %vm211, %v406, 0.0
    %411 = vadd.xlane.f32.xlu0 %v410
    %v412 = vpop.xlane.xlu0 %411
    %v414 = vlaneseq
    %v415 = vshrl.u32 %v414, 7
    %v416 = vsub.s32 0, %v415
    %v417 = vrot.slane %v96, %v416
    %418 = vset.pattern.permute.xlu0 0
    %419 = vperm.xlu0 %418, %v417
    %v420 = vpop.permute.xlu0 %419
    %v422 = vadd.f32 %v409, %v420
    %v423 = vadd.f32 %v412, %v420
    %v426 = vlaneseq
    %v427 = vand.u32 %v426, 127
    %v428 = vlaneseq
    %v429 = vshrl.u32 %v428, 7
    %v430 = vsub.s32 %v427, %v429
    %v431 = vrot.slane %v422, %v430
    %v432 = vlaneseq
    %v433 = vshrl.u32 %v432, 7
    %v434 = vsub.s32 %v427, %v433
    %v435 = vrot.slane %v423, %v434
    %vm436 = vcmask 1041409
    %v437 = vsel %vm436, %v435, %v431
    %vm439 = vcmask 58368
    %v440 = vsel %vm439, %v437, -inf
    %441 = vmax.xlane.f32.xlu0 %v440
    %v442 = vpop.xlane.xlu0 %441
    %v444 = vlaneseq
    %v445 = vshrl.u32 %v444, 7
    %v446 = vsub.s32 0, %v445
    %v447 = vrot.slane %v442, %v446
    %v448 = vlaneseq
    %v449 = vshrl.u32 %v448, 7
    %v450 = vsub.s32 1, %v449
    %v451 = vrot.slane %v442, %v450
    %v454 = vsub.f32 %v422, %v447
    %v455 = vsub.f32 %v423, %v451
    %v456 = vmul.f32 %v454, 1.442695
    %v457 = vpow.pop %v456
    %v458 = vmul.f32 %v455, 1.442695
    %v459 = vpow.pop %v458
    %462 = vset.pattern.permute.xlu0 0
    %463 = vperm.xlu0 %462, %v457
    %v464 = vpop.permute.xlu0 %463
    %465 = vset.pattern.permute.xlu0 0
    %466 = vperm.xlu0 %465, %v459
    %v467 = vpop.permute.xlu0 %466
    %v468 = vlaneseq
    %v469 = vshrl.u32 %v468, 7
    %v470 = vsub.s32 %v427, %v469
    %v471 = vrot.slane %v464, %v470
    %v472 = vlaneseq
    %v473 = vshrl.u32 %v472, 7
    %v474 = vsub.s32 %v427, %v473
    %v475 = vrot.slane %v467, %v474
    %v476 = vsel %vm436, %v475, %v471
    %v478 = vsel %vm439, %v476, 0.0
    %479 = vadd.xlane.f32.xlu0 %v478
    %v480 = vpop.xlane.xlu0 %479
    %v481 = vrcp.pop %v480
    %v483 = vlaneseq
    %v484 = vshrl.u32 %v483, 7
    %v485 = vsub.s32 0, %v484
    %v486 = vrot.slane %v481, %v485
    %v487 = vlaneseq
    %v488 = vshrl.u32 %v487, 7
    %v489 = vsub.s32 1, %v488
    %v490 = vrot.slane %v481, %v489
    %v493 = vmul.f32 %v457, %v486
    %v494 = vmul.f32 %v459, %v490
    %496 = vset.pattern.permute.xlu0 0
    %497 = vperm.xlu0 %496, %v493
    %v498 = vpop.permute.xlu0 %497
    %501 = vset.pattern.permute.xlu0 0
    %502 = vperm.xlu0 %501, %v494
    %v503 = vpop.permute.xlu0 %502
    %v505 = vmul.f32 %v498, %v79
    %v506 = vmul.f32 %v503, %v80
    %v507 = vsel %vm211, %v505, 0.0
    %v508 = vrot.slane %v507, 4
    %v509 = vadd.f32 %v507, %v508
    %v510 = vrot.slane %v509, 2
    %v511 = vadd.f32 %v509, %v510
    %v512 = vrot.slane %v511, 1
    %v513 = vadd.f32 %v511, %v512
    %v514 = vsel %vm211, %v506, 0.0
    %v515 = vrot.slane %v514, 4
    %v516 = vadd.f32 %v514, %v515
    %v517 = vrot.slane %v516, 2
    %v518 = vadd.f32 %v516, %v517
    %v519 = vrot.slane %v518, 1
    %v520 = vadd.f32 %v518, %v519
    %v522 = vlaneseq
    %v523 = vshrl.u32 %v522, 7
    %v524 = vsub.s32 0, %v523
    %v525 = vrot.slane %v101, %v524
    %527 = vmatprep.subr.mxu0 0.0
    %528 = vmatpush1.msra.mxu0 %v97
    %529 = vmatprep.subr.mxu0 0.0
    %530 = vmatpush1.msra.mxu0 %v98
    %531 = vmatprep.subr.mxu0 0.0
    %532 = vmatpush1.msra.mxu0 %v99
    %533 = vmatprep.subr.mxu0 0.0
    %534 = vmatpush1.msra.mxu0 %v100
    %535 = vmatprep.subr.mxu0 0.0
    %536 = vmatpush1.msra.mxu0 0.0
    %537 = vmatprep.subr.mxu0 0.0
    %538 = vmatpush1.msra.mxu0 0.0
    %539 = vmatprep.subr.mxu0 0.0
    %540 = vmatpush1.msra.mxu0 0.0
    %541 = vmatprep.subr.mxu0 0.0
    %542 = vmatpush1.msra.mxu0 0.0
    %543 = vmatprep.subr.mxu0 0.0
    %544 = vmatpush1.msra.mxu0 0.0
    %545 = vmatprep.subr.mxu0 0.0
    %546 = vmatpush1.msra.mxu0 0.0
    %547 = vmatprep.subr.mxu0 0.0
    %548 = vmatpush1.msra.mxu0 0.0
    %549 = vmatprep.subr.mxu0 0.0
    %550 = vmatpush1.msra.mxu0 0.0
    %551 = vmatprep.subr.mxu0 0.0
    %552 = vmatpush1.msra.mxu0 0.0
    %553 = vmatprep.subr.mxu0 0.0
    %554 = vmatpush1.msra.mxu0 0.0
    %555 = vmatprep.subr.mxu0 0.0
    %556 = vmatpush1.msra.mxu0 0.0
    %557 = vmatprep.subr.mxu0 0.0
    %558 = vmatpush1.msra.mxu0 0.0
    %559 = vmatprep.subr.mxu0 0.0
    %560 = vmatpush1.msra.mxu0 0.0
    %561 = vmatprep.subr.mxu0 0.0
    %562 = vmatpush1.msra.mxu0 0.0
    %563 = vmatprep.subr.mxu0 0.0
    %564 = vmatpush1.msra.mxu0 0.0
    %565 = vmatprep.subr.mxu0 0.0
    %566 = vmatpush1.msra.mxu0 0.0
    %567 = vmatprep.subr.mxu0 0.0
    %568 = vmatpush1.msra.mxu0 0.0
    %569 = vmatprep.subr.mxu0 0.0
    %570 = vmatpush1.msra.mxu0 0.0
    %571 = vmatprep.subr.mxu0 0.0
    %572 = vmatpush1.msra.mxu0 0.0
    %573 = vmatprep.subr.mxu0 0.0
    %574 = vmatpush1.msra.mxu0 0.0
    %575 = vmatprep.subr.mxu0 0.0
    %576 = vmatpush1.msra.mxu0 0.0
    %577 = vmatprep.subr.mxu0 0.0
    %578 = vmatpush1.msra.mxu0 0.0
    %579 = vmatprep.subr.mxu0 0.0
    %580 = vmatpush1.msra.mxu0 0.0
    %581 = vmatprep.subr.mxu0 0.0
    %582 = vmatpush1.msra.mxu0 0.0
    %583 = vmatprep.subr.mxu0 0.0
    %584 = vmatpush1.msra.mxu0 0.0
    %585 = vmatprep.subr.mxu0 0.0
    %586 = vmatpush1.msra.mxu0 0.0
    %587 = vmatprep.subr.mxu0 0.0
    %588 = vmatpush1.msra.mxu0 0.0
    %589 = vmatprep.subr.mxu0 0.0
    %590 = vmatpush1.msra.mxu0 0.0
    %591 = vmatprep.mubr.f32.mxu0 0.0
    %592 = vmatmul.mubr.f32.gmra.mrb[0].mxu0 %v286
    %v593 = vpop.f32.mrb[0].mxu0
    %v594 = vadd.f32 %v525, %v593
    %v595 = vpop.f32.mrb[0].mxu0
    %596 = vdwg.mxu0
    %v598 = vlaneseq
    %v599 = vshrl.u32 %v598, 7
    %v600 = vsub.s32 0, %v599
    %v601 = vrot.slane %v111, %v600
    %v603 = vmul.f32 %v513, %v601
    %v604 = vmul.f32 %v520, %v601
    %v607 = vrot.slane %v604, 7
    %v608 = vsel %vm436, %v607, %v603
    %v609 = vsel %vm211, %v608, 0
    %611 = vmatprep.subr.mxu0 0.0
    %612 = vmatpush1.msra.mxu0 %v102
    %613 = vmatprep.subr.mxu0 0.0
    %614 = vmatpush1.msra.mxu0 %v103
    %615 = vmatprep.subr.mxu0 0.0
    %616 = vmatpush1.msra.mxu0 %v104
    %617 = vmatprep.subr.mxu0 0.0
    %618 = vmatpush1.msra.mxu0 %v105
    %619 = vmatprep.subr.mxu0 0.0
    %620 = vmatpush1.msra.mxu0 0.0
    %621 = vmatprep.subr.mxu0 0.0
    %622 = vmatpush1.msra.mxu0 0.0
    %623 = vmatprep.subr.mxu0 0.0
    %624 = vmatpush1.msra.mxu0 0.0
    %625 = vmatprep.subr.mxu0 0.0
    %626 = vmatpush1.msra.mxu0 0.0
    %627 = vmatprep.subr.mxu0 0.0
    %628 = vmatpush1.msra.mxu0 0.0
    %629 = vmatprep.subr.mxu0 0.0
    %630 = vmatpush1.msra.mxu0 0.0
    %631 = vmatprep.subr.mxu0 0.0
    %632 = vmatpush1.msra.mxu0 0.0
    %633 = vmatprep.subr.mxu0 0.0
    %634 = vmatpush1.msra.mxu0 0.0
    %635 = vmatprep.subr.mxu0 0.0
    %636 = vmatpush1.msra.mxu0 0.0
    %637 = vmatprep.subr.mxu0 0.0
    %638 = vmatpush1.msra.mxu0 0.0
    %639 = vmatprep.subr.mxu0 0.0
    %640 = vmatpush1.msra.mxu0 0.0
    %641 = vmatprep.subr.mxu0 0.0
    %642 = vmatpush1.msra.mxu0 0.0
    %643 = vmatprep.subr.mxu0 0.0
    %644 = vmatpush1.msra.mxu0 0.0
    %645 = vmatprep.subr.mxu0 0.0
    %646 = vmatpush1.msra.mxu0 0.0
    %647 = vmatprep.subr.mxu0 0.0
    %648 = vmatpush1.msra.mxu0 0.0
    %649 = vmatprep.subr.mxu0 0.0
    %650 = vmatpush1.msra.mxu0 0.0
    %651 = vmatprep.subr.mxu0 0.0
    %652 = vmatpush1.msra.mxu0 0.0
    %653 = vmatprep.subr.mxu0 0.0
    %654 = vmatpush1.msra.mxu0 0.0
    %655 = vmatprep.subr.mxu0 0.0
    %656 = vmatpush1.msra.mxu0 0.0
    %657 = vmatprep.subr.mxu0 0.0
    %658 = vmatpush1.msra.mxu0 0.0
    %659 = vmatprep.subr.mxu0 0.0
    %660 = vmatpush1.msra.mxu0 0.0
    %661 = vmatprep.subr.mxu0 0.0
    %662 = vmatpush1.msra.mxu0 0.0
    %663 = vmatprep.subr.mxu0 0.0
    %664 = vmatpush1.msra.mxu0 0.0
    %665 = vmatprep.subr.mxu0 0.0
    %666 = vmatpush1.msra.mxu0 0.0
    %667 = vmatprep.subr.mxu0 0.0
    %668 = vmatpush1.msra.mxu0 0.0
    %669 = vmatprep.subr.mxu0 0.0
    %670 = vmatpush1.msra.mxu0 0.0
    %671 = vmatprep.subr.mxu0 0.0
    %672 = vmatpush1.msra.mxu0 0.0
    %673 = vmatprep.subr.mxu0 0.0
    %674 = vmatpush1.msra.mxu0 0.0
    %675 = vmatprep.mubr.f32.mxu0 0.0
    %676 = vmatmul.mubr.f32.gmra.mrb[0].mxu0 %v609
    %v677 = vpop.f32.mrb[0].mxu0
    %v678 = vadd.f32 0.0, %v677
    %v679 = vpop.f32.mrb[0].mxu0
    %680 = vdwg.mxu0
    %681 = vmatprep.subr.mxu0 0.0
    %682 = vmatpush1.msra.mxu0 %v106
    %683 = vmatprep.subr.mxu0 0.0
    %684 = vmatpush1.msra.mxu0 %v107
    %685 = vmatprep.subr.mxu0 0.0
    %686 = vmatpush1.msra.mxu0 %v108
    %687 = vmatprep.subr.mxu0 0.0
    %688 = vmatpush1.msra.mxu0 %v109
    %689 = vmatprep.subr.mxu0 0.0
    %690 = vmatpush1.msra.mxu0 0.0
    %691 = vmatprep.subr.mxu0 0.0
    %692 = vmatpush1.msra.mxu0 0.0
    %693 = vmatprep.subr.mxu0 0.0
    %694 = vmatpush1.msra.mxu0 0.0
    %695 = vmatprep.subr.mxu0 0.0
    %696 = vmatpush1.msra.mxu0 0.0
    %697 = vmatprep.subr.mxu0 0.0
    %698 = vmatpush1.msra.mxu0 0.0
    %699 = vmatprep.subr.mxu0 0.0
    %700 = vmatpush1.msra.mxu0 0.0
    %701 = vmatprep.subr.mxu0 0.0
    %702 = vmatpush1.msra.mxu0 0.0
    %703 = vmatprep.subr.mxu0 0.0
    %704 = vmatpush1.msra.mxu0 0.0
    %705 = vmatprep.subr.mxu0 0.0
    %706 = vmatpush1.msra.mxu0 0.0
    %707 = vmatprep.subr.mxu0 0.0
    %708 = vmatpush1.msra.mxu0 0.0
    %709 = vmatprep.subr.mxu0 0.0
    %710 = vmatpush1.msra.mxu0 0.0
    %711 = vmatprep.subr.mxu0 0.0
    %712 = vmatpush1.msra.mxu0 0.0
    %713 = vmatprep.subr.mxu0 0.0
    %714 = vmatpush1.msra.mxu0 0.0
    %715 = vmatprep.subr.mxu0 0.0
    %716 = vmatpush1.msra.mxu0 0.0
    %717 = vmatprep.subr.mxu0 0.0
    %718 = vmatpush1.msra.mxu0 0.0
    %719 = vmatprep.subr.mxu0 0.0
    %720 = vmatpush1.msra.mxu0 0.0
    %721 = vmatprep.subr.mxu0 0.0
    %722 = vmatpush1.msra.mxu0 0.0
    %723 = vmatprep.subr.mxu0 0.0
    %724 = vmatpush1.msra.mxu0 0.0
    %725 = vmatprep.subr.mxu0 0.0
    %726 = vmatpush1.msra.mxu0 0.0
    %727 = vmatprep.subr.mxu0 0.0
    %728 = vmatpush1.msra.mxu0 0.0
    %729 = vmatprep.subr.mxu0 0.0
    %730 = vmatpush1.msra.mxu0 0.0
    %731 = vmatprep.subr.mxu0 0.0
    %732 = vmatpush1.msra.mxu0 0.0
    %733 = vmatprep.subr.mxu0 0.0
    %734 = vmatpush1.msra.mxu0 0.0
    %735 = vmatprep.subr.mxu0 0.0
    %736 = vmatpush1.msra.mxu0 0.0
    %737 = vmatprep.subr.mxu0 0.0
    %738 = vmatpush1.msra.mxu0 0.0
    %739 = vmatprep.subr.mxu0 0.0
    %740 = vmatpush1.msra.mxu0 0.0
    %741 = vmatprep.subr.mxu0 0.0
    %742 = vmatpush1.msra.mxu0 0.0
    %743 = vmatprep.subr.mxu0 0.0
    %744 = vmatpush1.msra.mxu0 0.0
    %745 = vmatprep.mubr.f32.mxu0 0.0
    %746 = vmatmul.mubr.f32.gmra.mrb[0].mxu0 %v609
    %v747 = vpop.f32.mrb[0].mxu0
    %v748 = vadd.f32 0.0, %v747
    %v749 = vpop.f32.mrb[0].mxu0
    %750 = vdwg.mxu0
    %v751 = vmul.f32 %v594, %v678
    %v752 = vadd.f32 %v751, %v748
    %v754 = vlaneseq
    %v755 = vshrl.u32 %v754, 7
    %v756 = vsub.s32 0, %v755
    %v757 = vrot.slane %v110, %v756
    %v759 = vmul.f32 %v603, %v757
    %v760 = vmul.f32 %v604, %v757
    %v763 = vrot.slane %v760, 7
    %v764 = vsel %vm436, %v763, %v759
    %vm766 = vcmask 254976
    %v767 = vsel %vm766, %v764, 0.0
    %768 = vadd.xlane.f32.xlu0 %v767
    %v769 = vpop.xlane.xlu0 %768
    %v771 = vlaneseq
    %v772 = vshrl.u32 %v771, 7
    %v773 = vsub.s32 0, %v772
    %v774 = vrot.slane %v112, %v773
    %v776 = vadd.f32 %v769, %v774
    %v779 = vunpack.c.l.s4 1966171168
    %v780 = vunpack.c.0.s8 %v779
    %v781 = vlaneseq
    %v782 = vshrl.u32 %v781, 7
    %v783 = vsub.s32 %v780, %v782
    %v784 = vrot.slane %v752, %v783
    %v785 = vcombine.high %v784, %v784
    %v787 = vunpack.c.l.s4 1966171168
    %v788 = vunpack.c.0.s8 %v787
    %v789 = vlaneseq
    %v790 = vshrl.u32 %v789, 7
    %v791 = vsub.s32 %v788, %v790
    %v792 = vrot.slane %v784, %v791
    %v794 = vunpack.c.l.s4 1966171168
    %v795 = vunpack.c.0.s8 %v794
    %v796 = vlaneseq
    %v797 = vshrl.u32 %v796, 7
    %v798 = vsub.s32 %v795, %v797
    %v799 = vrot.slane %v785, %v798
    %v800 = vlaneseq
    %v801 = vshrl.u32 %v800, 7
    %v802 = vsub.s32 0, %v801
    %v803 = vrot.slane %v792, %v802
    %v804 = vlaneseq
    %v805 = vshrl.u32 %v804, 7
    %v806 = vsub.s32 0, %v805
    %v807 = vrot.slane %v799, %v806
    %v810 = vmul.f32 %v82, %v803
    %v811 = vmul.f32 %v83, %v803
    %v812 = vmul.f32 %v84, %v807
    %v813 = vmul.f32 %v85, %v807
    %v814 = vsel %vm211, %v810, 0.0
    %815 = vadd.xlane.f32.xlu0 %v814
    %v816 = vpop.xlane.xlu0 %815
    %v817 = vsel %vm211, %v811, 0.0
    %818 = vadd.xlane.f32.xlu0 %v817
    %v819 = vpop.xlane.xlu0 %818
    %v820 = vsel %vm211, %v812, 0.0
    %821 = vadd.xlane.f32.xlu0 %v820
    %v822 = vpop.xlane.xlu0 %821
    %v823 = vsel %vm211, %v813, 0.0
    %824 = vadd.xlane.f32.xlu0 %v823
    %v825 = vpop.xlane.xlu0 %824
    %827 = vset.pattern.permute.xlu0 0
    %828 = vperm.xlu0 %827, %v776
    %v829 = vpop.permute.xlu0 %828
    %v830 = vlaneseq
    %v831 = vshrl.u32 %v830, 7
    %v832 = vsub.s32 0, %v831
    %v833 = vrot.slane %v829, %v832
    %v834 = vlaneseq
    %v835 = vshrl.u32 %v834, 7
    %v836 = vsub.s32 1, %v835
    %v837 = vrot.slane %v829, %v836
    %v840 = vadd.f32 %v816, %v833
    %v841 = vadd.f32 %v819, %v833
    %v842 = vadd.f32 %v822, %v837
    %v843 = vadd.f32 %v825, %v837
    %848 = vset.pattern.permute.xlu0 0
    %849 = vperm.xlu0 %848, %v840
    %v850 = vpop.permute.xlu0 %849
    %851 = vset.pattern.permute.xlu0 0
    %852 = vperm.xlu0 %851, %v841
    %v853 = vpop.permute.xlu0 %852
    %854 = vset.pattern.permute.xlu0 0
    %855 = vperm.xlu0 %854, %v842
    %v856 = vpop.permute.xlu0 %855
    %857 = vset.pattern.permute.xlu0 0
    %858 = vperm.xlu0 %857, %v843
    %v859 = vpop.permute.xlu0 %858
    %v860 = vlaneseq
    %v861 = vshrl.u32 %v860, 7
    %v862 = vsub.s32 %v427, %v861
    %v863 = vrot.slane %v850, %v862
    %v864 = vadd.s32 %v427, 4294967288
    %v865 = vlaneseq
    %v866 = vshrl.u32 %v865, 7
    %v867 = vsub.s32 %v864, %v866
    %v868 = vrot.slane %v853, %v867
    %vm869 = vcmask 130112
    %v870 = vsel %vm869, %v868, %v863
    %v871 = vlaneseq
    %v872 = vshrl.u32 %v871, 7
    %v873 = vsub.s32 %v427, %v872
    %v874 = vrot.slane %v856, %v873
    %v875 = vlaneseq
    %v876 = vshrl.u32 %v875, 7
    %v877 = vsub.s32 %v864, %v876
    %v878 = vrot.slane %v859, %v877
    %v879 = vsel %vm869, %v878, %v874
    %v880 = vsel %vm436, %v879, %v870
    %vm882 = vcmask 123904
    %v883 = vsel %vm882, %v880, -inf
    %884 = vmax.xlane.f32.xlu0 %v883
    %v885 = vpop.xlane.xlu0 %884
    %v887 = vlaneseq
    %v888 = vshrl.u32 %v887, 7
    %v889 = vsub.s32 0, %v888
    %v890 = vrot.slane %v885, %v889
    %v891 = vlaneseq
    %v892 = vshrl.u32 %v891, 7
    %v893 = vsub.s32 1, %v892
    %v894 = vrot.slane %v885, %v893
    %v897 = vsub.f32 %v840, %v890
    %v898 = vsub.f32 %v841, %v890
    %v899 = vsub.f32 %v842, %v894
    %v900 = vsub.f32 %v843, %v894
    %v901 = vmul.f32 %v897, 1.442695
    %v902 = vpow.pop %v901
    %v903 = vmul.f32 %v898, 1.442695
    %v904 = vpow.pop %v903
    %v905 = vmul.f32 %v899, 1.442695
    %v906 = vpow.pop %v905
    %v907 = vmul.f32 %v900, 1.442695
    %v908 = vpow.pop %v907
    %913 = vset.pattern.permute.xlu0 0
    %914 = vperm.xlu0 %913, %v902
    %v915 = vpop.permute.xlu0 %914
    %916 = vset.pattern.permute.xlu0 0
    %917 = vperm.xlu0 %916, %v904
    %v918 = vpop.permute.xlu0 %917
    %919 = vset.pattern.permute.xlu0 0
    %920 = vperm.xlu0 %919, %v906
    %v921 = vpop.permute.xlu0 %920
    %922 = vset.pattern.permute.xlu0 0
    %923 = vperm.xlu0 %922, %v908
    %v924 = vpop.permute.xlu0 %923
    %v925 = vlaneseq
    %v926 = vshrl.u32 %v925, 7
    %v927 = vsub.s32 %v427, %v926
    %v928 = vrot.slane %v915, %v927
    %v929 = vlaneseq
    %v930 = vshrl.u32 %v929, 7
    %v931 = vsub.s32 %v864, %v930
    %v932 = vrot.slane %v918, %v931
    %v933 = vsel %vm869, %v932, %v928
    %v934 = vlaneseq
    %v935 = vshrl.u32 %v934, 7
    %v936 = vsub.s32 %v427, %v935
    %v937 = vrot.slane %v921, %v936
    %v938 = vlaneseq
    %v939 = vshrl.u32 %v938, 7
    %v940 = vsub.s32 %v864, %v939
    %v941 = vrot.slane %v924, %v940
    %v942 = vsel %vm869, %v941, %v937
    %v943 = vsel %vm436, %v942, %v933
    %v945 = vsel %vm882, %v943, 0.0
    %946 = vadd.xlane.f32.xlu0 %v945
    %v947 = vpop.xlane.xlu0 %946
    %v948 = vrcp.pop %v947
    %v950 = vlaneseq
    %v951 = vshrl.u32 %v950, 7
    %v952 = vsub.s32 0, %v951
    %v953 = vrot.slane %v948, %v952
    %v954 = vlaneseq
    %v955 = vshrl.u32 %v954, 7
    %v956 = vsub.s32 1, %v955
    %v957 = vrot.slane %v948, %v956
    %v960 = vmul.f32 %v902, %v953
    %v961 = vmul.f32 %v904, %v953
    %v962 = vmul.f32 %v906, %v957
    %v963 = vmul.f32 %v908, %v957
    %965 = vset.pattern.permute.xlu0 0
    %966 = vperm.xlu0 %965, %v960
    %v967 = vpop.permute.xlu0 %966
    %970 = vset.pattern.permute.xlu0 0
    %971 = vperm.xlu0 %970, %v961
    %v972 = vpop.permute.xlu0 %971
    %975 = vset.pattern.permute.xlu0 0
    %976 = vperm.xlu0 %975, %v962
    %v977 = vpop.permute.xlu0 %976
    %980 = vset.pattern.permute.xlu0 0
    %981 = vperm.xlu0 %980, %v963
    %v982 = vpop.permute.xlu0 %981
    %v984 = vmul.f32 %v967, %v82
    %v985 = vmul.f32 %v972, %v83
    %v986 = vmul.f32 %v977, %v84
    %v987 = vmul.f32 %v982, %v85
    %v988 = vsel %vm211, %v984, 0.0
    %v989 = vsel %vm211, %v985, 0.0
    %v990 = vadd.f32 %v988, %v989
    %v991 = vrot.slane %v990, 4
    %v992 = vadd.f32 %v990, %v991
    %v993 = vrot.slane %v992, 2
    %v994 = vadd.f32 %v992, %v993
    %v995 = vrot.slane %v994, 1
    %v996 = vadd.f32 %v994, %v995
    %v997 = vsel %vm211, %v986, 0.0
    %v998 = vsel %vm211, %v987, 0.0
    %v999 = vadd.f32 %v997, %v998
    %v1000 = vrot.slane %v999, 4
    %v1001 = vadd.f32 %v999, %v1000
    %v1002 = vrot.slane %v1001, 2
    %v1003 = vadd.f32 %v1001, %v1002
    %v1004 = vrot.slane %v1003, 1
    %v1005 = vadd.f32 %v1003, %v1004
    %1006 = vmatprep.subr.mxu0 0.0
    %1007 = vmatpush1.msra.mxu0 %v117
    %1008 = vmatprep.subr.mxu0 0.0
    %1009 = vmatpush1.msra.mxu0 %v118
    %1010 = vmatprep.subr.mxu0 0.0
    %1011 = vmatpush1.msra.mxu0 %v119
    %1012 = vmatprep.subr.mxu0 0.0
    %1013 = vmatpush1.msra.mxu0 %v120
    %1014 = vmatprep.subr.mxu0 0.0
    %1015 = vmatpush1.msra.mxu0 0.0
    %1016 = vmatprep.subr.mxu0 0.0
    %1017 = vmatpush1.msra.mxu0 0.0
    %1018 = vmatprep.subr.mxu0 0.0
    %1019 = vmatpush1.msra.mxu0 0.0
    %1020 = vmatprep.subr.mxu0 0.0
    %1021 = vmatpush1.msra.mxu0 0.0
    %1022 = vmatprep.subr.mxu0 0.0
    %1023 = vmatpush1.msra.mxu0 0.0
    %1024 = vmatprep.subr.mxu0 0.0
    %1025 = vmatpush1.msra.mxu0 0.0
    %1026 = vmatprep.subr.mxu0 0.0
    %1027 = vmatpush1.msra.mxu0 0.0
    %1028 = vmatprep.subr.mxu0 0.0
    %1029 = vmatpush1.msra.mxu0 0.0
    %1030 = vmatprep.subr.mxu0 0.0
    %1031 = vmatpush1.msra.mxu0 0.0
    %1032 = vmatprep.subr.mxu0 0.0
    %1033 = vmatpush1.msra.mxu0 0.0
    %1034 = vmatprep.subr.mxu0 0.0
    %1035 = vmatpush1.msra.mxu0 0.0
    %1036 = vmatprep.subr.mxu0 0.0
    %1037 = vmatpush1.msra.mxu0 0.0
    %1038 = vmatprep.subr.mxu0 0.0
    %1039 = vmatpush1.msra.mxu0 0.0
    %1040 = vmatprep.subr.mxu0 0.0
    %1041 = vmatpush1.msra.mxu0 0.0
    %1042 = vmatprep.subr.mxu0 0.0
    %1043 = vmatpush1.msra.mxu0 0.0
    %1044 = vmatprep.subr.mxu0 0.0
    %1045 = vmatpush1.msra.mxu0 0.0
    %1046 = vmatprep.subr.mxu0 0.0
    %1047 = vmatpush1.msra.mxu0 0.0
    %1048 = vmatprep.subr.mxu0 0.0
    %1049 = vmatpush1.msra.mxu0 0.0
    %1050 = vmatprep.subr.mxu0 0.0
    %1051 = vmatpush1.msra.mxu0 0.0
    %1052 = vmatprep.subr.mxu0 0.0
    %1053 = vmatpush1.msra.mxu0 0.0
    %1054 = vmatprep.subr.mxu0 0.0
    %1055 = vmatpush1.msra.mxu0 0.0
    %1056 = vmatprep.subr.mxu0 0.0
    %1057 = vmatpush1.msra.mxu0 0.0
    %1058 = vmatprep.subr.mxu0 0.0
    %1059 = vmatpush1.msra.mxu0 0.0
    %1060 = vmatprep.subr.mxu0 0.0
    %1061 = vmatpush1.msra.mxu0 0.0
    %1062 = vmatprep.subr.mxu0 0.0
    %1063 = vmatpush1.msra.mxu0 0.0
    %1064 = vmatprep.subr.mxu0 0.0
    %1065 = vmatpush1.msra.mxu0 0.0
    %1066 = vmatprep.subr.mxu0 0.0
    %1067 = vmatpush1.msra.mxu0 0.0
    %1068 = vmatprep.subr.mxu0 0.0
    %1069 = vmatpush1.msra.mxu0 0.0
    %1070 = vmatprep.mubr.f32.mxu0 0.0
    %1071 = vmatmul.mubr.f32.gmra.mrb[0].mxu0 %v286
    %v1072 = vpop.f32.mrb[0].mxu0
    %v1073 = vadd.f32 0.0, %v1072
    %v1074 = vpop.f32.mrb[0].mxu0
    %1075 = vdwg.mxu0
    %v1078 = vsel %vm436, %v1005, %v996
    %v1079 = vsel %vm211, %v1078, 0
    %1081 = vmatprep.subr.mxu0 0.0
    %1082 = vmatpush1.msra.mxu0 %v113
    %1083 = vmatprep.subr.mxu0 0.0
    %1084 = vmatpush1.msra.mxu0 %v114
    %1085 = vmatprep.subr.mxu0 0.0
    %1086 = vmatpush1.msra.mxu0 %v115
    %1087 = vmatprep.subr.mxu0 0.0
    %1088 = vmatpush1.msra.mxu0 %v116
    %1089 = vmatprep.subr.mxu0 0.0
    %1090 = vmatpush1.msra.mxu0 0.0
    %1091 = vmatprep.subr.mxu0 0.0
    %1092 = vmatpush1.msra.mxu0 0.0
    %1093 = vmatprep.subr.mxu0 0.0
    %1094 = vmatpush1.msra.mxu0 0.0
    %1095 = vmatprep.subr.mxu0 0.0
    %1096 = vmatpush1.msra.mxu0 0.0
    %1097 = vmatprep.subr.mxu0 0.0
    %1098 = vmatpush1.msra.mxu0 0.0
    %1099 = vmatprep.subr.mxu0 0.0
    %1100 = vmatpush1.msra.mxu0 0.0
    %1101 = vmatprep.subr.mxu0 0.0
    %1102 = vmatpush1.msra.mxu0 0.0
    %1103 = vmatprep.subr.mxu0 0.0
    %1104 = vmatpush1.msra.mxu0 0.0
    %1105 = vmatprep.subr.mxu0 0.0
    %1106 = vmatpush1.msra.mxu0 0.0
    %1107 = vmatprep.subr.mxu0 0.0
    %1108 = vmatpush1.msra.mxu0 0.0
    %1109 = vmatprep.subr.mxu0 0.0
    %1110 = vmatpush1.msra.mxu0 0.0
    %1111 = vmatprep.subr.mxu0 0.0
    %1112 = vmatpush1.msra.mxu0 0.0
    %1113 = vmatprep.subr.mxu0 0.0
    %1114 = vmatpush1.msra.mxu0 0.0
    %1115 = vmatprep.subr.mxu0 0.0
    %1116 = vmatpush1.msra.mxu0 0.0
    %1117 = vmatprep.subr.mxu0 0.0
    %1118 = vmatpush1.msra.mxu0 0.0
    %1119 = vmatprep.subr.mxu0 0.0
    %1120 = vmatpush1.msra.mxu0 0.0
    %1121 = vmatprep.subr.mxu0 0.0
    %1122 = vmatpush1.msra.mxu0 0.0
    %1123 = vmatprep.subr.mxu0 0.0
    %1124 = vmatpush1.msra.mxu0 0.0
    %1125 = vmatprep.subr.mxu0 0.0
    %1126 = vmatpush1.msra.mxu0 0.0
    %1127 = vmatprep.subr.mxu0 0.0
    %1128 = vmatpush1.msra.mxu0 0.0
    %1129 = vmatprep.subr.mxu0 0.0
    %1130 = vmatpush1.msra.mxu0 0.0
    %1131 = vmatprep.subr.mxu0 0.0
    %1132 = vmatpush1.msra.mxu0 0.0
    %1133 = vmatprep.subr.mxu0 0.0
    %1134 = vmatpush1.msra.mxu0 0.0
    %1135 = vmatprep.subr.mxu0 0.0
    %1136 = vmatpush1.msra.mxu0 0.0
    %1137 = vmatprep.subr.mxu0 0.0
    %1138 = vmatpush1.msra.mxu0 0.0
    %1139 = vmatprep.subr.mxu0 0.0
    %1140 = vmatpush1.msra.mxu0 0.0
    %1141 = vmatprep.subr.mxu0 0.0
    %1142 = vmatpush1.msra.mxu0 0.0
    %1143 = vmatprep.subr.mxu0 0.0
    %1144 = vmatpush1.msra.mxu0 0.0
    %1145 = vmatprep.mubr.f32.mxu0 0.0
    %1146 = vmatmul.mubr.f32.gmra.mrb[0].mxu0 %v1079
    %v1147 = vpop.f32.mrb[0].mxu0
    %v1148 = vadd.f32 %v1073, %v1147
    %v1149 = vpop.f32.mrb[0].mxu0
    %1150 = vdwg.mxu0
    %v1152 = vlaneseq
    %v1153 = vshrl.u32 %v1152, 7
    %v1154 = vsub.s32 0, %v1153
    %v1155 = vrot.slane %v121, %v1154
    %v1157 = vadd.f32 %v1148, %v1155
    %s1158 = scalar_lea.vmem %s3, 64
    %v1159 = vld [vmem:[%s1158] sm:$0xff]
    %v1160 = vld [vmem:[%s1158 + $0x8] sm:$0xff]
    %v1161 = vld [vmem:[%s1158 + $0x10] sm:$0xff]
    %v1162 = vld [vmem:[%s1158 + $0x18] sm:$0xff]
    %v1163 = vld [vmem:[%s1158 + $0x20] sm:$0xff]
    %v1164 = vld [vmem:[%s1158 + $0x28] sm:$0xff]
    %v1165 = vld [vmem:[%s1158 + $0x30] sm:$0xff]
    %v1166 = vld [vmem:[%s1158 + $0x38] sm:$0xff]
    %s1167 = scalar_lea.vmem %s4, 1
    %v1168 = vld [vmem:[%s1167] sm:$0x1]
    %v1170 = vlaneseq
    %v1171 = vshrl.u32 %v1170, 7
    %v1172 = vsub.s32 0, %v1171
    %v1173 = vrot.slane %v1168, %v1172
    %1175 = vmatprep.subr.mxu0 0.0
    %1176 = vmatpush1.msra.mxu0 %v1159
    %1177 = vmatprep.subr.mxu0 0.0
    %1178 = vmatpush1.msra.mxu0 %v1160
    %1179 = vmatprep.subr.mxu0 0.0
    %1180 = vmatpush1.msra.mxu0 %v1161
    %1181 = vmatprep.subr.mxu0 0.0
    %1182 = vmatpush1.msra.mxu0 %v1162
    %1183 = vmatprep.subr.mxu0 0.0
    %1184 = vmatpush1.msra.mxu0 %v1163
    %1185 = vmatprep.subr.mxu0 0.0
    %1186 = vmatpush1.msra.mxu0 %v1164
    %1187 = vmatprep.subr.mxu0 0.0
    %1188 = vmatpush1.msra.mxu0 %v1165
    %1189 = vmatprep.subr.mxu0 0.0
    %1190 = vmatpush1.msra.mxu0 %v1166
    %1191 = vmatprep.subr.mxu0 0.0
    %1192 = vmatpush1.msra.mxu0 0.0
    %1193 = vmatprep.subr.mxu0 0.0
    %1194 = vmatpush1.msra.mxu0 0.0
    %1195 = vmatprep.subr.mxu0 0.0
    %1196 = vmatpush1.msra.mxu0 0.0
    %1197 = vmatprep.subr.mxu0 0.0
    %1198 = vmatpush1.msra.mxu0 0.0
    %1199 = vmatprep.subr.mxu0 0.0
    %1200 = vmatpush1.msra.mxu0 0.0
    %1201 = vmatprep.subr.mxu0 0.0
    %1202 = vmatpush1.msra.mxu0 0.0
    %1203 = vmatprep.subr.mxu0 0.0
    %1204 = vmatpush1.msra.mxu0 0.0
    %1205 = vmatprep.subr.mxu0 0.0
    %1206 = vmatpush1.msra.mxu0 0.0
    %1207 = vmatprep.subr.mxu0 0.0
    %1208 = vmatpush1.msra.mxu0 0.0
    %1209 = vmatprep.subr.mxu0 0.0
    %1210 = vmatpush1.msra.mxu0 0.0
    %1211 = vmatprep.subr.mxu0 0.0
    %1212 = vmatpush1.msra.mxu0 0.0
    %1213 = vmatprep.subr.mxu0 0.0
    %1214 = vmatpush1.msra.mxu0 0.0
    %1215 = vmatprep.subr.mxu0 0.0
    %1216 = vmatpush1.msra.mxu0 0.0
    %1217 = vmatprep.subr.mxu0 0.0
    %1218 = vmatpush1.msra.mxu0 0.0
    %1219 = vmatprep.subr.mxu0 0.0
    %1220 = vmatpush1.msra.mxu0 0.0
    %1221 = vmatprep.subr.mxu0 0.0
    %1222 = vmatpush1.msra.mxu0 0.0
    %1223 = vmatprep.subr.mxu0 0.0
    %1224 = vmatpush1.msra.mxu0 0.0
    %1225 = vmatprep.subr.mxu0 0.0
    %1226 = vmatpush1.msra.mxu0 0.0
    %1227 = vmatprep.subr.mxu0 0.0
    %1228 = vmatpush1.msra.mxu0 0.0
    %1229 = vmatprep.subr.mxu0 0.0
    %1230 = vmatpush1.msra.mxu0 0.0
    %1231 = vmatprep.subr.mxu0 0.0
    %1232 = vmatpush1.msra.mxu0 0.0
    %1233 = vmatprep.subr.mxu0 0.0
    %1234 = vmatpush1.msra.mxu0 0.0
    %1235 = vmatprep.subr.mxu0 0.0
    %1236 = vmatpush1.msra.mxu0 0.0
    %1237 = vmatprep.subr.mxu0 0.0
    %1238 = vmatpush1.msra.mxu0 0.0
    %1239 = vmatprep.mubr.f32.mxu0 0.0
    %1240 = vmatmul.mubr.f32.gmra.mrb[0].mxu0 %v139
    %v1241 = vpop.f32.mrb[0].mxu0
    %v1242 = vadd.f32 %v1173, %v1241
    %v1243 = vpop.f32.mrb[0].mxu0
    %1244 = vdwg.mxu0
    %v1246 = vsel %vm211, %v1242, 0
    %1248 = vmatprep.subr.mxu0 0.0
    %1249 = vmatpush1.msra.mxu0 %v90
    %1250 = vmatprep.subr.mxu0 0.0
    %1251 = vmatpush1.msra.mxu0 %v91
    %1252 = vmatprep.subr.mxu0 0.0
    %1253 = vmatpush1.msra.mxu0 %v92
    %1254 = vmatprep.subr.mxu0 0.0
    %1255 = vmatpush1.msra.mxu0 %v93
    %1256 = vmatprep.subr.mxu0 0.0
    %1257 = vmatpush1.msra.mxu0 0.0
    %1258 = vmatprep.subr.mxu0 0.0
    %1259 = vmatpush1.msra.mxu0 0.0
    %1260 = vmatprep.subr.mxu0 0.0
    %1261 = vmatpush1.msra.mxu0 0.0
    %1262 = vmatprep.subr.mxu0 0.0
    %1263 = vmatpush1.msra.mxu0 0.0
    %1264 = vmatprep.subr.mxu0 0.0
    %1265 = vmatpush1.msra.mxu0 0.0
    %1266 = vmatprep.subr.mxu0 0.0
    %1267 = vmatpush1.msra.mxu0 0.0
    %1268 = vmatprep.subr.mxu0 0.0
    %1269 = vmatpush1.msra.mxu0 0.0
    %1270 = vmatprep.subr.mxu0 0.0
    %1271 = vmatpush1.msra.mxu0 0.0
    %1272 = vmatprep.subr.mxu0 0.0
    %1273 = vmatpush1.msra.mxu0 0.0
    %1274 = vmatprep.subr.mxu0 0.0
    %1275 = vmatpush1.msra.mxu0 0.0
    %1276 = vmatprep.subr.mxu0 0.0
    %1277 = vmatpush1.msra.mxu0 0.0
    %1278 = vmatprep.subr.mxu0 0.0
    %1279 = vmatpush1.msra.mxu0 0.0
    %1280 = vmatprep.subr.mxu0 0.0
    %1281 = vmatpush1.msra.mxu0 0.0
    %1282 = vmatprep.subr.mxu0 0.0
    %1283 = vmatpush1.msra.mxu0 0.0
    %1284 = vmatprep.subr.mxu0 0.0
    %1285 = vmatpush1.msra.mxu0 0.0
    %1286 = vmatprep.subr.mxu0 0.0
    %1287 = vmatpush1.msra.mxu0 0.0
    %1288 = vmatprep.subr.mxu0 0.0
    %1289 = vmatpush1.msra.mxu0 0.0
    %1290 = vmatprep.subr.mxu0 0.0
    %1291 = vmatpush1.msra.mxu0 0.0
    %1292 = vmatprep.subr.mxu0 0.0
    %1293 = vmatpush1.msra.mxu0 0.0
    %1294 = vmatprep.subr.mxu0 0.0
    %1295 = vmatpush1.msra.mxu0 0.0
    %1296 = vmatprep.subr.mxu0 0.0
    %1297 = vmatpush1.msra.mxu0 0.0
    %1298 = vmatprep.subr.mxu0 0.0
    %1299 = vmatpush1.msra.mxu0 0.0
    %1300 = vmatprep.subr.mxu0 0.0
    %1301 = vmatpush1.msra.mxu0 0.0
    %1302 = vmatprep.subr.mxu0 0.0
    %1303 = vmatpush1.msra.mxu0 0.0
    %1304 = vmatprep.subr.mxu0 0.0
    %1305 = vmatpush1.msra.mxu0 0.0
    %1306 = vmatprep.subr.mxu0 0.0
    %1307 = vmatpush1.msra.mxu0 0.0
    %1308 = vmatprep.subr.mxu0 0.0
    %1309 = vmatpush1.msra.mxu0 0.0
    %1310 = vmatprep.subr.mxu0 0.0
    %1311 = vmatpush1.msra.mxu0 0.0
    %1312 = vmatprep.mubr.f32.mxu0 0.0
    %1313 = vmatmul.mubr.f32.gmra.mrb[0].mxu0 %v1246
    %v1314 = vpop.f32.mrb[0].mxu0
    %v1315 = vadd.f32 0.0, %v1314
    %v1316 = vpop.f32.mrb[0].mxu0
    %1317 = vdwg.mxu0
    %v1320 = vsel %vm436, %v520, %v513
    %v1321 = vsel %vm211, %v1320, 0
    %1323 = vmatprep.subr.mxu0 0.0
    %1324 = vmatpush1.msra.mxu0 %v86
    %1325 = vmatprep.subr.mxu0 0.0
    %1326 = vmatpush1.msra.mxu0 %v87
    %1327 = vmatprep.subr.mxu0 0.0
    %1328 = vmatpush1.msra.mxu0 %v88
    %1329 = vmatprep.subr.mxu0 0.0
    %1330 = vmatpush1.msra.mxu0 %v89
    %1331 = vmatprep.subr.mxu0 0.0
    %1332 = vmatpush1.msra.mxu0 0.0
    %1333 = vmatprep.subr.mxu0 0.0
    %1334 = vmatpush1.msra.mxu0 0.0
    %1335 = vmatprep.subr.mxu0 0.0
    %1336 = vmatpush1.msra.mxu0 0.0
    %1337 = vmatprep.subr.mxu0 0.0
    %1338 = vmatpush1.msra.mxu0 0.0
    %1339 = vmatprep.subr.mxu0 0.0
    %1340 = vmatpush1.msra.mxu0 0.0
    %1341 = vmatprep.subr.mxu0 0.0
    %1342 = vmatpush1.msra.mxu0 0.0
    %1343 = vmatprep.subr.mxu0 0.0
    %1344 = vmatpush1.msra.mxu0 0.0
    %1345 = vmatprep.subr.mxu0 0.0
    %1346 = vmatpush1.msra.mxu0 0.0
    %1347 = vmatprep.subr.mxu0 0.0
    %1348 = vmatpush1.msra.mxu0 0.0
    %1349 = vmatprep.subr.mxu0 0.0
    %1350 = vmatpush1.msra.mxu0 0.0
    %1351 = vmatprep.subr.mxu0 0.0
    %1352 = vmatpush1.msra.mxu0 0.0
    %1353 = vmatprep.subr.mxu0 0.0
    %1354 = vmatpush1.msra.mxu0 0.0
    %1355 = vmatprep.subr.mxu0 0.0
    %1356 = vmatpush1.msra.mxu0 0.0
    %1357 = vmatprep.subr.mxu0 0.0
    %1358 = vmatpush1.msra.mxu0 0.0
    %1359 = vmatprep.subr.mxu0 0.0
    %1360 = vmatpush1.msra.mxu0 0.0
    %1361 = vmatprep.subr.mxu0 0.0
    %1362 = vmatpush1.msra.mxu0 0.0
    %1363 = vmatprep.subr.mxu0 0.0
    %1364 = vmatpush1.msra.mxu0 0.0
    %1365 = vmatprep.subr.mxu0 0.0
    %1366 = vmatpush1.msra.mxu0 0.0
    %1367 = vmatprep.subr.mxu0 0.0
    %1368 = vmatpush1.msra.mxu0 0.0
    %1369 = vmatprep.subr.mxu0 0.0
    %1370 = vmatpush1.msra.mxu0 0.0
    %1371 = vmatprep.subr.mxu0 0.0
    %1372 = vmatpush1.msra.mxu0 0.0
    %1373 = vmatprep.subr.mxu0 0.0
    %1374 = vmatpush1.msra.mxu0 0.0
    %1375 = vmatprep.subr.mxu0 0.0
    %1376 = vmatpush1.msra.mxu0 0.0
    %1377 = vmatprep.subr.mxu0 0.0
    %1378 = vmatpush1.msra.mxu0 0.0
    %1379 = vmatprep.subr.mxu0 0.0
    %1380 = vmatpush1.msra.mxu0 0.0
    %1381 = vmatprep.subr.mxu0 0.0
    %1382 = vmatpush1.msra.mxu0 0.0
    %1383 = vmatprep.subr.mxu0 0.0
    %1384 = vmatpush1.msra.mxu0 0.0
    %1385 = vmatprep.subr.mxu0 0.0
    %1386 = vmatpush1.msra.mxu0 0.0
    %1387 = vmatprep.mubr.f32.mxu0 0.0
    %1388 = vmatmul.mubr.f32.gmra.mrb[0].mxu0 %v1321
    %v1389 = vpop.f32.mrb[0].mxu0
    %v1390 = vadd.f32 %v1315, %v1389
    %v1391 = vpop.f32.mrb[0].mxu0
    %1392 = vdwg.mxu0
    %v1393 = vadd.f32 %v1390, %v362
    %v1394 = vmul.f32 %v1393, %v369
    %v1397 = vunpack.c.l.s4 1966171168
    %v1398 = vunpack.c.0.s8 %v1397
    %v1399 = vlaneseq
    %v1400 = vshrl.u32 %v1399, 7
    %v1401 = vsub.s32 %v1398, %v1400
    %v1402 = vrot.slane %v1394, %v1401
    %v1403 = vcombine.high %v1402, %v1402
    %v1405 = vunpack.c.l.s4 1966171168
    %v1406 = vunpack.c.0.s8 %v1405
    %v1407 = vlaneseq
    %v1408 = vshrl.u32 %v1407, 7
    %v1409 = vsub.s32 %v1406, %v1408
    %v1410 = vrot.slane %v1402, %v1409
    %v1412 = vunpack.c.l.s4 1966171168
    %v1413 = vunpack.c.0.s8 %v1412
    %v1414 = vlaneseq
    %v1415 = vshrl.u32 %v1414, 7
    %v1416 = vsub.s32 %v1413, %v1415
    %v1417 = vrot.slane %v1403, %v1416
    %v1418 = vlaneseq
    %v1419 = vshrl.u32 %v1418, 7
    %v1420 = vsub.s32 0, %v1419
    %v1421 = vrot.slane %v1410, %v1420
    %v1422 = vlaneseq
    %v1423 = vshrl.u32 %v1422, 7
    %v1424 = vsub.s32 0, %v1423
    %v1425 = vrot.slane %v1417, %v1424
    %v1428 = vmul.f32 %v79, %v1421
    %v1429 = vmul.f32 %v80, %v1425
    %v1430 = vsel %vm211, %v1428, 0.0
    %1431 = vadd.xlane.f32.xlu0 %v1430
    %v1432 = vpop.xlane.xlu0 %1431
    %v1433 = vsel %vm211, %v1429, 0.0
    %1434 = vadd.xlane.f32.xlu0 %v1433
    %v1435 = vpop.xlane.xlu0 %1434
    %v1436 = vadd.f32 %v1432, %v420
    %v1437 = vadd.f32 %v1435, %v420
    %v1440 = vlaneseq
    %v1441 = vshrl.u32 %v1440, 7
    %v1442 = vsub.s32 %v427, %v1441
    %v1443 = vrot.slane %v1436, %v1442
    %v1444 = vlaneseq
    %v1445 = vshrl.u32 %v1444, 7
    %v1446 = vsub.s32 %v427, %v1445
    %v1447 = vrot.slane %v1437, %v1446
    %v1448 = vsel %vm436, %v1447, %v1443
    %v1450 = vsel %vm439, %v1448, -inf
    %1451 = vmax.xlane.f32.xlu0 %v1450
    %v1452 = vpop.xlane.xlu0 %1451
    %v1454 = vlaneseq
    %v1455 = vshrl.u32 %v1454, 7
    %v1456 = vsub.s32 0, %v1455
    %v1457 = vrot.slane %v1452, %v1456
    %v1458 = vlaneseq
    %v1459 = vshrl.u32 %v1458, 7
    %v1460 = vsub.s32 1, %v1459
    %v1461 = vrot.slane %v1452, %v1460
    %v1464 = vsub.f32 %v1436, %v1457
    %v1465 = vsub.f32 %v1437, %v1461
    %v1466 = vmul.f32 %v1464, 1.442695
    %v1467 = vpow.pop %v1466
    %v1468 = vmul.f32 %v1465, 1.442695
    %v1469 = vpow.pop %v1468
    %1472 = vset.pattern.permute.xlu0 0
    %1473 = vperm.xlu0 %1472, %v1467
    %v1474 = vpop.permute.xlu0 %1473
    %1475 = vset.pattern.permute.xlu0 0
    %1476 = vperm.xlu0 %1475, %v1469
    %v1477 = vpop.permute.xlu0 %1476
    %v1478 = vlaneseq
    %v1479 = vshrl.u32 %v1478, 7
    %v1480 = vsub.s32 %v427, %v1479
    %v1481 = vrot.slane %v1474, %v1480
    %v1482 = vlaneseq
    %v1483 = vshrl.u32 %v1482, 7
    %v1484 = vsub.s32 %v427, %v1483
    %v1485 = vrot.slane %v1477, %v1484
    %v1486 = vsel %vm436, %v1485, %v1481
    %v1488 = vsel %vm439, %v1486, 0.0
    %1489 = vadd.xlane.f32.xlu0 %v1488
    %v1490 = vpop.xlane.xlu0 %1489
    %v1491 = vrcp.pop %v1490
    %v1493 = vlaneseq
    %v1494 = vshrl.u32 %v1493, 7
    %v1495 = vsub.s32 0, %v1494
    %v1496 = vrot.slane %v1491, %v1495
    %v1497 = vlaneseq
    %v1498 = vshrl.u32 %v1497, 7
    %v1499 = vsub.s32 1, %v1498
    %v1500 = vrot.slane %v1491, %v1499
    %v1503 = vmul.f32 %v1467, %v1496
    %v1504 = vmul.f32 %v1469, %v1500
    %1506 = vset.pattern.permute.xlu0 0
    %1507 = vperm.xlu0 %1506, %v1503
    %v1508 = vpop.permute.xlu0 %1507
    %1511 = vset.pattern.permute.xlu0 0
    %1512 = vperm.xlu0 %1511, %v1504
    %v1513 = vpop.permute.xlu0 %1512
    %v1515 = vmul.f32 %v1508, %v79
    %v1516 = vmul.f32 %v1513, %v80
    %v1517 = vsel %vm211, %v1515, 0.0
    %v1518 = vrot.slane %v1517, 4
    %v1519 = vadd.f32 %v1517, %v1518
    %v1520 = vrot.slane %v1519, 2
    %v1521 = vadd.f32 %v1519, %v1520
    %v1522 = vrot.slane %v1521, 1
    %v1523 = vadd.f32 %v1521, %v1522
    %v1524 = vsel %vm211, %v1516, 0.0
    %v1525 = vrot.slane %v1524, 4
    %v1526 = vadd.f32 %v1524, %v1525
    %v1527 = vrot.slane %v1526, 2
    %v1528 = vadd.f32 %v1526, %v1527
    %v1529 = vrot.slane %v1528, 1
    %v1530 = vadd.f32 %v1528, %v1529
    %v1532 = vsel %vm211, %v1157, 0
    %1534 = vmatprep.subr.mxu0 0.0
    %1535 = vmatpush1.msra.mxu0 %v97
    %1536 = vmatprep.subr.mxu0 0.0
    %1537 = vmatpush1.msra.mxu0 %v98
    %1538 = vmatprep.subr.mxu0 0.0
    %1539 = vmatpush1.msra.mxu0 %v99
    %1540 = vmatprep.subr.mxu0 0.0
    %1541 = vmatpush1.msra.mxu0 %v100
    %1542 = vmatprep.subr.mxu0 0.0
    %1543 = vmatpush1.msra.mxu0 0.0
    %1544 = vmatprep.subr.mxu0 0.0
    %1545 = vmatpush1.msra.mxu0 0.0
    %1546 = vmatprep.subr.mxu0 0.0
    %1547 = vmatpush1.msra.mxu0 0.0
    %1548 = vmatprep.subr.mxu0 0.0
    %1549 = vmatpush1.msra.mxu0 0.0
    %1550 = vmatprep.subr.mxu0 0.0
    %1551 = vmatpush1.msra.mxu0 0.0
    %1552 = vmatprep.subr.mxu0 0.0
    %1553 = vmatpush1.msra.mxu0 0.0
    %1554 = vmatprep.subr.mxu0 0.0
    %1555 = vmatpush1.msra.mxu0 0.0
    %1556 = vmatprep.subr.mxu0 0.0
    %1557 = vmatpush1.msra.mxu0 0.0
    %1558 = vmatprep.subr.mxu0 0.0
    %1559 = vmatpush1.msra.mxu0 0.0
    %1560 = vmatprep.subr.mxu0 0.0
    %1561 = vmatpush1.msra.mxu0 0.0
    %1562 = vmatprep.subr.mxu0 0.0
    %1563 = vmatpush1.msra.mxu0 0.0
    %1564 = vmatprep.subr.mxu0 0.0
    %1565 = vmatpush1.msra.mxu0 0.0
    %1566 = vmatprep.subr.mxu0 0.0
    %1567 = vmatpush1.msra.mxu0 0.0
    %1568 = vmatprep.subr.mxu0 0.0
    %1569 = vmatpush1.msra.mxu0 0.0
    %1570 = vmatprep.subr.mxu0 0.0
    %1571 = vmatpush1.msra.mxu0 0.0
    %1572 = vmatprep.subr.mxu0 0.0
    %1573 = vmatpush1.msra.mxu0 0.0
    %1574 = vmatprep.subr.mxu0 0.0
    %1575 = vmatpush1.msra.mxu0 0.0
    %1576 = vmatprep.subr.mxu0 0.0
    %1577 = vmatpush1.msra.mxu0 0.0
    %1578 = vmatprep.subr.mxu0 0.0
    %1579 = vmatpush1.msra.mxu0 0.0
    %1580 = vmatprep.subr.mxu0 0.0
    %1581 = vmatpush1.msra.mxu0 0.0
    %1582 = vmatprep.subr.mxu0 0.0
    %1583 = vmatpush1.msra.mxu0 0.0
    %1584 = vmatprep.subr.mxu0 0.0
    %1585 = vmatpush1.msra.mxu0 0.0
    %1586 = vmatprep.subr.mxu0 0.0
    %1587 = vmatpush1.msra.mxu0 0.0
    %1588 = vmatprep.subr.mxu0 0.0
    %1589 = vmatpush1.msra.mxu0 0.0
    %1590 = vmatprep.subr.mxu0 0.0
    %1591 = vmatpush1.msra.mxu0 0.0
    %1592 = vmatprep.subr.mxu0 0.0
    %1593 = vmatpush1.msra.mxu0 0.0
    %1594 = vmatprep.subr.mxu0 0.0
    %1595 = vmatpush1.msra.mxu0 0.0
    %1596 = vmatprep.subr.mxu0 0.0
    %1597 = vmatpush1.msra.mxu0 0.0
    %1598 = vmatprep.mubr.f32.mxu0 0.0
    %1599 = vmatmul.mubr.f32.gmra.mrb[0].mxu0 %v1532
    %v1600 = vpop.f32.mrb[0].mxu0
    %v1601 = vadd.f32 %v525, %v1600
    %v1602 = vpop.f32.mrb[0].mxu0
    %1603 = vdwg.mxu0
    %v1604 = vmul.f32 %v1523, %v601
    %v1605 = vmul.f32 %v1530, %v601
    %v1608 = vrot.slane %v1605, 7
    %v1609 = vsel %vm436, %v1608, %v1604
    %v1610 = vsel %vm211, %v1609, 0
    %1612 = vmatprep.subr.mxu0 0.0
    %1613 = vmatpush1.msra.mxu0 %v102
    %1614 = vmatprep.subr.mxu0 0.0
    %1615 = vmatpush1.msra.mxu0 %v103
    %1616 = vmatprep.subr.mxu0 0.0
    %1617 = vmatpush1.msra.mxu0 %v104
    %1618 = vmatprep.subr.mxu0 0.0
    %1619 = vmatpush1.msra.mxu0 %v105
    %1620 = vmatprep.subr.mxu0 0.0
    %1621 = vmatpush1.msra.mxu0 0.0
    %1622 = vmatprep.subr.mxu0 0.0
    %1623 = vmatpush1.msra.mxu0 0.0
    %1624 = vmatprep.subr.mxu0 0.0
    %1625 = vmatpush1.msra.mxu0 0.0
    %1626 = vmatprep.subr.mxu0 0.0
    %1627 = vmatpush1.msra.mxu0 0.0
    %1628 = vmatprep.subr.mxu0 0.0
    %1629 = vmatpush1.msra.mxu0 0.0
    %1630 = vmatprep.subr.mxu0 0.0
    %1631 = vmatpush1.msra.mxu0 0.0
    %1632 = vmatprep.subr.mxu0 0.0
    %1633 = vmatpush1.msra.mxu0 0.0
    %1634 = vmatprep.subr.mxu0 0.0
    %1635 = vmatpush1.msra.mxu0 0.0
    %1636 = vmatprep.subr.mxu0 0.0
    %1637 = vmatpush1.msra.mxu0 0.0
    %1638 = vmatprep.subr.mxu0 0.0
    %1639 = vmatpush1.msra.mxu0 0.0
    %1640 = vmatprep.subr.mxu0 0.0
    %1641 = vmatpush1.msra.mxu0 0.0
    %1642 = vmatprep.subr.mxu0 0.0
    %1643 = vmatpush1.msra.mxu0 0.0
    %1644 = vmatprep.subr.mxu0 0.0
    %1645 = vmatpush1.msra.mxu0 0.0
    %1646 = vmatprep.subr.mxu0 0.0
    %1647 = vmatpush1.msra.mxu0 0.0
    %1648 = vmatprep.subr.mxu0 0.0
    %1649 = vmatpush1.msra.mxu0 0.0
    %1650 = vmatprep.subr.mxu0 0.0
    %1651 = vmatpush1.msra.mxu0 0.0
    %1652 = vmatprep.subr.mxu0 0.0
    %1653 = vmatpush1.msra.mxu0 0.0
    %1654 = vmatprep.subr.mxu0 0.0
    %1655 = vmatpush1.msra.mxu0 0.0
    %1656 = vmatprep.subr.mxu0 0.0
    %1657 = vmatpush1.msra.mxu0 0.0
    %1658 = vmatprep.subr.mxu0 0.0
    %1659 = vmatpush1.msra.mxu0 0.0
    %1660 = vmatprep.subr.mxu0 0.0
    %1661 = vmatpush1.msra.mxu0 0.0
    %1662 = vmatprep.subr.mxu0 0.0
    %1663 = vmatpush1.msra.mxu0 0.0
    %1664 = vmatprep.subr.mxu0 0.0
    %1665 = vmatpush1.msra.mxu0 0.0
    %1666 = vmatprep.subr.mxu0 0.0
    %1667 = vmatpush1.msra.mxu0 0.0
    %1668 = vmatprep.subr.mxu0 0.0
    %1669 = vmatpush1.msra.mxu0 0.0
    %1670 = vmatprep.subr.mxu0 0.0
    %1671 = vmatpush1.msra.mxu0 0.0
    %1672 = vmatprep.subr.mxu0 0.0
    %1673 = vmatpush1.msra.mxu0 0.0
    %1674 = vmatprep.subr.mxu0 0.0
    %1675 = vmatpush1.msra.mxu0 0.0
    %1676 = vmatprep.mubr.f32.mxu0 0.0
    %1677 = vmatmul.mubr.f32.gmra.mrb[0].mxu0 %v1610
    %v1678 = vpop.f32.mrb[0].mxu0
    %v1679 = vadd.f32 0.0, %v1678
    %v1680 = vpop.f32.mrb[0].mxu0
    %1681 = vdwg.mxu0
    %1682 = vmatprep.subr.mxu0 0.0
    %1683 = vmatpush1.msra.mxu0 %v106
    %1684 = vmatprep.subr.mxu0 0.0
    %1685 = vmatpush1.msra.mxu0 %v107
    %1686 = vmatprep.subr.mxu0 0.0
    %1687 = vmatpush1.msra.mxu0 %v108
    %1688 = vmatprep.subr.mxu0 0.0
    %1689 = vmatpush1.msra.mxu0 %v109
    %1690 = vmatprep.subr.mxu0 0.0
    %1691 = vmatpush1.msra.mxu0 0.0
    %1692 = vmatprep.subr.mxu0 0.0
    %1693 = vmatpush1.msra.mxu0 0.0
    %1694 = vmatprep.subr.mxu0 0.0
    %1695 = vmatpush1.msra.mxu0 0.0
    %1696 = vmatprep.subr.mxu0 0.0
    %1697 = vmatpush1.msra.mxu0 0.0
    %1698 = vmatprep.subr.mxu0 0.0
    %1699 = vmatpush1.msra.mxu0 0.0
    %1700 = vmatprep.subr.mxu0 0.0
    %1701 = vmatpush1.msra.mxu0 0.0
    %1702 = vmatprep.subr.mxu0 0.0
    %1703 = vmatpush1.msra.mxu0 0.0
    %1704 = vmatprep.subr.mxu0 0.0
    %1705 = vmatpush1.msra.mxu0 0.0
    %1706 = vmatprep.subr.mxu0 0.0
    %1707 = vmatpush1.msra.mxu0 0.0
    %1708 = vmatprep.subr.mxu0 0.0
    %1709 = vmatpush1.msra.mxu0 0.0
    %1710 = vmatprep.subr.mxu0 0.0
    %1711 = vmatpush1.msra.mxu0 0.0
    %1712 = vmatprep.subr.mxu0 0.0
    %1713 = vmatpush1.msra.mxu0 0.0
    %1714 = vmatprep.subr.mxu0 0.0
    %1715 = vmatpush1.msra.mxu0 0.0
    %1716 = vmatprep.subr.mxu0 0.0
    %1717 = vmatpush1.msra.mxu0 0.0
    %1718 = vmatprep.subr.mxu0 0.0
    %1719 = vmatpush1.msra.mxu0 0.0
    %1720 = vmatprep.subr.mxu0 0.0
    %1721 = vmatpush1.msra.mxu0 0.0
    %1722 = vmatprep.subr.mxu0 0.0
    %1723 = vmatpush1.msra.mxu0 0.0
    %1724 = vmatprep.subr.mxu0 0.0
    %1725 = vmatpush1.msra.mxu0 0.0
    %1726 = vmatprep.subr.mxu0 0.0
    %1727 = vmatpush1.msra.mxu0 0.0
    %1728 = vmatprep.subr.mxu0 0.0
    %1729 = vmatpush1.msra.mxu0 0.0
    %1730 = vmatprep.subr.mxu0 0.0
    %1731 = vmatpush1.msra.mxu0 0.0
    %1732 = vmatprep.subr.mxu0 0.0
    %1733 = vmatpush1.msra.mxu0 0.0
    %1734 = vmatprep.subr.mxu0 0.0
    %1735 = vmatpush1.msra.mxu0 0.0
    %1736 = vmatprep.subr.mxu0 0.0
    %1737 = vmatpush1.msra.mxu0 0.0
    %1738 = vmatprep.subr.mxu0 0.0
    %1739 = vmatpush1.msra.mxu0 0.0
    %1740 = vmatprep.subr.mxu0 0.0
    %1741 = vmatpush1.msra.mxu0 0.0
    %1742 = vmatprep.subr.mxu0 0.0
    %1743 = vmatpush1.msra.mxu0 0.0
    %1744 = vmatprep.subr.mxu0 0.0
    %1745 = vmatpush1.msra.mxu0 0.0
    %1746 = vmatprep.mubr.f32.mxu0 0.0
    %1747 = vmatmul.mubr.f32.gmra.mrb[0].mxu0 %v1610
    %v1748 = vpop.f32.mrb[0].mxu0
    %v1749 = vadd.f32 0.0, %v1748
    %v1750 = vpop.f32.mrb[0].mxu0
    %1751 = vdwg.mxu0
    %v1752 = vmul.f32 %v1601, %v1679
    %v1753 = vadd.f32 %v1752, %v1749
    %v1754 = vmul.f32 %v1604, %v757
    %v1755 = vmul.f32 %v1605, %v757
    %v1758 = vrot.slane %v1755, 7
    %v1759 = vsel %vm436, %v1758, %v1754
    %v1761 = vsel %vm766, %v1759, 0.0
    %1762 = vadd.xlane.f32.xlu0 %v1761
    %v1763 = vpop.xlane.xlu0 %1762
    %v1764 = vadd.f32 %v1763, %v774
    %v1767 = vunpack.c.l.s4 1966171168
    %v1768 = vunpack.c.0.s8 %v1767
    %v1769 = vlaneseq
    %v1770 = vshrl.u32 %v1769, 7
    %v1771 = vsub.s32 %v1768, %v1770
    %v1772 = vrot.slane %v1753, %v1771
    %v1773 = vcombine.high %v1772, %v1772
    %v1775 = vunpack.c.l.s4 1966171168
    %v1776 = vunpack.c.0.s8 %v1775
    %v1777 = vlaneseq
    %v1778 = vshrl.u32 %v1777, 7
    %v1779 = vsub.s32 %v1776, %v1778
    %v1780 = vrot.slane %v1772, %v1779
    %v1782 = vunpack.c.l.s4 1966171168
    %v1783 = vunpack.c.0.s8 %v1782
    %v1784 = vlaneseq
    %v1785 = vshrl.u32 %v1784, 7
    %v1786 = vsub.s32 %v1783, %v1785
    %v1787 = vrot.slane %v1773, %v1786
    %v1788 = vlaneseq
    %v1789 = vshrl.u32 %v1788, 7
    %v1790 = vsub.s32 0, %v1789
    %v1791 = vrot.slane %v1780, %v1790
    %v1792 = vlaneseq
    %v1793 = vshrl.u32 %v1792, 7
    %v1794 = vsub.s32 0, %v1793
    %v1795 = vrot.slane %v1787, %v1794
    %v1798 = vmul.f32 %v82, %v1791
    %v1799 = vmul.f32 %v83, %v1791
    %v1800 = vmul.f32 %v84, %v1795
    %v1801 = vmul.f32 %v85, %v1795
    %v1802 = vsel %vm211, %v1798, 0.0
    %1803 = vadd.xlane.f32.xlu0 %v1802
    %v1804 = vpop.xlane.xlu0 %1803
    %v1805 = vsel %vm211, %v1799, 0.0
    %1806 = vadd.xlane.f32.xlu0 %v1805
    %v1807 = vpop.xlane.xlu0 %1806
    %v1808 = vsel %vm211, %v1800, 0.0
    %1809 = vadd.xlane.f32.xlu0 %v1808
    %v1810 = vpop.xlane.xlu0 %1809
    %v1811 = vsel %vm211, %v1801, 0.0
    %1812 = vadd.xlane.f32.xlu0 %v1811
    %v1813 = vpop.xlane.xlu0 %1812
    %1815 = vset.pattern.permute.xlu0 0
    %1816 = vperm.xlu0 %1815, %v1764
    %v1817 = vpop.permute.xlu0 %1816
    %v1818 = vlaneseq
    %v1819 = vshrl.u32 %v1818, 7
    %v1820 = vsub.s32 0, %v1819
    %v1821 = vrot.slane %v1817, %v1820
    %v1822 = vlaneseq
    %v1823 = vshrl.u32 %v1822, 7
    %v1824 = vsub.s32 1, %v1823
    %v1825 = vrot.slane %v1817, %v1824
    %v1828 = vadd.f32 %v1804, %v1821
    %v1829 = vadd.f32 %v1807, %v1821
    %v1830 = vadd.f32 %v1810, %v1825
    %v1831 = vadd.f32 %v1813, %v1825
    %1836 = vset.pattern.permute.xlu0 0
    %1837 = vperm.xlu0 %1836, %v1828
    %v1838 = vpop.permute.xlu0 %1837
    %1839 = vset.pattern.permute.xlu0 0
    %1840 = vperm.xlu0 %1839, %v1829
    %v1841 = vpop.permute.xlu0 %1840
    %1842 = vset.pattern.permute.xlu0 0
    %1843 = vperm.xlu0 %1842, %v1830
    %v1844 = vpop.permute.xlu0 %1843
    %1845 = vset.pattern.permute.xlu0 0
    %1846 = vperm.xlu0 %1845, %v1831
    %v1847 = vpop.permute.xlu0 %1846
    %v1848 = vlaneseq
    %v1849 = vshrl.u32 %v1848, 7
    %v1850 = vsub.s32 %v427, %v1849
    %v1851 = vrot.slane %v1838, %v1850
    %v1852 = vlaneseq
    %v1853 = vshrl.u32 %v1852, 7
    %v1854 = vsub.s32 %v864, %v1853
    %v1855 = vrot.slane %v1841, %v1854
    %v1856 = vsel %vm869, %v1855, %v1851
    %v1857 = vlaneseq
    %v1858 = vshrl.u32 %v1857, 7
    %v1859 = vsub.s32 %v427, %v1858
    %v1860 = vrot.slane %v1844, %v1859
    %v1861 = vlaneseq
    %v1862 = vshrl.u32 %v1861, 7
    %v1863 = vsub.s32 %v864, %v1862
    %v1864 = vrot.slane %v1847, %v1863
    %v1865 = vsel %vm869, %v1864, %v1860
    %v1866 = vsel %vm436, %v1865, %v1856
    %v1868 = vsel %vm882, %v1866, -inf
    %1869 = vmax.xlane.f32.xlu0 %v1868
    %v1870 = vpop.xlane.xlu0 %1869
    %v1872 = vlaneseq
    %v1873 = vshrl.u32 %v1872, 7
    %v1874 = vsub.s32 0, %v1873
    %v1875 = vrot.slane %v1870, %v1874
    %v1876 = vlaneseq
    %v1877 = vshrl.u32 %v1876, 7
    %v1878 = vsub.s32 1, %v1877
    %v1879 = vrot.slane %v1870, %v1878
    %v1882 = vsub.f32 %v1828, %v1875
    %v1883 = vsub.f32 %v1829, %v1875
    %v1884 = vsub.f32 %v1830, %v1879
    %v1885 = vsub.f32 %v1831, %v1879
    %v1886 = vmul.f32 %v1882, 1.442695
    %v1887 = vpow.pop %v1886
    %v1888 = vmul.f32 %v1883, 1.442695
    %v1889 = vpow.pop %v1888
    %v1890 = vmul.f32 %v1884, 1.442695
    %v1891 = vpow.pop %v1890
    %v1892 = vmul.f32 %v1885, 1.442695
    %v1893 = vpow.pop %v1892
    %1898 = vset.pattern.permute.xlu0 0
    %1899 = vperm.xlu0 %1898, %v1887
    %v1900 = vpop.permute.xlu0 %1899
    %1901 = vset.pattern.permute.xlu0 0
    %1902 = vperm.xlu0 %1901, %v1889
    %v1903 = vpop.permute.xlu0 %1902
    %1904 = vset.pattern.permute.xlu0 0
    %1905 = vperm.xlu0 %1904, %v1891
    %v1906 = vpop.permute.xlu0 %1905
    %1907 = vset.pattern.permute.xlu0 0
    %1908 = vperm.xlu0 %1907, %v1893
    %v1909 = vpop.permute.xlu0 %1908
    %v1910 = vlaneseq
    %v1911 = vshrl.u32 %v1910, 7
    %v1912 = vsub.s32 %v427, %v1911
    %v1913 = vrot.slane %v1900, %v1912
    %v1914 = vlaneseq
    %v1915 = vshrl.u32 %v1914, 7
    %v1916 = vsub.s32 %v864, %v1915
    %v1917 = vrot.slane %v1903, %v1916
    %v1918 = vsel %vm869, %v1917, %v1913
    %v1919 = vlaneseq
    %v1920 = vshrl.u32 %v1919, 7
    %v1921 = vsub.s32 %v427, %v1920
    %v1922 = vrot.slane %v1906, %v1921
    %v1923 = vlaneseq
    %v1924 = vshrl.u32 %v1923, 7
    %v1925 = vsub.s32 %v864, %v1924
    %v1926 = vrot.slane %v1909, %v1925
    %v1927 = vsel %vm869, %v1926, %v1922
    %v1928 = vsel %vm436, %v1927, %v1918
    %v1930 = vsel %vm882, %v1928, 0.0
    %1931 = vadd.xlane.f32.xlu0 %v1930
    %v1932 = vpop.xlane.xlu0 %1931
    %v1933 = vrcp.pop %v1932
    %v1935 = vlaneseq
    %v1936 = vshrl.u32 %v1935, 7
    %v1937 = vsub.s32 0, %v1936
    %v1938 = vrot.slane %v1933, %v1937
    %v1939 = vlaneseq
    %v1940 = vshrl.u32 %v1939, 7
    %v1941 = vsub.s32 1, %v1940
    %v1942 = vrot.slane %v1933, %v1941
    %v1945 = vmul.f32 %v1887, %v1938
    %v1946 = vmul.f32 %v1889, %v1938
    %v1947 = vmul.f32 %v1891, %v1942
    %v1948 = vmul.f32 %v1893, %v1942
    %1950 = vset.pattern.permute.xlu0 0
    %1951 = vperm.xlu0 %1950, %v1945
    %v1952 = vpop.permute.xlu0 %1951
    %1955 = vset.pattern.permute.xlu0 0
    %1956 = vperm.xlu0 %1955, %v1946
    %v1957 = vpop.permute.xlu0 %1956
    %1960 = vset.pattern.permute.xlu0 0
    %1961 = vperm.xlu0 %1960, %v1947
    %v1962 = vpop.permute.xlu0 %1961
    %1965 = vset.pattern.permute.xlu0 0
    %1966 = vperm.xlu0 %1965, %v1948
    %v1967 = vpop.permute.xlu0 %1966
    %v1969 = vmul.f32 %v1952, %v82
    %v1970 = vmul.f32 %v1957, %v83
    %v1971 = vmul.f32 %v1962, %v84
    %v1972 = vmul.f32 %v1967, %v85
    %v1973 = vsel %vm211, %v1969, 0.0
    %v1974 = vsel %vm211, %v1970, 0.0
    %v1975 = vadd.f32 %v1973, %v1974
    %v1976 = vrot.slane %v1975, 4
    %v1977 = vadd.f32 %v1975, %v1976
    %v1978 = vrot.slane %v1977, 2
    %v1979 = vadd.f32 %v1977, %v1978
    %v1980 = vrot.slane %v1979, 1
    %v1981 = vadd.f32 %v1979, %v1980
    %v1982 = vsel %vm211, %v1971, 0.0
    %v1983 = vsel %vm211, %v1972, 0.0
    %v1984 = vadd.f32 %v1982, %v1983
    %v1985 = vrot.slane %v1984, 4
    %v1986 = vadd.f32 %v1984, %v1985
    %v1987 = vrot.slane %v1986, 2
    %v1988 = vadd.f32 %v1986, %v1987
    %v1989 = vrot.slane %v1988, 1
    %v1990 = vadd.f32 %v1988, %v1989
    %1991 = vmatprep.subr.mxu0 0.0
    %1992 = vmatpush1.msra.mxu0 %v117
    %1993 = vmatprep.subr.mxu0 0.0
    %1994 = vmatpush1.msra.mxu0 %v118
    %1995 = vmatprep.subr.mxu0 0.0
    %1996 = vmatpush1.msra.mxu0 %v119
    %1997 = vmatprep.subr.mxu0 0.0
    %1998 = vmatpush1.msra.mxu0 %v120
    %1999 = vmatprep.subr.mxu0 0.0
    %2000 = vmatpush1.msra.mxu0 0.0
    %2001 = vmatprep.subr.mxu0 0.0
    %2002 = vmatpush1.msra.mxu0 0.0
    %2003 = vmatprep.subr.mxu0 0.0
    %2004 = vmatpush1.msra.mxu0 0.0
    %2005 = vmatprep.subr.mxu0 0.0
    %2006 = vmatpush1.msra.mxu0 0.0
    %2007 = vmatprep.subr.mxu0 0.0
    %2008 = vmatpush1.msra.mxu0 0.0
    %2009 = vmatprep.subr.mxu0 0.0
    %2010 = vmatpush1.msra.mxu0 0.0
    %2011 = vmatprep.subr.mxu0 0.0
    %2012 = vmatpush1.msra.mxu0 0.0
    %2013 = vmatprep.subr.mxu0 0.0
    %2014 = vmatpush1.msra.mxu0 0.0
    %2015 = vmatprep.subr.mxu0 0.0
    %2016 = vmatpush1.msra.mxu0 0.0
    %2017 = vmatprep.subr.mxu0 0.0
    %2018 = vmatpush1.msra.mxu0 0.0
    %2019 = vmatprep.subr.mxu0 0.0
    %2020 = vmatpush1.msra.mxu0 0.0
    %2021 = vmatprep.subr.mxu0 0.0
    %2022 = vmatpush1.msra.mxu0 0.0
    %2023 = vmatprep.subr.mxu0 0.0
    %2024 = vmatpush1.msra.mxu0 0.0
    %2025 = vmatprep.subr.mxu0 0.0
    %2026 = vmatpush1.msra.mxu0 0.0
    %2027 = vmatprep.subr.mxu0 0.0
    %2028 = vmatpush1.msra.mxu0 0.0
    %2029 = vmatprep.subr.mxu0 0.0
    %2030 = vmatpush1.msra.mxu0 0.0
    %2031 = vmatprep.subr.mxu0 0.0
    %2032 = vmatpush1.msra.mxu0 0.0
    %2033 = vmatprep.subr.mxu0 0.0
    %2034 = vmatpush1.msra.mxu0 0.0
    %2035 = vmatprep.subr.mxu0 0.0
    %2036 = vmatpush1.msra.mxu0 0.0
    %2037 = vmatprep.subr.mxu0 0.0
    %2038 = vmatpush1.msra.mxu0 0.0
    %2039 = vmatprep.subr.mxu0 0.0
    %2040 = vmatpush1.msra.mxu0 0.0
    %2041 = vmatprep.subr.mxu0 0.0
    %2042 = vmatpush1.msra.mxu0 0.0
    %2043 = vmatprep.subr.mxu0 0.0
    %2044 = vmatpush1.msra.mxu0 0.0
    %2045 = vmatprep.subr.mxu0 0.0
    %2046 = vmatpush1.msra.mxu0 0.0
    %2047 = vmatprep.subr.mxu0 0.0
    %2048 = vmatpush1.msra.mxu0 0.0
    %2049 = vmatprep.subr.mxu0 0.0
    %2050 = vmatpush1.msra.mxu0 0.0
    %2051 = vmatprep.subr.mxu0 0.0
    %2052 = vmatpush1.msra.mxu0 0.0
    %2053 = vmatprep.subr.mxu0 0.0
    %2054 = vmatpush1.msra.mxu0 0.0
    %2055 = vmatprep.mubr.f32.mxu0 0.0
    %2056 = vmatmul.mubr.f32.gmra.mrb[0].mxu0 %v1532
    %v2057 = vpop.f32.mrb[0].mxu0
    %v2058 = vadd.f32 0.0, %v2057
    %v2059 = vpop.f32.mrb[0].mxu0
    %2060 = vdwg.mxu0
    %v2063 = vsel %vm436, %v1990, %v1981
    %v2064 = vsel %vm211, %v2063, 0
    %2066 = vmatprep.subr.mxu0 0.0
    %2067 = vmatpush1.msra.mxu0 %v113
    %2068 = vmatprep.subr.mxu0 0.0
    %2069 = vmatpush1.msra.mxu0 %v114
    %2070 = vmatprep.subr.mxu0 0.0
    %2071 = vmatpush1.msra.mxu0 %v115
    %2072 = vmatprep.subr.mxu0 0.0
    %2073 = vmatpush1.msra.mxu0 %v116
    %2074 = vmatprep.subr.mxu0 0.0
    %2075 = vmatpush1.msra.mxu0 0.0
    %2076 = vmatprep.subr.mxu0 0.0
    %2077 = vmatpush1.msra.mxu0 0.0
    %2078 = vmatprep.subr.mxu0 0.0
    %2079 = vmatpush1.msra.mxu0 0.0
    %2080 = vmatprep.subr.mxu0 0.0
    %2081 = vmatpush1.msra.mxu0 0.0
    %2082 = vmatprep.subr.mxu0 0.0
    %2083 = vmatpush1.msra.mxu0 0.0
    %2084 = vmatprep.subr.mxu0 0.0
    %2085 = vmatpush1.msra.mxu0 0.0
    %2086 = vmatprep.subr.mxu0 0.0
    %2087 = vmatpush1.msra.mxu0 0.0
    %2088 = vmatprep.subr.mxu0 0.0
    %2089 = vmatpush1.msra.mxu0 0.0
    %2090 = vmatprep.subr.mxu0 0.0
    %2091 = vmatpush1.msra.mxu0 0.0
    %2092 = vmatprep.subr.mxu0 0.0
    %2093 = vmatpush1.msra.mxu0 0.0
    %2094 = vmatprep.subr.mxu0 0.0
    %2095 = vmatpush1.msra.mxu0 0.0
    %2096 = vmatprep.subr.mxu0 0.0
    %2097 = vmatpush1.msra.mxu0 0.0
    %2098 = vmatprep.subr.mxu0 0.0
    %2099 = vmatpush1.msra.mxu0 0.0
    %2100 = vmatprep.subr.mxu0 0.0
    %2101 = vmatpush1.msra.mxu0 0.0
    %2102 = vmatprep.subr.mxu0 0.0
    %2103 = vmatpush1.msra.mxu0 0.0
    %2104 = vmatprep.subr.mxu0 0.0
    %2105 = vmatpush1.msra.mxu0 0.0
    %2106 = vmatprep.subr.mxu0 0.0
    %2107 = vmatpush1.msra.mxu0 0.0
    %2108 = vmatprep.subr.mxu0 0.0
    %2109 = vmatpush1.msra.mxu0 0.0
    %2110 = vmatprep.subr.mxu0 0.0
    %2111 = vmatpush1.msra.mxu0 0.0
    %2112 = vmatprep.subr.mxu0 0.0
    %2113 = vmatpush1.msra.mxu0 0.0
    %2114 = vmatprep.subr.mxu0 0.0
    %2115 = vmatpush1.msra.mxu0 0.0
    %2116 = vmatprep.subr.mxu0 0.0
    %2117 = vmatpush1.msra.mxu0 0.0
    %2118 = vmatprep.subr.mxu0 0.0
    %2119 = vmatpush1.msra.mxu0 0.0
    %2120 = vmatprep.subr.mxu0 0.0
    %2121 = vmatpush1.msra.mxu0 0.0
    %2122 = vmatprep.subr.mxu0 0.0
    %2123 = vmatpush1.msra.mxu0 0.0
    %2124 = vmatprep.subr.mxu0 0.0
    %2125 = vmatpush1.msra.mxu0 0.0
    %2126 = vmatprep.subr.mxu0 0.0
    %2127 = vmatpush1.msra.mxu0 0.0
    %2128 = vmatprep.subr.mxu0 0.0
    %2129 = vmatpush1.msra.mxu0 0.0
    %2130 = vmatprep.mubr.f32.mxu0 0.0
    %2131 = vmatmul.mubr.f32.gmra.mrb[0].mxu0 %v2064
    %v2132 = vpop.f32.mrb[0].mxu0
    %v2133 = vadd.f32 %v2058, %v2132
    %v2134 = vpop.f32.mrb[0].mxu0
    %2135 = vdwg.mxu0
    %v2136 = vadd.f32 %v2133, %v1155
    %s2137 = scalar_lea.vmem %s3, 128
    %v2138 = vld [vmem:[%s2137] sm:$0xff]
    %v2139 = vld [vmem:[%s2137 + $0x8] sm:$0xff]
    %v2140 = vld [vmem:[%s2137 + $0x10] sm:$0xff]
    %v2141 = vld [vmem:[%s2137 + $0x18] sm:$0xff]
    %v2142 = vld [vmem:[%s2137 + $0x20] sm:$0xff]
    %v2143 = vld [vmem:[%s2137 + $0x28] sm:$0xff]
    %v2144 = vld [vmem:[%s2137 + $0x30] sm:$0xff]
    %v2145 = vld [vmem:[%s2137 + $0x38] sm:$0xff]
    %s2146 = scalar_lea.vmem %s4, 2
    %v2147 = vld [vmem:[%s2146] sm:$0x1]
    %v2149 = vlaneseq
    %v2150 = vshrl.u32 %v2149, 7
    %v2151 = vsub.s32 0, %v2150
    %v2152 = vrot.slane %v2147, %v2151
    %2154 = vmatprep.subr.mxu0 0.0
    %2155 = vmatpush1.msra.mxu0 %v2138
    %2156 = vmatprep.subr.mxu0 0.0
    %2157 = vmatpush1.msra.mxu0 %v2139
    %2158 = vmatprep.subr.mxu0 0.0
    %2159 = vmatpush1.msra.mxu0 %v2140
    %2160 = vmatprep.subr.mxu0 0.0
    %2161 = vmatpush1.msra.mxu0 %v2141
    %2162 = vmatprep.subr.mxu0 0.0
    %2163 = vmatpush1.msra.mxu0 %v2142
    %2164 = vmatprep.subr.mxu0 0.0
    %2165 = vmatpush1.msra.mxu0 %v2143
    %2166 = vmatprep.subr.mxu0 0.0
    %2167 = vmatpush1.msra.mxu0 %v2144
    %2168 = vmatprep.subr.mxu0 0.0
    %2169 = vmatpush1.msra.mxu0 %v2145
    %2170 = vmatprep.subr.mxu0 0.0
    %2171 = vmatpush1.msra.mxu0 0.0
    %2172 = vmatprep.subr.mxu0 0.0
    %2173 = vmatpush1.msra.mxu0 0.0
    %2174 = vmatprep.subr.mxu0 0.0
    %2175 = vmatpush1.msra.mxu0 0.0
    %2176 = vmatprep.subr.mxu0 0.0
    %2177 = vmatpush1.msra.mxu0 0.0
    %2178 = vmatprep.subr.mxu0 0.0
    %2179 = vmatpush1.msra.mxu0 0.0
    %2180 = vmatprep.subr.mxu0 0.0
    %2181 = vmatpush1.msra.mxu0 0.0
    %2182 = vmatprep.subr.mxu0 0.0
    %2183 = vmatpush1.msra.mxu0 0.0
    %2184 = vmatprep.subr.mxu0 0.0
    %2185 = vmatpush1.msra.mxu0 0.0
    %2186 = vmatprep.subr.mxu0 0.0
    %2187 = vmatpush1.msra.mxu0 0.0
    %2188 = vmatprep.subr.mxu0 0.0
    %2189 = vmatpush1.msra.mxu0 0.0
    %2190 = vmatprep.subr.mxu0 0.0
    %2191 = vmatpush1.msra.mxu0 0.0
    %2192 = vmatprep.subr.mxu0 0.0
    %2193 = vmatpush1.msra.mxu0 0.0
    %2194 = vmatprep.subr.mxu0 0.0
    %2195 = vmatpush1.msra.mxu0 0.0
    %2196 = vmatprep.subr.mxu0 0.0
    %2197 = vmatpush1.msra.mxu0 0.0
    %2198 = vmatprep.subr.mxu0 0.0
    %2199 = vmatpush1.msra.mxu0 0.0
    %2200 = vmatprep.subr.mxu0 0.0
    %2201 = vmatpush1.msra.mxu0 0.0
    %2202 = vmatprep.subr.mxu0 0.0
    %2203 = vmatpush1.msra.mxu0 0.0
    %2204 = vmatprep.subr.mxu0 0.0
    %2205 = vmatpush1.msra.mxu0 0.0
    %2206 = vmatprep.subr.mxu0 0.0
    %2207 = vmatpush1.msra.mxu0 0.0
    %2208 = vmatprep.subr.mxu0 0.0
    %2209 = vmatpush1.msra.mxu0 0.0
    %2210 = vmatprep.subr.mxu0 0.0
    %2211 = vmatpush1.msra.mxu0 0.0
    %2212 = vmatprep.subr.mxu0 0.0
    %2213 = vmatpush1.msra.mxu0 0.0
    %2214 = vmatprep.subr.mxu0 0.0
    %2215 = vmatpush1.msra.mxu0 0.0
    %2216 = vmatprep.subr.mxu0 0.0
    %2217 = vmatpush1.msra.mxu0 0.0
    %2218 = vmatprep.mubr.f32.mxu0 0.0
    %2219 = vmatmul.mubr.f32.gmra.mrb[0].mxu0 %v139
    %v2220 = vpop.f32.mrb[0].mxu0
    %v2221 = vadd.f32 %v2152, %v2220
    %v2222 = vpop.f32.mrb[0].mxu0
    %2223 = vdwg.mxu0
    %v2225 = vsel %vm211, %v2221, 0
    %2227 = vmatprep.subr.mxu0 0.0
    %2228 = vmatpush1.msra.mxu0 %v90
    %2229 = vmatprep.subr.mxu0 0.0
    %2230 = vmatpush1.msra.mxu0 %v91
    %2231 = vmatprep.subr.mxu0 0.0
    %2232 = vmatpush1.msra.mxu0 %v92
    %2233 = vmatprep.subr.mxu0 0.0
    %2234 = vmatpush1.msra.mxu0 %v93
    %2235 = vmatprep.subr.mxu0 0.0
    %2236 = vmatpush1.msra.mxu0 0.0
    %2237 = vmatprep.subr.mxu0 0.0
    %2238 = vmatpush1.msra.mxu0 0.0
    %2239 = vmatprep.subr.mxu0 0.0
    %2240 = vmatpush1.msra.mxu0 0.0
    %2241 = vmatprep.subr.mxu0 0.0
    %2242 = vmatpush1.msra.mxu0 0.0
    %2243 = vmatprep.subr.mxu0 0.0
    %2244 = vmatpush1.msra.mxu0 0.0
    %2245 = vmatprep.subr.mxu0 0.0
    %2246 = vmatpush1.msra.mxu0 0.0
    %2247 = vmatprep.subr.mxu0 0.0
    %2248 = vmatpush1.msra.mxu0 0.0
    %2249 = vmatprep.subr.mxu0 0.0
    %2250 = vmatpush1.msra.mxu0 0.0
    %2251 = vmatprep.subr.mxu0 0.0
    %2252 = vmatpush1.msra.mxu0 0.0
    %2253 = vmatprep.subr.mxu0 0.0
    %2254 = vmatpush1.msra.mxu0 0.0
    %2255 = vmatprep.subr.mxu0 0.0
    %2256 = vmatpush1.msra.mxu0 0.0
    %2257 = vmatprep.subr.mxu0 0.0
    %2258 = vmatpush1.msra.mxu0 0.0
    %2259 = vmatprep.subr.mxu0 0.0
    %2260 = vmatpush1.msra.mxu0 0.0
    %2261 = vmatprep.subr.mxu0 0.0
    %2262 = vmatpush1.msra.mxu0 0.0
    %2263 = vmatprep.subr.mxu0 0.0
    %2264 = vmatpush1.msra.mxu0 0.0
    %2265 = vmatprep.subr.mxu0 0.0
    %2266 = vmatpush1.msra.mxu0 0.0
    %2267 = vmatprep.subr.mxu0 0.0
    %2268 = vmatpush1.msra.mxu0 0.0
    %2269 = vmatprep.subr.mxu0 0.0
    %2270 = vmatpush1.msra.mxu0 0.0
    %2271 = vmatprep.subr.mxu0 0.0
    %2272 = vmatpush1.msra.mxu0 0.0
    %2273 = vmatprep.subr.mxu0 0.0
    %2274 = vmatpush1.msra.mxu0 0.0
    %2275 = vmatprep.subr.mxu0 0.0
    %2276 = vmatpush1.msra.mxu0 0.0
    %2277 = vmatprep.subr.mxu0 0.0
    %2278 = vmatpush1.msra.mxu0 0.0
    %2279 = vmatprep.subr.mxu0 0.0
    %2280 = vmatpush1.msra.mxu0 0.0
    %2281 = vmatprep.subr.mxu0 0.0
    %2282 = vmatpush1.msra.mxu0 0.0
    %2283 = vmatprep.subr.mxu0 0.0
    %2284 = vmatpush1.msra.mxu0 0.0
    %2285 = vmatprep.subr.mxu0 0.0
    %2286 = vmatpush1.msra.mxu0 0.0
    %2287 = vmatprep.subr.mxu0 0.0
    %2288 = vmatpush1.msra.mxu0 0.0
    %2289 = vmatprep.subr.mxu0 0.0
    %2290 = vmatpush1.msra.mxu0 0.0
    %2291 = vmatprep.mubr.f32.mxu0 0.0
    %2292 = vmatmul.mubr.f32.gmra.mrb[0].mxu0 %v2225
    %v2293 = vpop.f32.mrb[0].mxu0
    %v2294 = vadd.f32 0.0, %v2293
    %v2295 = vpop.f32.mrb[0].mxu0
    %2296 = vdwg.mxu0
    %v2299 = vsel %vm436, %v1530, %v1523
    %v2300 = vsel %vm211, %v2299, 0
    %2302 = vmatprep.subr.mxu0 0.0
    %2303 = vmatpush1.msra.mxu0 %v86
    %2304 = vmatprep.subr.mxu0 0.0
    %2305 = vmatpush1.msra.mxu0 %v87
    %2306 = vmatprep.subr.mxu0 0.0
    %2307 = vmatpush1.msra.mxu0 %v88
    %2308 = vmatprep.subr.mxu0 0.0
    %2309 = vmatpush1.msra.mxu0 %v89
    %2310 = vmatprep.subr.mxu0 0.0
    %2311 = vmatpush1.msra.mxu0 0.0
    %2312 = vmatprep.subr.mxu0 0.0
    %2313 = vmatpush1.msra.mxu0 0.0
    %2314 = vmatprep.subr.mxu0 0.0
    %2315 = vmatpush1.msra.mxu0 0.0
    %2316 = vmatprep.subr.mxu0 0.0
    %2317 = vmatpush1.msra.mxu0 0.0
    %2318 = vmatprep.subr.mxu0 0.0
    %2319 = vmatpush1.msra.mxu0 0.0
    %2320 = vmatprep.subr.mxu0 0.0
    %2321 = vmatpush1.msra.mxu0 0.0
    %2322 = vmatprep.subr.mxu0 0.0
    %2323 = vmatpush1.msra.mxu0 0.0
    %2324 = vmatprep.subr.mxu0 0.0
    %2325 = vmatpush1.msra.mxu0 0.0
    %2326 = vmatprep.subr.mxu0 0.0
    %2327 = vmatpush1.msra.mxu0 0.0
    %2328 = vmatprep.subr.mxu0 0.0
    %2329 = vmatpush1.msra.mxu0 0.0
    %2330 = vmatprep.subr.mxu0 0.0
    %2331 = vmatpush1.msra.mxu0 0.0
    %2332 = vmatprep.subr.mxu0 0.0
    %2333 = vmatpush1.msra.mxu0 0.0
    %2334 = vmatprep.subr.mxu0 0.0
    %2335 = vmatpush1.msra.mxu0 0.0
    %2336 = vmatprep.subr.mxu0 0.0
    %2337 = vmatpush1.msra.mxu0 0.0
    %2338 = vmatprep.subr.mxu0 0.0
    %2339 = vmatpush1.msra.mxu0 0.0
    %2340 = vmatprep.subr.mxu0 0.0
    %2341 = vmatpush1.msra.mxu0 0.0
    %2342 = vmatprep.subr.mxu0 0.0
    %2343 = vmatpush1.msra.mxu0 0.0
    %2344 = vmatprep.subr.mxu0 0.0
    %2345 = vmatpush1.msra.mxu0 0.0
    %2346 = vmatprep.subr.mxu0 0.0
    %2347 = vmatpush1.msra.mxu0 0.0
    %2348 = vmatprep.subr.mxu0 0.0
    %2349 = vmatpush1.msra.mxu0 0.0
    %2350 = vmatprep.subr.mxu0 0.0
    %2351 = vmatpush1.msra.mxu0 0.0
    %2352 = vmatprep.subr.mxu0 0.0
    %2353 = vmatpush1.msra.mxu0 0.0
    %2354 = vmatprep.subr.mxu0 0.0
    %2355 = vmatpush1.msra.mxu0 0.0
    %2356 = vmatprep.subr.mxu0 0.0
    %2357 = vmatpush1.msra.mxu0 0.0
    %2358 = vmatprep.subr.mxu0 0.0
    %2359 = vmatpush1.msra.mxu0 0.0
    %2360 = vmatprep.subr.mxu0 0.0
    %2361 = vmatpush1.msra.mxu0 0.0
    %2362 = vmatprep.subr.mxu0 0.0
    %2363 = vmatpush1.msra.mxu0 0.0
    %2364 = vmatprep.subr.mxu0 0.0
    %2365 = vmatpush1.msra.mxu0 0.0
    %2366 = vmatprep.mubr.f32.mxu0 0.0
    %2367 = vmatmul.mubr.f32.gmra.mrb[0].mxu0 %v2300
    %v2368 = vpop.f32.mrb[0].mxu0
    %v2369 = vadd.f32 %v2294, %v2368
    %v2370 = vpop.f32.mrb[0].mxu0
    %2371 = vdwg.mxu0
    %v2372 = vadd.f32 %v2369, %v362
    %v2373 = vmul.f32 %v2372, %v369
    %v2376 = vunpack.c.l.s4 1966171168
    %v2377 = vunpack.c.0.s8 %v2376
    %v2378 = vlaneseq
    %v2379 = vshrl.u32 %v2378, 7
    %v2380 = vsub.s32 %v2377, %v2379
    %v2381 = vrot.slane %v2373, %v2380
    %v2382 = vcombine.high %v2381, %v2381
    %v2384 = vunpack.c.l.s4 1966171168
    %v2385 = vunpack.c.0.s8 %v2384
    %v2386 = vlaneseq
    %v2387 = vshrl.u32 %v2386, 7
    %v2388 = vsub.s32 %v2385, %v2387
    %v2389 = vrot.slane %v2381, %v2388
    %v2391 = vunpack.c.l.s4 1966171168
    %v2392 = vunpack.c.0.s8 %v2391
    %v2393 = vlaneseq
    %v2394 = vshrl.u32 %v2393, 7
    %v2395 = vsub.s32 %v2392, %v2394
    %v2396 = vrot.slane %v2382, %v2395
    %v2397 = vlaneseq
    %v2398 = vshrl.u32 %v2397, 7
    %v2399 = vsub.s32 0, %v2398
    %v2400 = vrot.slane %v2389, %v2399
    %v2401 = vlaneseq
    %v2402 = vshrl.u32 %v2401, 7
    %v2403 = vsub.s32 0, %v2402
    %v2404 = vrot.slane %v2396, %v2403
    %v2407 = vmul.f32 %v79, %v2400
    %v2408 = vmul.f32 %v80, %v2404
    %v2409 = vsel %vm211, %v2407, 0.0
    %2410 = vadd.xlane.f32.xlu0 %v2409
    %v2411 = vpop.xlane.xlu0 %2410
    %v2412 = vsel %vm211, %v2408, 0.0
    %2413 = vadd.xlane.f32.xlu0 %v2412
    %v2414 = vpop.xlane.xlu0 %2413
    %v2415 = vadd.f32 %v2411, %v420
    %v2416 = vadd.f32 %v2414, %v420
    %v2419 = vlaneseq
    %v2420 = vshrl.u32 %v2419, 7
    %v2421 = vsub.s32 %v427, %v2420
    %v2422 = vrot.slane %v2415, %v2421
    %v2423 = vlaneseq
    %v2424 = vshrl.u32 %v2423, 7
    %v2425 = vsub.s32 %v427, %v2424
    %v2426 = vrot.slane %v2416, %v2425
    %v2427 = vsel %vm436, %v2426, %v2422
    %v2429 = vsel %vm439, %v2427, -inf
    %2430 = vmax.xlane.f32.xlu0 %v2429
    %v2431 = vpop.xlane.xlu0 %2430
    %v2433 = vlaneseq
    %v2434 = vshrl.u32 %v2433, 7
    %v2435 = vsub.s32 0, %v2434
    %v2436 = vrot.slane %v2431, %v2435
    %v2437 = vlaneseq
    %v2438 = vshrl.u32 %v2437, 7
    %v2439 = vsub.s32 1, %v2438
    %v2440 = vrot.slane %v2431, %v2439
    %v2443 = vsub.f32 %v2415, %v2436
    %v2444 = vsub.f32 %v2416, %v2440
    %v2445 = vmul.f32 %v2443, 1.442695
    %v2446 = vpow.pop %v2445
    %v2447 = vmul.f32 %v2444, 1.442695
    %v2448 = vpow.pop %v2447
    %2451 = vset.pattern.permute.xlu0 0
    %2452 = vperm.xlu0 %2451, %v2446
    %v2453 = vpop.permute.xlu0 %2452
    %2454 = vset.pattern.permute.xlu0 0
    %2455 = vperm.xlu0 %2454, %v2448
    %v2456 = vpop.permute.xlu0 %2455
    %v2457 = vlaneseq
    %v2458 = vshrl.u32 %v2457, 7
    %v2459 = vsub.s32 %v427, %v2458
    %v2460 = vrot.slane %v2453, %v2459
    %v2461 = vlaneseq
    %v2462 = vshrl.u32 %v2461, 7
    %v2463 = vsub.s32 %v427, %v2462
    %v2464 = vrot.slane %v2456, %v2463
    %v2465 = vsel %vm436, %v2464, %v2460
    %v2467 = vsel %vm439, %v2465, 0.0
    %2468 = vadd.xlane.f32.xlu0 %v2467
    %v2469 = vpop.xlane.xlu0 %2468
    %v2470 = vrcp.pop %v2469
    %v2472 = vlaneseq
    %v2473 = vshrl.u32 %v2472, 7
    %v2474 = vsub.s32 0, %v2473
    %v2475 = vrot.slane %v2470, %v2474
    %v2476 = vlaneseq
    %v2477 = vshrl.u32 %v2476, 7
    %v2478 = vsub.s32 1, %v2477
    %v2479 = vrot.slane %v2470, %v2478
    %v2482 = vmul.f32 %v2446, %v2475
    %v2483 = vmul.f32 %v2448, %v2479
    %2485 = vset.pattern.permute.xlu0 0
    %2486 = vperm.xlu0 %2485, %v2482
    %v2487 = vpop.permute.xlu0 %2486
    %2490 = vset.pattern.permute.xlu0 0
    %2491 = vperm.xlu0 %2490, %v2483
    %v2492 = vpop.permute.xlu0 %2491
    %v2494 = vmul.f32 %v2487, %v79
    %v2495 = vmul.f32 %v2492, %v80
    %v2496 = vsel %vm211, %v2494, 0.0
    %v2497 = vrot.slane %v2496, 4
    %v2498 = vadd.f32 %v2496, %v2497
    %v2499 = vrot.slane %v2498, 2
    %v2500 = vadd.f32 %v2498, %v2499
    %v2501 = vrot.slane %v2500, 1
    %v2502 = vadd.f32 %v2500, %v2501
    %v2503 = vsel %vm211, %v2495, 0.0
    %v2504 = vrot.slane %v2503, 4
    %v2505 = vadd.f32 %v2503, %v2504
    %v2506 = vrot.slane %v2505, 2
    %v2507 = vadd.f32 %v2505, %v2506
    %v2508 = vrot.slane %v2507, 1
    %v2509 = vadd.f32 %v2507, %v2508
    %v2511 = vsel %vm211, %v2136, 0
    %2513 = vmatprep.subr.mxu0 0.0
    %2514 = vmatpush1.msra.mxu0 %v97
    %2515 = vmatprep.subr.mxu0 0.0
    %2516 = vmatpush1.msra.mxu0 %v98
    %2517 = vmatprep.subr.mxu0 0.0
    %2518 = vmatpush1.msra.mxu0 %v99
    %2519 = vmatprep.subr.mxu0 0.0
    %2520 = vmatpush1.msra.mxu0 %v100
    %2521 = vmatprep.subr.mxu0 0.0
    %2522 = vmatpush1.msra.mxu0 0.0
    %2523 = vmatprep.subr.mxu0 0.0
    %2524 = vmatpush1.msra.mxu0 0.0
    %2525 = vmatprep.subr.mxu0 0.0
    %2526 = vmatpush1.msra.mxu0 0.0
    %2527 = vmatprep.subr.mxu0 0.0
    %2528 = vmatpush1.msra.mxu0 0.0
    %2529 = vmatprep.subr.mxu0 0.0
    %2530 = vmatpush1.msra.mxu0 0.0
    %2531 = vmatprep.subr.mxu0 0.0
    %2532 = vmatpush1.msra.mxu0 0.0
    %2533 = vmatprep.subr.mxu0 0.0
    %2534 = vmatpush1.msra.mxu0 0.0
    %2535 = vmatprep.subr.mxu0 0.0
    %2536 = vmatpush1.msra.mxu0 0.0
    %2537 = vmatprep.subr.mxu0 0.0
    %2538 = vmatpush1.msra.mxu0 0.0
    %2539 = vmatprep.subr.mxu0 0.0
    %2540 = vmatpush1.msra.mxu0 0.0
    %2541 = vmatprep.subr.mxu0 0.0
    %2542 = vmatpush1.msra.mxu0 0.0
    %2543 = vmatprep.subr.mxu0 0.0
    %2544 = vmatpush1.msra.mxu0 0.0
    %2545 = vmatprep.subr.mxu0 0.0
    %2546 = vmatpush1.msra.mxu0 0.0
    %2547 = vmatprep.subr.mxu0 0.0
    %2548 = vmatpush1.msra.mxu0 0.0
    %2549 = vmatprep.subr.mxu0 0.0
    %2550 = vmatpush1.msra.mxu0 0.0
    %2551 = vmatprep.subr.mxu0 0.0
    %2552 = vmatpush1.msra.mxu0 0.0
    %2553 = vmatprep.subr.mxu0 0.0
    %2554 = vmatpush1.msra.mxu0 0.0
    %2555 = vmatprep.subr.mxu0 0.0
    %2556 = vmatpush1.msra.mxu0 0.0
    %2557 = vmatprep.subr.mxu0 0.0
    %2558 = vmatpush1.msra.mxu0 0.0
    %2559 = vmatprep.subr.mxu0 0.0
    %2560 = vmatpush1.msra.mxu0 0.0
    %2561 = vmatprep.subr.mxu0 0.0
    %2562 = vmatpush1.msra.mxu0 0.0
    %2563 = vmatprep.subr.mxu0 0.0
    %2564 = vmatpush1.msra.mxu0 0.0
    %2565 = vmatprep.subr.mxu0 0.0
    %2566 = vmatpush1.msra.mxu0 0.0
    %2567 = vmatprep.subr.mxu0 0.0
    %2568 = vmatpush1.msra.mxu0 0.0
    %2569 = vmatprep.subr.mxu0 0.0
    %2570 = vmatpush1.msra.mxu0 0.0
    %2571 = vmatprep.subr.mxu0 0.0
    %2572 = vmatpush1.msra.mxu0 0.0
    %2573 = vmatprep.subr.mxu0 0.0
    %2574 = vmatpush1.msra.mxu0 0.0
    %2575 = vmatprep.subr.mxu0 0.0
    %2576 = vmatpush1.msra.mxu0 0.0
    %2577 = vmatprep.mubr.f32.mxu0 0.0
    %2578 = vmatmul.mubr.f32.gmra.mrb[0].mxu0 %v2511
    %v2579 = vpop.f32.mrb[0].mxu0
    %v2580 = vadd.f32 %v525, %v2579
    %v2581 = vpop.f32.mrb[0].mxu0
    %2582 = vdwg.mxu0
    %v2583 = vmul.f32 %v2502, %v601
    %v2584 = vmul.f32 %v2509, %v601
    %v2587 = vrot.slane %v2584, 7
    %v2588 = vsel %vm436, %v2587, %v2583
    %v2589 = vsel %vm211, %v2588, 0
    %2591 = vmatprep.subr.mxu0 0.0
    %2592 = vmatpush1.msra.mxu0 %v102
    %2593 = vmatprep.subr.mxu0 0.0
    %2594 = vmatpush1.msra.mxu0 %v103
    %2595 = vmatprep.subr.mxu0 0.0
    %2596 = vmatpush1.msra.mxu0 %v104
    %2597 = vmatprep.subr.mxu0 0.0
    %2598 = vmatpush1.msra.mxu0 %v105
    %2599 = vmatprep.subr.mxu0 0.0
    %2600 = vmatpush1.msra.mxu0 0.0
    %2601 = vmatprep.subr.mxu0 0.0
    %2602 = vmatpush1.msra.mxu0 0.0
    %2603 = vmatprep.subr.mxu0 0.0
    %2604 = vmatpush1.msra.mxu0 0.0
    %2605 = vmatprep.subr.mxu0 0.0
    %2606 = vmatpush1.msra.mxu0 0.0
    %2607 = vmatprep.subr.mxu0 0.0
    %2608 = vmatpush1.msra.mxu0 0.0
    %2609 = vmatprep.subr.mxu0 0.0
    %2610 = vmatpush1.msra.mxu0 0.0
    %2611 = vmatprep.subr.mxu0 0.0
    %2612 = vmatpush1.msra.mxu0 0.0
    %2613 = vmatprep.subr.mxu0 0.0
    %2614 = vmatpush1.msra.mxu0 0.0
    %2615 = vmatprep.subr.mxu0 0.0
    %2616 = vmatpush1.msra.mxu0 0.0
    %2617 = vmatprep.subr.mxu0 0.0
    %2618 = vmatpush1.msra.mxu0 0.0
    %2619 = vmatprep.subr.mxu0 0.0
    %2620 = vmatpush1.msra.mxu0 0.0
    %2621 = vmatprep.subr.mxu0 0.0
    %2622 = vmatpush1.msra.mxu0 0.0
    %2623 = vmatprep.subr.mxu0 0.0
    %2624 = vmatpush1.msra.mxu0 0.0
    %2625 = vmatprep.subr.mxu0 0.0
    %2626 = vmatpush1.msra.mxu0 0.0
    %2627 = vmatprep.subr.mxu0 0.0
    %2628 = vmatpush1.msra.mxu0 0.0
    %2629 = vmatprep.subr.mxu0 0.0
    %2630 = vmatpush1.msra.mxu0 0.0
    %2631 = vmatprep.subr.mxu0 0.0
    %2632 = vmatpush1.msra.mxu0 0.0
    %2633 = vmatprep.subr.mxu0 0.0
    %2634 = vmatpush1.msra.mxu0 0.0
    %2635 = vmatprep.subr.mxu0 0.0
    %2636 = vmatpush1.msra.mxu0 0.0
    %2637 = vmatprep.subr.mxu0 0.0
    %2638 = vmatpush1.msra.mxu0 0.0
    %2639 = vmatprep.subr.mxu0 0.0
    %2640 = vmatpush1.msra.mxu0 0.0
    %2641 = vmatprep.subr.mxu0 0.0
    %2642 = vmatpush1.msra.mxu0 0.0
    %2643 = vmatprep.subr.mxu0 0.0
    %2644 = vmatpush1.msra.mxu0 0.0
    %2645 = vmatprep.subr.mxu0 0.0
    %2646 = vmatpush1.msra.mxu0 0.0
    %2647 = vmatprep.subr.mxu0 0.0
    %2648 = vmatpush1.msra.mxu0 0.0
    %2649 = vmatprep.subr.mxu0 0.0
    %2650 = vmatpush1.msra.mxu0 0.0
    %2651 = vmatprep.subr.mxu0 0.0
    %2652 = vmatpush1.msra.mxu0 0.0
    %2653 = vmatprep.subr.mxu0 0.0
    %2654 = vmatpush1.msra.mxu0 0.0
    %2655 = vmatprep.mubr.f32.mxu0 0.0
    %2656 = vmatmul.mubr.f32.gmra.mrb[0].mxu0 %v2589
    %v2657 = vpop.f32.mrb[0].mxu0
    %v2658 = vadd.f32 0.0, %v2657
    %v2659 = vpop.f32.mrb[0].mxu0
    %2660 = vdwg.mxu0
    %2661 = vmatprep.subr.mxu0 0.0
    %2662 = vmatpush1.msra.mxu0 %v106
    %2663 = vmatprep.subr.mxu0 0.0
    %2664 = vmatpush1.msra.mxu0 %v107
    %2665 = vmatprep.subr.mxu0 0.0
    %2666 = vmatpush1.msra.mxu0 %v108
    %2667 = vmatprep.subr.mxu0 0.0
    %2668 = vmatpush1.msra.mxu0 %v109
    %2669 = vmatprep.subr.mxu0 0.0
    %2670 = vmatpush1.msra.mxu0 0.0
    %2671 = vmatprep.subr.mxu0 0.0
    %2672 = vmatpush1.msra.mxu0 0.0
    %2673 = vmatprep.subr.mxu0 0.0
    %2674 = vmatpush1.msra.mxu0 0.0
    %2675 = vmatprep.subr.mxu0 0.0
    %2676 = vmatpush1.msra.mxu0 0.0
    %2677 = vmatprep.subr.mxu0 0.0
    %2678 = vmatpush1.msra.mxu0 0.0
    %2679 = vmatprep.subr.mxu0 0.0
    %2680 = vmatpush1.msra.mxu0 0.0
    %2681 = vmatprep.subr.mxu0 0.0
    %2682 = vmatpush1.msra.mxu0 0.0
    %2683 = vmatprep.subr.mxu0 0.0
    %2684 = vmatpush1.msra.mxu0 0.0
    %2685 = vmatprep.subr.mxu0 0.0
    %2686 = vmatpush1.msra.mxu0 0.0
    %2687 = vmatprep.subr.mxu0 0.0
    %2688 = vmatpush1.msra.mxu0 0.0
    %2689 = vmatprep.subr.mxu0 0.0
    %2690 = vmatpush1.msra.mxu0 0.0
    %2691 = vmatprep.subr.mxu0 0.0
    %2692 = vmatpush1.msra.mxu0 0.0
    %2693 = vmatprep.subr.mxu0 0.0
    %2694 = vmatpush1.msra.mxu0 0.0
    %2695 = vmatprep.subr.mxu0 0.0
    %2696 = vmatpush1.msra.mxu0 0.0
    %2697 = vmatprep.subr.mxu0 0.0
    %2698 = vmatpush1.msra.mxu0 0.0
    %2699 = vmatprep.subr.mxu0 0.0
    %2700 = vmatpush1.msra.mxu0 0.0
    %2701 = vmatprep.subr.mxu0 0.0
    %2702 = vmatpush1.msra.mxu0 0.0
    %2703 = vmatprep.subr.mxu0 0.0
    %2704 = vmatpush1.msra.mxu0 0.0
    %2705 = vmatprep.subr.mxu0 0.0
    %2706 = vmatpush1.msra.mxu0 0.0
    %2707 = vmatprep.subr.mxu0 0.0
    %2708 = vmatpush1.msra.mxu0 0.0
    %2709 = vmatprep.subr.mxu0 0.0
    %2710 = vmatpush1.msra.mxu0 0.0
    %2711 = vmatprep.subr.mxu0 0.0
    %2712 = vmatpush1.msra.mxu0 0.0
    %2713 = vmatprep.subr.mxu0 0.0
    %2714 = vmatpush1.msra.mxu0 0.0
    %2715 = vmatprep.subr.mxu0 0.0
    %2716 = vmatpush1.msra.mxu0 0.0
    %2717 = vmatprep.subr.mxu0 0.0
    %2718 = vmatpush1.msra.mxu0 0.0
    %2719 = vmatprep.subr.mxu0 0.0
    %2720 = vmatpush1.msra.mxu0 0.0
    %2721 = vmatprep.subr.mxu0 0.0
    %2722 = vmatpush1.msra.mxu0 0.0
    %2723 = vmatprep.subr.mxu0 0.0
    %2724 = vmatpush1.msra.mxu0 0.0
    %2725 = vmatprep.mubr.f32.mxu0 0.0
    %2726 = vmatmul.mubr.f32.gmra.mrb[0].mxu0 %v2589
    %v2727 = vpop.f32.mrb[0].mxu0
    %v2728 = vadd.f32 0.0, %v2727
    %v2729 = vpop.f32.mrb[0].mxu0
    %2730 = vdwg.mxu0
    %v2731 = vmul.f32 %v2580, %v2658
    %v2732 = vadd.f32 %v2731, %v2728
    %v2733 = vmul.f32 %v2583, %v757
    %v2734 = vmul.f32 %v2584, %v757
    %v2737 = vrot.slane %v2734, 7
    %v2738 = vsel %vm436, %v2737, %v2733
    %v2740 = vsel %vm766, %v2738, 0.0
    %2741 = vadd.xlane.f32.xlu0 %v2740
    %v2742 = vpop.xlane.xlu0 %2741
    %v2743 = vadd.f32 %v2742, %v774
    %v2746 = vunpack.c.l.s4 1966171168
    %v2747 = vunpack.c.0.s8 %v2746
    %v2748 = vlaneseq
    %v2749 = vshrl.u32 %v2748, 7
    %v2750 = vsub.s32 %v2747, %v2749
    %v2751 = vrot.slane %v2732, %v2750
    %v2752 = vcombine.high %v2751, %v2751
    %v2754 = vunpack.c.l.s4 1966171168
    %v2755 = vunpack.c.0.s8 %v2754
    %v2756 = vlaneseq
    %v2757 = vshrl.u32 %v2756, 7
    %v2758 = vsub.s32 %v2755, %v2757
    %v2759 = vrot.slane %v2751, %v2758
    %v2761 = vunpack.c.l.s4 1966171168
    %v2762 = vunpack.c.0.s8 %v2761
    %v2763 = vlaneseq
    %v2764 = vshrl.u32 %v2763, 7
    %v2765 = vsub.s32 %v2762, %v2764
    %v2766 = vrot.slane %v2752, %v2765
    %v2767 = vlaneseq
    %v2768 = vshrl.u32 %v2767, 7
    %v2769 = vsub.s32 0, %v2768
    %v2770 = vrot.slane %v2759, %v2769
    %v2771 = vlaneseq
    %v2772 = vshrl.u32 %v2771, 7
    %v2773 = vsub.s32 0, %v2772
    %v2774 = vrot.slane %v2766, %v2773
    %v2777 = vmul.f32 %v82, %v2770
    %v2778 = vmul.f32 %v83, %v2770
    %v2779 = vmul.f32 %v84, %v2774
    %v2780 = vmul.f32 %v85, %v2774
    %v2781 = vsel %vm211, %v2777, 0.0
    %2782 = vadd.xlane.f32.xlu0 %v2781
    %v2783 = vpop.xlane.xlu0 %2782
    %v2784 = vsel %vm211, %v2778, 0.0
    %2785 = vadd.xlane.f32.xlu0 %v2784
    %v2786 = vpop.xlane.xlu0 %2785
    %v2787 = vsel %vm211, %v2779, 0.0
    %2788 = vadd.xlane.f32.xlu0 %v2787
    %v2789 = vpop.xlane.xlu0 %2788
    %v2790 = vsel %vm211, %v2780, 0.0
    %2791 = vadd.xlane.f32.xlu0 %v2790
    %v2792 = vpop.xlane.xlu0 %2791
    %2794 = vset.pattern.permute.xlu0 0
    %2795 = vperm.xlu0 %2794, %v2743
    %v2796 = vpop.permute.xlu0 %2795
    %v2797 = vlaneseq
    %v2798 = vshrl.u32 %v2797, 7
    %v2799 = vsub.s32 0, %v2798
    %v2800 = vrot.slane %v2796, %v2799
    %v2801 = vlaneseq
    %v2802 = vshrl.u32 %v2801, 7
    %v2803 = vsub.s32 1, %v2802
    %v2804 = vrot.slane %v2796, %v2803
    %v2807 = vadd.f32 %v2783, %v2800
    %v2808 = vadd.f32 %v2786, %v2800
    %v2809 = vadd.f32 %v2789, %v2804
    %v2810 = vadd.f32 %v2792, %v2804
    %2815 = vset.pattern.permute.xlu0 0
    %2816 = vperm.xlu0 %2815, %v2807
    %v2817 = vpop.permute.xlu0 %2816
    %2818 = vset.pattern.permute.xlu0 0
    %2819 = vperm.xlu0 %2818, %v2808
    %v2820 = vpop.permute.xlu0 %2819
    %2821 = vset.pattern.permute.xlu0 0
    %2822 = vperm.xlu0 %2821, %v2809
    %v2823 = vpop.permute.xlu0 %2822
    %2824 = vset.pattern.permute.xlu0 0
    %2825 = vperm.xlu0 %2824, %v2810
    %v2826 = vpop.permute.xlu0 %2825
    %v2827 = vlaneseq
    %v2828 = vshrl.u32 %v2827, 7
    %v2829 = vsub.s32 %v427, %v2828
    %v2830 = vrot.slane %v2817, %v2829
    %v2831 = vlaneseq
    %v2832 = vshrl.u32 %v2831, 7
    %v2833 = vsub.s32 %v864, %v2832
    %v2834 = vrot.slane %v2820, %v2833
    %v2835 = vsel %vm869, %v2834, %v2830
    %v2836 = vlaneseq
    %v2837 = vshrl.u32 %v2836, 7
    %v2838 = vsub.s32 %v427, %v2837
    %v2839 = vrot.slane %v2823, %v2838
    %v2840 = vlaneseq
    %v2841 = vshrl.u32 %v2840, 7
    %v2842 = vsub.s32 %v864, %v2841
    %v2843 = vrot.slane %v2826, %v2842
    %v2844 = vsel %vm869, %v2843, %v2839
    %v2845 = vsel %vm436, %v2844, %v2835
    %v2847 = vsel %vm882, %v2845, -inf
    %2848 = vmax.xlane.f32.xlu0 %v2847
    %v2849 = vpop.xlane.xlu0 %2848
    %v2851 = vlaneseq
    %v2852 = vshrl.u32 %v2851, 7
    %v2853 = vsub.s32 0, %v2852
    %v2854 = vrot.slane %v2849, %v2853
    %v2855 = vlaneseq
    %v2856 = vshrl.u32 %v2855, 7
    %v2857 = vsub.s32 1, %v2856
    %v2858 = vrot.slane %v2849, %v2857
    %v2861 = vsub.f32 %v2807, %v2854
    %v2862 = vsub.f32 %v2808, %v2854
    %v2863 = vsub.f32 %v2809, %v2858
    %v2864 = vsub.f32 %v2810, %v2858
    %v2865 = vmul.f32 %v2861, 1.442695
    %v2866 = vpow.pop %v2865
    %v2867 = vmul.f32 %v2862, 1.442695
    %v2868 = vpow.pop %v2867
    %v2869 = vmul.f32 %v2863, 1.442695
    %v2870 = vpow.pop %v2869
    %v2871 = vmul.f32 %v2864, 1.442695
    %v2872 = vpow.pop %v2871
    %2877 = vset.pattern.permute.xlu0 0
    %2878 = vperm.xlu0 %2877, %v2866
    %v2879 = vpop.permute.xlu0 %2878
    %2880 = vset.pattern.permute.xlu0 0
    %2881 = vperm.xlu0 %2880, %v2868
    %v2882 = vpop.permute.xlu0 %2881
    %2883 = vset.pattern.permute.xlu0 0
    %2884 = vperm.xlu0 %2883, %v2870
    %v2885 = vpop.permute.xlu0 %2884
    %2886 = vset.pattern.permute.xlu0 0
    %2887 = vperm.xlu0 %2886, %v2872
    %v2888 = vpop.permute.xlu0 %2887
    %v2889 = vlaneseq
    %v2890 = vshrl.u32 %v2889, 7
    %v2891 = vsub.s32 %v427, %v2890
    %v2892 = vrot.slane %v2879, %v2891
    %v2893 = vlaneseq
    %v2894 = vshrl.u32 %v2893, 7
    %v2895 = vsub.s32 %v864, %v2894
    %v2896 = vrot.slane %v2882, %v2895
    %v2897 = vsel %vm869, %v2896, %v2892
    %v2898 = vlaneseq
    %v2899 = vshrl.u32 %v2898, 7
    %v2900 = vsub.s32 %v427, %v2899
    %v2901 = vrot.slane %v2885, %v2900
    %v2902 = vlaneseq
    %v2903 = vshrl.u32 %v2902, 7
    %v2904 = vsub.s32 %v864, %v2903
    %v2905 = vrot.slane %v2888, %v2904
    %v2906 = vsel %vm869, %v2905, %v2901
    %v2907 = vsel %vm436, %v2906, %v2897
    %v2909 = vsel %vm882, %v2907, 0.0
    %2910 = vadd.xlane.f32.xlu0 %v2909
    %v2911 = vpop.xlane.xlu0 %2910
    %v2912 = vrcp.pop %v2911
    %v2914 = vlaneseq
    %v2915 = vshrl.u32 %v2914, 7
    %v2916 = vsub.s32 0, %v2915
    %v2917 = vrot.slane %v2912, %v2916
    %v2918 = vlaneseq
    %v2919 = vshrl.u32 %v2918, 7
    %v2920 = vsub.s32 1, %v2919
    %v2921 = vrot.slane %v2912, %v2920
    %v2924 = vmul.f32 %v2866, %v2917
    %v2925 = vmul.f32 %v2868, %v2917
    %v2926 = vmul.f32 %v2870, %v2921
    %v2927 = vmul.f32 %v2872, %v2921
    %2929 = vset.pattern.permute.xlu0 0
    %2930 = vperm.xlu0 %2929, %v2924
    %v2931 = vpop.permute.xlu0 %2930
    %2934 = vset.pattern.permute.xlu0 0
    %2935 = vperm.xlu0 %2934, %v2925
    %v2936 = vpop.permute.xlu0 %2935
    %2939 = vset.pattern.permute.xlu0 0
    %2940 = vperm.xlu0 %2939, %v2926
    %v2941 = vpop.permute.xlu0 %2940
    %2944 = vset.pattern.permute.xlu0 0
    %2945 = vperm.xlu0 %2944, %v2927
    %v2946 = vpop.permute.xlu0 %2945
    %v2948 = vmul.f32 %v2931, %v82
    %v2949 = vmul.f32 %v2936, %v83
    %v2950 = vmul.f32 %v2941, %v84
    %v2951 = vmul.f32 %v2946, %v85
    %v2952 = vsel %vm211, %v2948, 0.0
    %v2953 = vsel %vm211, %v2949, 0.0
    %v2954 = vadd.f32 %v2952, %v2953
    %v2955 = vrot.slane %v2954, 4
    %v2956 = vadd.f32 %v2954, %v2955
    %v2957 = vrot.slane %v2956, 2
    %v2958 = vadd.f32 %v2956, %v2957
    %v2959 = vrot.slane %v2958, 1
    %v2960 = vadd.f32 %v2958, %v2959
    %v2961 = vsel %vm211, %v2950, 0.0
    %v2962 = vsel %vm211, %v2951, 0.0
    %v2963 = vadd.f32 %v2961, %v2962
    %v2964 = vrot.slane %v2963, 4
    %v2965 = vadd.f32 %v2963, %v2964
    %v2966 = vrot.slane %v2965, 2
    %v2967 = vadd.f32 %v2965, %v2966
    %v2968 = vrot.slane %v2967, 1
    %v2969 = vadd.f32 %v2967, %v2968
    %2970 = vmatprep.subr.mxu0 0.0
    %2971 = vmatpush1.msra.mxu0 %v117
    %2972 = vmatprep.subr.mxu0 0.0
    %2973 = vmatpush1.msra.mxu0 %v118
    %2974 = vmatprep.subr.mxu0 0.0
    %2975 = vmatpush1.msra.mxu0 %v119
    %2976 = vmatprep.subr.mxu0 0.0
    %2977 = vmatpush1.msra.mxu0 %v120
    %2978 = vmatprep.subr.mxu0 0.0
    %2979 = vmatpush1.msra.mxu0 0.0
    %2980 = vmatprep.subr.mxu0 0.0
    %2981 = vmatpush1.msra.mxu0 0.0
    %2982 = vmatprep.subr.mxu0 0.0
    %2983 = vmatpush1.msra.mxu0 0.0
    %2984 = vmatprep.subr.mxu0 0.0
    %2985 = vmatpush1.msra.mxu0 0.0
    %2986 = vmatprep.subr.mxu0 0.0
    %2987 = vmatpush1.msra.mxu0 0.0
    %2988 = vmatprep.subr.mxu0 0.0
    %2989 = vmatpush1.msra.mxu0 0.0
    %2990 = vmatprep.subr.mxu0 0.0
    %2991 = vmatpush1.msra.mxu0 0.0
    %2992 = vmatprep.subr.mxu0 0.0
    %2993 = vmatpush1.msra.mxu0 0.0
    %2994 = vmatprep.subr.mxu0 0.0
    %2995 = vmatpush1.msra.mxu0 0.0
    %2996 = vmatprep.subr.mxu0 0.0
    %2997 = vmatpush1.msra.mxu0 0.0
    %2998 = vmatprep.subr.mxu0 0.0
    %2999 = vmatpush1.msra.mxu0 0.0
    %3000 = vmatprep.subr.mxu0 0.0
    %3001 = vmatpush1.msra.mxu0 0.0
    %3002 = vmatprep.subr.mxu0 0.0
    %3003 = vmatpush1.msra.mxu0 0.0
    %3004 = vmatprep.subr.mxu0 0.0
    %3005 = vmatpush1.msra.mxu0 0.0
    %3006 = vmatprep.subr.mxu0 0.0
    %3007 = vmatpush1.msra.mxu0 0.0
    %3008 = vmatprep.subr.mxu0 0.0
    %3009 = vmatpush1.msra.mxu0 0.0
    %3010 = vmatprep.subr.mxu0 0.0
    %3011 = vmatpush1.msra.mxu0 0.0
    %3012 = vmatprep.subr.mxu0 0.0
    %3013 = vmatpush1.msra.mxu0 0.0
    %3014 = vmatprep.subr.mxu0 0.0
    %3015 = vmatpush1.msra.mxu0 0.0
    %3016 = vmatprep.subr.mxu0 0.0
    %3017 = vmatpush1.msra.mxu0 0.0
    %3018 = vmatprep.subr.mxu0 0.0
    %3019 = vmatpush1.msra.mxu0 0.0
    %3020 = vmatprep.subr.mxu0 0.0
    %3021 = vmatpush1.msra.mxu0 0.0
    %3022 = vmatprep.subr.mxu0 0.0
    %3023 = vmatpush1.msra.mxu0 0.0
    %3024 = vmatprep.subr.mxu0 0.0
    %3025 = vmatpush1.msra.mxu0 0.0
    %3026 = vmatprep.subr.mxu0 0.0
    %3027 = vmatpush1.msra.mxu0 0.0
    %3028 = vmatprep.subr.mxu0 0.0
    %3029 = vmatpush1.msra.mxu0 0.0
    %3030 = vmatprep.subr.mxu0 0.0
    %3031 = vmatpush1.msra.mxu0 0.0
    %3032 = vmatprep.subr.mxu0 0.0
    %3033 = vmatpush1.msra.mxu0 0.0
    %3034 = vmatprep.mubr.f32.mxu0 0.0
    %3035 = vmatmul.mubr.f32.gmra.mrb[0].mxu0 %v2511
    %v3036 = vpop.f32.mrb[0].mxu0
    %v3037 = vadd.f32 0.0, %v3036
    %v3038 = vpop.f32.mrb[0].mxu0
    %3039 = vdwg.mxu0
    %v3042 = vsel %vm436, %v2969, %v2960
    %v3043 = vsel %vm211, %v3042, 0
    %3045 = vmatprep.subr.mxu0 0.0
    %3046 = vmatpush1.msra.mxu0 %v113
    %3047 = vmatprep.subr.mxu0 0.0
    %3048 = vmatpush1.msra.mxu0 %v114
    %3049 = vmatprep.subr.mxu0 0.0
    %3050 = vmatpush1.msra.mxu0 %v115
    %3051 = vmatprep.subr.mxu0 0.0
    %3052 = vmatpush1.msra.mxu0 %v116
    %3053 = vmatprep.subr.mxu0 0.0
    %3054 = vmatpush1.msra.mxu0 0.0
    %3055 = vmatprep.subr.mxu0 0.0
    %3056 = vmatpush1.msra.mxu0 0.0
    %3057 = vmatprep.subr.mxu0 0.0
    %3058 = vmatpush1.msra.mxu0 0.0
    %3059 = vmatprep.subr.mxu0 0.0
    %3060 = vmatpush1.msra.mxu0 0.0
    %3061 = vmatprep.subr.mxu0 0.0
    %3062 = vmatpush1.msra.mxu0 0.0
    %3063 = vmatprep.subr.mxu0 0.0
    %3064 = vmatpush1.msra.mxu0 0.0
    %3065 = vmatprep.subr.mxu0 0.0
    %3066 = vmatpush1.msra.mxu0 0.0
    %3067 = vmatprep.subr.mxu0 0.0
    %3068 = vmatpush1.msra.mxu0 0.0
    %3069 = vmatprep.subr.mxu0 0.0
    %3070 = vmatpush1.msra.mxu0 0.0
    %3071 = vmatprep.subr.mxu0 0.0
    %3072 = vmatpush1.msra.mxu0 0.0
    %3073 = vmatprep.subr.mxu0 0.0
    %3074 = vmatpush1.msra.mxu0 0.0
    %3075 = vmatprep.subr.mxu0 0.0
    %3076 = vmatpush1.msra.mxu0 0.0
    %3077 = vmatprep.subr.mxu0 0.0
    %3078 = vmatpush1.msra.mxu0 0.0
    %3079 = vmatprep.subr.mxu0 0.0
    %3080 = vmatpush1.msra.mxu0 0.0
    %3081 = vmatprep.subr.mxu0 0.0
    %3082 = vmatpush1.msra.mxu0 0.0
    %3083 = vmatprep.subr.mxu0 0.0
    %3084 = vmatpush1.msra.mxu0 0.0
    %3085 = vmatprep.subr.mxu0 0.0
    %3086 = vmatpush1.msra.mxu0 0.0
    %3087 = vmatprep.subr.mxu0 0.0
    %3088 = vmatpush1.msra.mxu0 0.0
    %3089 = vmatprep.subr.mxu0 0.0
    %3090 = vmatpush1.msra.mxu0 0.0
    %3091 = vmatprep.subr.mxu0 0.0
    %3092 = vmatpush1.msra.mxu0 0.0
    %3093 = vmatprep.subr.mxu0 0.0
    %3094 = vmatpush1.msra.mxu0 0.0
    %3095 = vmatprep.subr.mxu0 0.0
    %3096 = vmatpush1.msra.mxu0 0.0
    %3097 = vmatprep.subr.mxu0 0.0
    %3098 = vmatpush1.msra.mxu0 0.0
    %3099 = vmatprep.subr.mxu0 0.0
    %3100 = vmatpush1.msra.mxu0 0.0
    %3101 = vmatprep.subr.mxu0 0.0
    %3102 = vmatpush1.msra.mxu0 0.0
    %3103 = vmatprep.subr.mxu0 0.0
    %3104 = vmatpush1.msra.mxu0 0.0
    %3105 = vmatprep.subr.mxu0 0.0
    %3106 = vmatpush1.msra.mxu0 0.0
    %3107 = vmatprep.subr.mxu0 0.0
    %3108 = vmatpush1.msra.mxu0 0.0
    %3109 = vmatprep.mubr.f32.mxu0 0.0
    %3110 = vmatmul.mubr.f32.gmra.mrb[0].mxu0 %v3043
    %v3111 = vpop.f32.mrb[0].mxu0
    %v3112 = vadd.f32 %v3037, %v3111
    %v3113 = vpop.f32.mrb[0].mxu0
    %3114 = vdwg.mxu0
    %v3115 = vadd.f32 %v3112, %v1155
    %s3116 = scalar_lea.vmem %s3, 192
    %v3117 = vld [vmem:[%s3116] sm:$0xff]
    %v3118 = vld [vmem:[%s3116 + $0x8] sm:$0xff]
    %v3119 = vld [vmem:[%s3116 + $0x10] sm:$0xff]
    %v3120 = vld [vmem:[%s3116 + $0x18] sm:$0xff]
    %v3121 = vld [vmem:[%s3116 + $0x20] sm:$0xff]
    %v3122 = vld [vmem:[%s3116 + $0x28] sm:$0xff]
    %v3123 = vld [vmem:[%s3116 + $0x30] sm:$0xff]
    %v3124 = vld [vmem:[%s3116 + $0x38] sm:$0xff]
    %s3125 = scalar_lea.vmem %s4, 3
    %v3126 = vld [vmem:[%s3125] sm:$0x1]
    %v3128 = vlaneseq
    %v3129 = vshrl.u32 %v3128, 7
    %v3130 = vsub.s32 0, %v3129
    %v3131 = vrot.slane %v3126, %v3130
    %3133 = vmatprep.subr.mxu0 0.0
    %3134 = vmatpush1.msra.mxu0 %v3117
    %3135 = vmatprep.subr.mxu0 0.0
    %3136 = vmatpush1.msra.mxu0 %v3118
    %3137 = vmatprep.subr.mxu0 0.0
    %3138 = vmatpush1.msra.mxu0 %v3119
    %3139 = vmatprep.subr.mxu0 0.0
    %3140 = vmatpush1.msra.mxu0 %v3120
    %3141 = vmatprep.subr.mxu0 0.0
    %3142 = vmatpush1.msra.mxu0 %v3121
    %3143 = vmatprep.subr.mxu0 0.0
    %3144 = vmatpush1.msra.mxu0 %v3122
    %3145 = vmatprep.subr.mxu0 0.0
    %3146 = vmatpush1.msra.mxu0 %v3123
    %3147 = vmatprep.subr.mxu0 0.0
    %3148 = vmatpush1.msra.mxu0 %v3124
    %3149 = vmatprep.subr.mxu0 0.0
    %3150 = vmatpush1.msra.mxu0 0.0
    %3151 = vmatprep.subr.mxu0 0.0
    %3152 = vmatpush1.msra.mxu0 0.0
    %3153 = vmatprep.subr.mxu0 0.0
    %3154 = vmatpush1.msra.mxu0 0.0
    %3155 = vmatprep.subr.mxu0 0.0
    %3156 = vmatpush1.msra.mxu0 0.0
    %3157 = vmatprep.subr.mxu0 0.0
    %3158 = vmatpush1.msra.mxu0 0.0
    %3159 = vmatprep.subr.mxu0 0.0
    %3160 = vmatpush1.msra.mxu0 0.0
    %3161 = vmatprep.subr.mxu0 0.0
    %3162 = vmatpush1.msra.mxu0 0.0
    %3163 = vmatprep.subr.mxu0 0.0
    %3164 = vmatpush1.msra.mxu0 0.0
    %3165 = vmatprep.subr.mxu0 0.0
    %3166 = vmatpush1.msra.mxu0 0.0
    %3167 = vmatprep.subr.mxu0 0.0
    %3168 = vmatpush1.msra.mxu0 0.0
    %3169 = vmatprep.subr.mxu0 0.0
    %3170 = vmatpush1.msra.mxu0 0.0
    %3171 = vmatprep.subr.mxu0 0.0
    %3172 = vmatpush1.msra.mxu0 0.0
    %3173 = vmatprep.subr.mxu0 0.0
    %3174 = vmatpush1.msra.mxu0 0.0
    %3175 = vmatprep.subr.mxu0 0.0
    %3176 = vmatpush1.msra.mxu0 0.0
    %3177 = vmatprep.subr.mxu0 0.0
    %3178 = vmatpush1.msra.mxu0 0.0
    %3179 = vmatprep.subr.mxu0 0.0
    %3180 = vmatpush1.msra.mxu0 0.0
    %3181 = vmatprep.subr.mxu0 0.0
    %3182 = vmatpush1.msra.mxu0 0.0
    %3183 = vmatprep.subr.mxu0 0.0
    %3184 = vmatpush1.msra.mxu0 0.0
    %3185 = vmatprep.subr.mxu0 0.0
    %3186 = vmatpush1.msra.mxu0 0.0
    %3187 = vmatprep.subr.mxu0 0.0
    %3188 = vmatpush1.msra.mxu0 0.0
    %3189 = vmatprep.subr.mxu0 0.0
    %3190 = vmatpush1.msra.mxu0 0.0
    %3191 = vmatprep.subr.mxu0 0.0
    %3192 = vmatpush1.msra.mxu0 0.0
    %3193 = vmatprep.subr.mxu0 0.0
    %3194 = vmatpush1.msra.mxu0 0.0
    %3195 = vmatprep.subr.mxu0 0.0
    %3196 = vmatpush1.msra.mxu0 0.0
    %3197 = vmatprep.mubr.f32.mxu0 0.0
    %3198 = vmatmul.mubr.f32.gmra.mrb[0].mxu0 %v139
    %v3199 = vpop.f32.mrb[0].mxu0
    %v3200 = vadd.f32 %v3131, %v3199
    %v3201 = vpop.f32.mrb[0].mxu0
    %3202 = vdwg.mxu0
    %v3204 = vsel %vm211, %v3200, 0
    %3206 = vmatprep.subr.mxu0 0.0
    %3207 = vmatpush1.msra.mxu0 %v90
    %3208 = vmatprep.subr.mxu0 0.0
    %3209 = vmatpush1.msra.mxu0 %v91
    %3210 = vmatprep.subr.mxu0 0.0
    %3211 = vmatpush1.msra.mxu0 %v92
    %3212 = vmatprep.subr.mxu0 0.0
    %3213 = vmatpush1.msra.mxu0 %v93
    %3214 = vmatprep.subr.mxu0 0.0
    %3215 = vmatpush1.msra.mxu0 0.0
    %3216 = vmatprep.subr.mxu0 0.0
    %3217 = vmatpush1.msra.mxu0 0.0
    %3218 = vmatprep.subr.mxu0 0.0
    %3219 = vmatpush1.msra.mxu0 0.0
    %3220 = vmatprep.subr.mxu0 0.0
    %3221 = vmatpush1.msra.mxu0 0.0
    %3222 = vmatprep.subr.mxu0 0.0
    %3223 = vmatpush1.msra.mxu0 0.0
    %3224 = vmatprep.subr.mxu0 0.0
    %3225 = vmatpush1.msra.mxu0 0.0
    %3226 = vmatprep.subr.mxu0 0.0
    %3227 = vmatpush1.msra.mxu0 0.0
    %3228 = vmatprep.subr.mxu0 0.0
    %3229 = vmatpush1.msra.mxu0 0.0
    %3230 = vmatprep.subr.mxu0 0.0
    %3231 = vmatpush1.msra.mxu0 0.0
    %3232 = vmatprep.subr.mxu0 0.0
    %3233 = vmatpush1.msra.mxu0 0.0
    %3234 = vmatprep.subr.mxu0 0.0
    %3235 = vmatpush1.msra.mxu0 0.0
    %3236 = vmatprep.subr.mxu0 0.0
    %3237 = vmatpush1.msra.mxu0 0.0
    %3238 = vmatprep.subr.mxu0 0.0
    %3239 = vmatpush1.msra.mxu0 0.0
    %3240 = vmatprep.subr.mxu0 0.0
    %3241 = vmatpush1.msra.mxu0 0.0
    %3242 = vmatprep.subr.mxu0 0.0
    %3243 = vmatpush1.msra.mxu0 0.0
    %3244 = vmatprep.subr.mxu0 0.0
    %3245 = vmatpush1.msra.mxu0 0.0
    %3246 = vmatprep.subr.mxu0 0.0
    %3247 = vmatpush1.msra.mxu0 0.0
    %3248 = vmatprep.subr.mxu0 0.0
    %3249 = vmatpush1.msra.mxu0 0.0
    %3250 = vmatprep.subr.mxu0 0.0
    %3251 = vmatpush1.msra.mxu0 0.0
    %3252 = vmatprep.subr.mxu0 0.0
    %3253 = vmatpush1.msra.mxu0 0.0
    %3254 = vmatprep.subr.mxu0 0.0
    %3255 = vmatpush1.msra.mxu0 0.0
    %3256 = vmatprep.subr.mxu0 0.0
    %3257 = vmatpush1.msra.mxu0 0.0
    %3258 = vmatprep.subr.mxu0 0.0
    %3259 = vmatpush1.msra.mxu0 0.0
    %3260 = vmatprep.subr.mxu0 0.0
    %3261 = vmatpush1.msra.mxu0 0.0
    %3262 = vmatprep.subr.mxu0 0.0
    %3263 = vmatpush1.msra.mxu0 0.0
    %3264 = vmatprep.subr.mxu0 0.0
    %3265 = vmatpush1.msra.mxu0 0.0
    %3266 = vmatprep.subr.mxu0 0.0
    %3267 = vmatpush1.msra.mxu0 0.0
    %3268 = vmatprep.subr.mxu0 0.0
    %3269 = vmatpush1.msra.mxu0 0.0
    %3270 = vmatprep.mubr.f32.mxu0 0.0
    %3271 = vmatmul.mubr.f32.gmra.mrb[0].mxu0 %v3204
    %v3272 = vpop.f32.mrb[0].mxu0
    %v3273 = vadd.f32 0.0, %v3272
    %v3274 = vpop.f32.mrb[0].mxu0
    %3275 = vdwg.mxu0
    %v3278 = vsel %vm436, %v2509, %v2502
    %v3279 = vsel %vm211, %v3278, 0
    %3281 = vmatprep.subr.mxu0 0.0
    %3282 = vmatpush1.msra.mxu0 %v86
    %3283 = vmatprep.subr.mxu0 0.0
    %3284 = vmatpush1.msra.mxu0 %v87
    %3285 = vmatprep.subr.mxu0 0.0
    %3286 = vmatpush1.msra.mxu0 %v88
    %3287 = vmatprep.subr.mxu0 0.0
    %3288 = vmatpush1.msra.mxu0 %v89
    %3289 = vmatprep.subr.mxu0 0.0
    %3290 = vmatpush1.msra.mxu0 0.0
    %3291 = vmatprep.subr.mxu0 0.0
    %3292 = vmatpush1.msra.mxu0 0.0
    %3293 = vmatprep.subr.mxu0 0.0
    %3294 = vmatpush1.msra.mxu0 0.0
    %3295 = vmatprep.subr.mxu0 0.0
    %3296 = vmatpush1.msra.mxu0 0.0
    %3297 = vmatprep.subr.mxu0 0.0
    %3298 = vmatpush1.msra.mxu0 0.0
    %3299 = vmatprep.subr.mxu0 0.0
    %3300 = vmatpush1.msra.mxu0 0.0
    %3301 = vmatprep.subr.mxu0 0.0
    %3302 = vmatpush1.msra.mxu0 0.0
    %3303 = vmatprep.subr.mxu0 0.0
    %3304 = vmatpush1.msra.mxu0 0.0
    %3305 = vmatprep.subr.mxu0 0.0
    %3306 = vmatpush1.msra.mxu0 0.0
    %3307 = vmatprep.subr.mxu0 0.0
    %3308 = vmatpush1.msra.mxu0 0.0
    %3309 = vmatprep.subr.mxu0 0.0
    %3310 = vmatpush1.msra.mxu0 0.0
    %3311 = vmatprep.subr.mxu0 0.0
    %3312 = vmatpush1.msra.mxu0 0.0
    %3313 = vmatprep.subr.mxu0 0.0
    %3314 = vmatpush1.msra.mxu0 0.0
    %3315 = vmatprep.subr.mxu0 0.0
    %3316 = vmatpush1.msra.mxu0 0.0
    %3317 = vmatprep.subr.mxu0 0.0
    %3318 = vmatpush1.msra.mxu0 0.0
    %3319 = vmatprep.subr.mxu0 0.0
    %3320 = vmatpush1.msra.mxu0 0.0
    %3321 = vmatprep.subr.mxu0 0.0
    %3322 = vmatpush1.msra.mxu0 0.0
    %3323 = vmatprep.subr.mxu0 0.0
    %3324 = vmatpush1.msra.mxu0 0.0
    %3325 = vmatprep.subr.mxu0 0.0
    %3326 = vmatpush1.msra.mxu0 0.0
    %3327 = vmatprep.subr.mxu0 0.0
    %3328 = vmatpush1.msra.mxu0 0.0
    %3329 = vmatprep.subr.mxu0 0.0
    %3330 = vmatpush1.msra.mxu0 0.0
    %3331 = vmatprep.subr.mxu0 0.0
    %3332 = vmatpush1.msra.mxu0 0.0
    %3333 = vmatprep.subr.mxu0 0.0
    %3334 = vmatpush1.msra.mxu0 0.0
    %3335 = vmatprep.subr.mxu0 0.0
    %3336 = vmatpush1.msra.mxu0 0.0
    %3337 = vmatprep.subr.mxu0 0.0
    %3338 = vmatpush1.msra.mxu0 0.0
    %3339 = vmatprep.subr.mxu0 0.0
    %3340 = vmatpush1.msra.mxu0 0.0
    %3341 = vmatprep.subr.mxu0 0.0
    %3342 = vmatpush1.msra.mxu0 0.0
    %3343 = vmatprep.subr.mxu0 0.0
    %3344 = vmatpush1.msra.mxu0 0.0
    %3345 = vmatprep.mubr.f32.mxu0 0.0
    %3346 = vmatmul.mubr.f32.gmra.mrb[0].mxu0 %v3279
    %v3347 = vpop.f32.mrb[0].mxu0
    %v3348 = vadd.f32 %v3273, %v3347
    %v3349 = vpop.f32.mrb[0].mxu0
    %3350 = vdwg.mxu0
    %v3351 = vadd.f32 %v3348, %v362
    %v3352 = vmul.f32 %v3351, %v369
    %v3355 = vunpack.c.l.s4 1966171168
    %v3356 = vunpack.c.0.s8 %v3355
    %v3357 = vlaneseq
    %v3358 = vshrl.u32 %v3357, 7
    %v3359 = vsub.s32 %v3356, %v3358
    %v3360 = vrot.slane %v3352, %v3359
    %v3361 = vcombine.high %v3360, %v3360
    %v3363 = vunpack.c.l.s4 1966171168
    %v3364 = vunpack.c.0.s8 %v3363
    %v3365 = vlaneseq
    %v3366 = vshrl.u32 %v3365, 7
    %v3367 = vsub.s32 %v3364, %v3366
    %v3368 = vrot.slane %v3360, %v3367
    %v3370 = vunpack.c.l.s4 1966171168
    %v3371 = vunpack.c.0.s8 %v3370
    %v3372 = vlaneseq
    %v3373 = vshrl.u32 %v3372, 7
    %v3374 = vsub.s32 %v3371, %v3373
    %v3375 = vrot.slane %v3361, %v3374
    %v3376 = vlaneseq
    %v3377 = vshrl.u32 %v3376, 7
    %v3378 = vsub.s32 0, %v3377
    %v3379 = vrot.slane %v3368, %v3378
    %v3380 = vlaneseq
    %v3381 = vshrl.u32 %v3380, 7
    %v3382 = vsub.s32 0, %v3381
    %v3383 = vrot.slane %v3375, %v3382
    %v3386 = vmul.f32 %v79, %v3379
    %v3387 = vmul.f32 %v80, %v3383
    %v3388 = vsel %vm211, %v3386, 0.0
    %3389 = vadd.xlane.f32.xlu0 %v3388
    %v3390 = vpop.xlane.xlu0 %3389
    %v3391 = vsel %vm211, %v3387, 0.0
    %3392 = vadd.xlane.f32.xlu0 %v3391
    %v3393 = vpop.xlane.xlu0 %3392
    %v3394 = vadd.f32 %v3390, %v420
    %v3395 = vadd.f32 %v3393, %v420
    %v3398 = vlaneseq
    %v3399 = vshrl.u32 %v3398, 7
    %v3400 = vsub.s32 %v427, %v3399
    %v3401 = vrot.slane %v3394, %v3400
    %v3402 = vlaneseq
    %v3403 = vshrl.u32 %v3402, 7
    %v3404 = vsub.s32 %v427, %v3403
    %v3405 = vrot.slane %v3395, %v3404
    %v3406 = vsel %vm436, %v3405, %v3401
    %v3408 = vsel %vm439, %v3406, -inf
    %3409 = vmax.xlane.f32.xlu0 %v3408
    %v3410 = vpop.xlane.xlu0 %3409
    %v3412 = vlaneseq
    %v3413 = vshrl.u32 %v3412, 7
    %v3414 = vsub.s32 0, %v3413
    %v3415 = vrot.slane %v3410, %v3414
    %v3416 = vlaneseq
    %v3417 = vshrl.u32 %v3416, 7
    %v3418 = vsub.s32 1, %v3417
    %v3419 = vrot.slane %v3410, %v3418
    %v3422 = vsub.f32 %v3394, %v3415
    %v3423 = vsub.f32 %v3395, %v3419
    %v3424 = vmul.f32 %v3422, 1.442695
    %v3425 = vpow.pop %v3424
    %v3426 = vmul.f32 %v3423, 1.442695
    %v3427 = vpow.pop %v3426
    %3430 = vset.pattern.permute.xlu0 0
    %3431 = vperm.xlu0 %3430, %v3425
    %v3432 = vpop.permute.xlu0 %3431
    %3433 = vset.pattern.permute.xlu0 0
    %3434 = vperm.xlu0 %3433, %v3427
    %v3435 = vpop.permute.xlu0 %3434
    %v3436 = vlaneseq
    %v3437 = vshrl.u32 %v3436, 7
    %v3438 = vsub.s32 %v427, %v3437
    %v3439 = vrot.slane %v3432, %v3438
    %v3440 = vlaneseq
    %v3441 = vshrl.u32 %v3440, 7
    %v3442 = vsub.s32 %v427, %v3441
    %v3443 = vrot.slane %v3435, %v3442
    %v3444 = vsel %vm436, %v3443, %v3439
    %v3446 = vsel %vm439, %v3444, 0.0
    %3447 = vadd.xlane.f32.xlu0 %v3446
    %v3448 = vpop.xlane.xlu0 %3447
    %v3449 = vrcp.pop %v3448
    %v3451 = vlaneseq
    %v3452 = vshrl.u32 %v3451, 7
    %v3453 = vsub.s32 0, %v3452
    %v3454 = vrot.slane %v3449, %v3453
    %v3455 = vlaneseq
    %v3456 = vshrl.u32 %v3455, 7
    %v3457 = vsub.s32 1, %v3456
    %v3458 = vrot.slane %v3449, %v3457
    %v3461 = vmul.f32 %v3425, %v3454
    %v3462 = vmul.f32 %v3427, %v3458
    %3464 = vset.pattern.permute.xlu0 0
    %3465 = vperm.xlu0 %3464, %v3461
    %v3466 = vpop.permute.xlu0 %3465
    %3469 = vset.pattern.permute.xlu0 0
    %3470 = vperm.xlu0 %3469, %v3462
    %v3471 = vpop.permute.xlu0 %3470
    %v3473 = vmul.f32 %v3466, %v79
    %v3474 = vmul.f32 %v3471, %v80
    %v3475 = vsel %vm211, %v3473, 0.0
    %v3476 = vrot.slane %v3475, 4
    %v3477 = vadd.f32 %v3475, %v3476
    %v3478 = vrot.slane %v3477, 2
    %v3479 = vadd.f32 %v3477, %v3478
    %v3480 = vrot.slane %v3479, 1
    %v3481 = vadd.f32 %v3479, %v3480
    %v3482 = vsel %vm211, %v3474, 0.0
    %v3483 = vrot.slane %v3482, 4
    %v3484 = vadd.f32 %v3482, %v3483
    %v3485 = vrot.slane %v3484, 2
    %v3486 = vadd.f32 %v3484, %v3485
    %v3487 = vrot.slane %v3486, 1
    %v3488 = vadd.f32 %v3486, %v3487
    %v3490 = vsel %vm211, %v3115, 0
    %3492 = vmatprep.subr.mxu0 0.0
    %3493 = vmatpush1.msra.mxu0 %v97
    %3494 = vmatprep.subr.mxu0 0.0
    %3495 = vmatpush1.msra.mxu0 %v98
    %3496 = vmatprep.subr.mxu0 0.0
    %3497 = vmatpush1.msra.mxu0 %v99
    %3498 = vmatprep.subr.mxu0 0.0
    %3499 = vmatpush1.msra.mxu0 %v100
    %3500 = vmatprep.subr.mxu0 0.0
    %3501 = vmatpush1.msra.mxu0 0.0
    %3502 = vmatprep.subr.mxu0 0.0
    %3503 = vmatpush1.msra.mxu0 0.0
    %3504 = vmatprep.subr.mxu0 0.0
    %3505 = vmatpush1.msra.mxu0 0.0
    %3506 = vmatprep.subr.mxu0 0.0
    %3507 = vmatpush1.msra.mxu0 0.0
    %3508 = vmatprep.subr.mxu0 0.0
    %3509 = vmatpush1.msra.mxu0 0.0
    %3510 = vmatprep.subr.mxu0 0.0
    %3511 = vmatpush1.msra.mxu0 0.0
    %3512 = vmatprep.subr.mxu0 0.0
    %3513 = vmatpush1.msra.mxu0 0.0
    %3514 = vmatprep.subr.mxu0 0.0
    %3515 = vmatpush1.msra.mxu0 0.0
    %3516 = vmatprep.subr.mxu0 0.0
    %3517 = vmatpush1.msra.mxu0 0.0
    %3518 = vmatprep.subr.mxu0 0.0
    %3519 = vmatpush1.msra.mxu0 0.0
    %3520 = vmatprep.subr.mxu0 0.0
    %3521 = vmatpush1.msra.mxu0 0.0
    %3522 = vmatprep.subr.mxu0 0.0
    %3523 = vmatpush1.msra.mxu0 0.0
    %3524 = vmatprep.subr.mxu0 0.0
    %3525 = vmatpush1.msra.mxu0 0.0
    %3526 = vmatprep.subr.mxu0 0.0
    %3527 = vmatpush1.msra.mxu0 0.0
    %3528 = vmatprep.subr.mxu0 0.0
    %3529 = vmatpush1.msra.mxu0 0.0
    %3530 = vmatprep.subr.mxu0 0.0
    %3531 = vmatpush1.msra.mxu0 0.0
    %3532 = vmatprep.subr.mxu0 0.0
    %3533 = vmatpush1.msra.mxu0 0.0
    %3534 = vmatprep.subr.mxu0 0.0
    %3535 = vmatpush1.msra.mxu0 0.0
    %3536 = vmatprep.subr.mxu0 0.0
    %3537 = vmatpush1.msra.mxu0 0.0
    %3538 = vmatprep.subr.mxu0 0.0
    %3539 = vmatpush1.msra.mxu0 0.0
    %3540 = vmatprep.subr.mxu0 0.0
    %3541 = vmatpush1.msra.mxu0 0.0
    %3542 = vmatprep.subr.mxu0 0.0
    %3543 = vmatpush1.msra.mxu0 0.0
    %3544 = vmatprep.subr.mxu0 0.0
    %3545 = vmatpush1.msra.mxu0 0.0
    %3546 = vmatprep.subr.mxu0 0.0
    %3547 = vmatpush1.msra.mxu0 0.0
    %3548 = vmatprep.subr.mxu0 0.0
    %3549 = vmatpush1.msra.mxu0 0.0
    %3550 = vmatprep.subr.mxu0 0.0
    %3551 = vmatpush1.msra.mxu0 0.0
    %3552 = vmatprep.subr.mxu0 0.0
    %3553 = vmatpush1.msra.mxu0 0.0
    %3554 = vmatprep.subr.mxu0 0.0
    %3555 = vmatpush1.msra.mxu0 0.0
    %3556 = vmatprep.mubr.f32.mxu0 0.0
    %3557 = vmatmul.mubr.f32.gmra.mrb[0].mxu0 %v3490
    %v3558 = vpop.f32.mrb[0].mxu0
    %v3559 = vadd.f32 %v525, %v3558
    %v3560 = vpop.f32.mrb[0].mxu0
    %3561 = vdwg.mxu0
    %v3562 = vmul.f32 %v3481, %v601
    %v3563 = vmul.f32 %v3488, %v601
    %v3566 = vrot.slane %v3563, 7
    %v3567 = vsel %vm436, %v3566, %v3562
    %v3568 = vsel %vm211, %v3567, 0
    %3570 = vmatprep.subr.mxu0 0.0
    %3571 = vmatpush1.msra.mxu0 %v102
    %3572 = vmatprep.subr.mxu0 0.0
    %3573 = vmatpush1.msra.mxu0 %v103
    %3574 = vmatprep.subr.mxu0 0.0
    %3575 = vmatpush1.msra.mxu0 %v104
    %3576 = vmatprep.subr.mxu0 0.0
    %3577 = vmatpush1.msra.mxu0 %v105
    %3578 = vmatprep.subr.mxu0 0.0
    %3579 = vmatpush1.msra.mxu0 0.0
    %3580 = vmatprep.subr.mxu0 0.0
    %3581 = vmatpush1.msra.mxu0 0.0
    %3582 = vmatprep.subr.mxu0 0.0
    %3583 = vmatpush1.msra.mxu0 0.0
    %3584 = vmatprep.subr.mxu0 0.0
    %3585 = vmatpush1.msra.mxu0 0.0
    %3586 = vmatprep.subr.mxu0 0.0
    %3587 = vmatpush1.msra.mxu0 0.0
    %3588 = vmatprep.subr.mxu0 0.0
    %3589 = vmatpush1.msra.mxu0 0.0
    %3590 = vmatprep.subr.mxu0 0.0
    %3591 = vmatpush1.msra.mxu0 0.0
    %3592 = vmatprep.subr.mxu0 0.0
    %3593 = vmatpush1.msra.mxu0 0.0
    %3594 = vmatprep.subr.mxu0 0.0
    %3595 = vmatpush1.msra.mxu0 0.0
    %3596 = vmatprep.subr.mxu0 0.0
    %3597 = vmatpush1.msra.mxu0 0.0
    %3598 = vmatprep.subr.mxu0 0.0
    %3599 = vmatpush1.msra.mxu0 0.0
    %3600 = vmatprep.subr.mxu0 0.0
    %3601 = vmatpush1.msra.mxu0 0.0
    %3602 = vmatprep.subr.mxu0 0.0
    %3603 = vmatpush1.msra.mxu0 0.0
    %3604 = vmatprep.subr.mxu0 0.0
    %3605 = vmatpush1.msra.mxu0 0.0
    %3606 = vmatprep.subr.mxu0 0.0
    %3607 = vmatpush1.msra.mxu0 0.0
    %3608 = vmatprep.subr.mxu0 0.0
    %3609 = vmatpush1.msra.mxu0 0.0
    %3610 = vmatprep.subr.mxu0 0.0
    %3611 = vmatpush1.msra.mxu0 0.0
    %3612 = vmatprep.subr.mxu0 0.0
    %3613 = vmatpush1.msra.mxu0 0.0
    %3614 = vmatprep.subr.mxu0 0.0
    %3615 = vmatpush1.msra.mxu0 0.0
    %3616 = vmatprep.subr.mxu0 0.0
    %3617 = vmatpush1.msra.mxu0 0.0
    %3618 = vmatprep.subr.mxu0 0.0
    %3619 = vmatpush1.msra.mxu0 0.0
    %3620 = vmatprep.subr.mxu0 0.0
    %3621 = vmatpush1.msra.mxu0 0.0
    %3622 = vmatprep.subr.mxu0 0.0
    %3623 = vmatpush1.msra.mxu0 0.0
    %3624 = vmatprep.subr.mxu0 0.0
    %3625 = vmatpush1.msra.mxu0 0.0
    %3626 = vmatprep.subr.mxu0 0.0
    %3627 = vmatpush1.msra.mxu0 0.0
    %3628 = vmatprep.subr.mxu0 0.0
    %3629 = vmatpush1.msra.mxu0 0.0
    %3630 = vmatprep.subr.mxu0 0.0
    %3631 = vmatpush1.msra.mxu0 0.0
    %3632 = vmatprep.subr.mxu0 0.0
    %3633 = vmatpush1.msra.mxu0 0.0
    %3634 = vmatprep.mubr.f32.mxu0 0.0
    %3635 = vmatmul.mubr.f32.gmra.mrb[0].mxu0 %v3568
    %v3636 = vpop.f32.mrb[0].mxu0
    %v3637 = vadd.f32 0.0, %v3636
    %v3638 = vpop.f32.mrb[0].mxu0
    %3639 = vdwg.mxu0
    %3640 = vmatprep.subr.mxu0 0.0
    %3641 = vmatpush1.msra.mxu0 %v106
    %3642 = vmatprep.subr.mxu0 0.0
    %3643 = vmatpush1.msra.mxu0 %v107
    %3644 = vmatprep.subr.mxu0 0.0
    %3645 = vmatpush1.msra.mxu0 %v108
    %3646 = vmatprep.subr.mxu0 0.0
    %3647 = vmatpush1.msra.mxu0 %v109
    %3648 = vmatprep.subr.mxu0 0.0
    %3649 = vmatpush1.msra.mxu0 0.0
    %3650 = vmatprep.subr.mxu0 0.0
    %3651 = vmatpush1.msra.mxu0 0.0
    %3652 = vmatprep.subr.mxu0 0.0
    %3653 = vmatpush1.msra.mxu0 0.0
    %3654 = vmatprep.subr.mxu0 0.0
    %3655 = vmatpush1.msra.mxu0 0.0
    %3656 = vmatprep.subr.mxu0 0.0
    %3657 = vmatpush1.msra.mxu0 0.0
    %3658 = vmatprep.subr.mxu0 0.0
    %3659 = vmatpush1.msra.mxu0 0.0
    %3660 = vmatprep.subr.mxu0 0.0
    %3661 = vmatpush1.msra.mxu0 0.0
    %3662 = vmatprep.subr.mxu0 0.0
    %3663 = vmatpush1.msra.mxu0 0.0
    %3664 = vmatprep.subr.mxu0 0.0
    %3665 = vmatpush1.msra.mxu0 0.0
    %3666 = vmatprep.subr.mxu0 0.0
    %3667 = vmatpush1.msra.mxu0 0.0
    %3668 = vmatprep.subr.mxu0 0.0
    %3669 = vmatpush1.msra.mxu0 0.0
    %3670 = vmatprep.subr.mxu0 0.0
    %3671 = vmatpush1.msra.mxu0 0.0
    %3672 = vmatprep.subr.mxu0 0.0
    %3673 = vmatpush1.msra.mxu0 0.0
    %3674 = vmatprep.subr.mxu0 0.0
    %3675 = vmatpush1.msra.mxu0 0.0
    %3676 = vmatprep.subr.mxu0 0.0
    %3677 = vmatpush1.msra.mxu0 0.0
    %3678 = vmatprep.subr.mxu0 0.0
    %3679 = vmatpush1.msra.mxu0 0.0
    %3680 = vmatprep.subr.mxu0 0.0
    %3681 = vmatpush1.msra.mxu0 0.0
    %3682 = vmatprep.subr.mxu0 0.0
    %3683 = vmatpush1.msra.mxu0 0.0
    %3684 = vmatprep.subr.mxu0 0.0
    %3685 = vmatpush1.msra.mxu0 0.0
    %3686 = vmatprep.subr.mxu0 0.0
    %3687 = vmatpush1.msra.mxu0 0.0
    %3688 = vmatprep.subr.mxu0 0.0
    %3689 = vmatpush1.msra.mxu0 0.0
    %3690 = vmatprep.subr.mxu0 0.0
    %3691 = vmatpush1.msra.mxu0 0.0
    %3692 = vmatprep.subr.mxu0 0.0
    %3693 = vmatpush1.msra.mxu0 0.0
    %3694 = vmatprep.subr.mxu0 0.0
    %3695 = vmatpush1.msra.mxu0 0.0
    %3696 = vmatprep.subr.mxu0 0.0
    %3697 = vmatpush1.msra.mxu0 0.0
    %3698 = vmatprep.subr.mxu0 0.0
    %3699 = vmatpush1.msra.mxu0 0.0
    %3700 = vmatprep.subr.mxu0 0.0
    %3701 = vmatpush1.msra.mxu0 0.0
    %3702 = vmatprep.subr.mxu0 0.0
    %3703 = vmatpush1.msra.mxu0 0.0
    %3704 = vmatprep.mubr.f32.mxu0 0.0
    %3705 = vmatmul.mubr.f32.gmra.mrb[0].mxu0 %v3568
    %v3706 = vpop.f32.mrb[0].mxu0
    %v3707 = vadd.f32 0.0, %v3706
    %v3708 = vpop.f32.mrb[0].mxu0
    %3709 = vdwg.mxu0
    %v3710 = vmul.f32 %v3559, %v3637
    %v3711 = vadd.f32 %v3710, %v3707
    %v3712 = vmul.f32 %v3562, %v757
    %v3713 = vmul.f32 %v3563, %v757
    %v3716 = vrot.slane %v3713, 7
    %v3717 = vsel %vm436, %v3716, %v3712
    %v3719 = vsel %vm766, %v3717, 0.0
    %3720 = vadd.xlane.f32.xlu0 %v3719
    %v3721 = vpop.xlane.xlu0 %3720
    %v3722 = vadd.f32 %v3721, %v774
    %v3725 = vunpack.c.l.s4 1966171168
    %v3726 = vunpack.c.0.s8 %v3725
    %v3727 = vlaneseq
    %v3728 = vshrl.u32 %v3727, 7
    %v3729 = vsub.s32 %v3726, %v3728
    %v3730 = vrot.slane %v3711, %v3729
    %v3731 = vcombine.high %v3730, %v3730
    %v3733 = vunpack.c.l.s4 1966171168
    %v3734 = vunpack.c.0.s8 %v3733
    %v3735 = vlaneseq
    %v3736 = vshrl.u32 %v3735, 7
    %v3737 = vsub.s32 %v3734, %v3736
    %v3738 = vrot.slane %v3730, %v3737
    %v3740 = vunpack.c.l.s4 1966171168
    %v3741 = vunpack.c.0.s8 %v3740
    %v3742 = vlaneseq
    %v3743 = vshrl.u32 %v3742, 7
    %v3744 = vsub.s32 %v3741, %v3743
    %v3745 = vrot.slane %v3731, %v3744
    %v3746 = vlaneseq
    %v3747 = vshrl.u32 %v3746, 7
    %v3748 = vsub.s32 0, %v3747
    %v3749 = vrot.slane %v3738, %v3748
    %v3750 = vlaneseq
    %v3751 = vshrl.u32 %v3750, 7
    %v3752 = vsub.s32 0, %v3751
    %v3753 = vrot.slane %v3745, %v3752
    %v3756 = vmul.f32 %v82, %v3749
    %v3757 = vmul.f32 %v83, %v3749
    %v3758 = vmul.f32 %v84, %v3753
    %v3759 = vmul.f32 %v85, %v3753
    %v3760 = vsel %vm211, %v3756, 0.0
    %3761 = vadd.xlane.f32.xlu0 %v3760
    %v3762 = vpop.xlane.xlu0 %3761
    %v3763 = vsel %vm211, %v3757, 0.0
    %3764 = vadd.xlane.f32.xlu0 %v3763
    %v3765 = vpop.xlane.xlu0 %3764
    %v3766 = vsel %vm211, %v3758, 0.0
    %3767 = vadd.xlane.f32.xlu0 %v3766
    %v3768 = vpop.xlane.xlu0 %3767
    %v3769 = vsel %vm211, %v3759, 0.0
    %3770 = vadd.xlane.f32.xlu0 %v3769
    %v3771 = vpop.xlane.xlu0 %3770
    %3773 = vset.pattern.permute.xlu0 0
    %3774 = vperm.xlu0 %3773, %v3722
    %v3775 = vpop.permute.xlu0 %3774
    %v3776 = vlaneseq
    %v3777 = vshrl.u32 %v3776, 7
    %v3778 = vsub.s32 0, %v3777
    %v3779 = vrot.slane %v3775, %v3778
    %v3780 = vlaneseq
    %v3781 = vshrl.u32 %v3780, 7
    %v3782 = vsub.s32 1, %v3781
    %v3783 = vrot.slane %v3775, %v3782
    %v3786 = vadd.f32 %v3762, %v3779
    %v3787 = vadd.f32 %v3765, %v3779
    %v3788 = vadd.f32 %v3768, %v3783
    %v3789 = vadd.f32 %v3771, %v3783
    %3794 = vset.pattern.permute.xlu0 0
    %3795 = vperm.xlu0 %3794, %v3786
    %v3796 = vpop.permute.xlu0 %3795
    %3797 = vset.pattern.permute.xlu0 0
    %3798 = vperm.xlu0 %3797, %v3787
    %v3799 = vpop.permute.xlu0 %3798
    %3800 = vset.pattern.permute.xlu0 0
    %3801 = vperm.xlu0 %3800, %v3788
    %v3802 = vpop.permute.xlu0 %3801
    %3803 = vset.pattern.permute.xlu0 0
    %3804 = vperm.xlu0 %3803, %v3789
    %v3805 = vpop.permute.xlu0 %3804
    %v3806 = vlaneseq
    %v3807 = vshrl.u32 %v3806, 7
    %v3808 = vsub.s32 %v427, %v3807
    %v3809 = vrot.slane %v3796, %v3808
    %v3810 = vlaneseq
    %v3811 = vshrl.u32 %v3810, 7
    %v3812 = vsub.s32 %v864, %v3811
    %v3813 = vrot.slane %v3799, %v3812
    %v3814 = vsel %vm869, %v3813, %v3809
    %v3815 = vlaneseq
    %v3816 = vshrl.u32 %v3815, 7
    %v3817 = vsub.s32 %v427, %v3816
    %v3818 = vrot.slane %v3802, %v3817
    %v3819 = vlaneseq
    %v3820 = vshrl.u32 %v3819, 7
    %v3821 = vsub.s32 %v864, %v3820
    %v3822 = vrot.slane %v3805, %v3821
    %v3823 = vsel %vm869, %v3822, %v3818
    %v3824 = vsel %vm436, %v3823, %v3814
    %v3826 = vsel %vm882, %v3824, -inf
    %3827 = vmax.xlane.f32.xlu0 %v3826
    %v3828 = vpop.xlane.xlu0 %3827
    %v3830 = vlaneseq
    %v3831 = vshrl.u32 %v3830, 7
    %v3832 = vsub.s32 0, %v3831
    %v3833 = vrot.slane %v3828, %v3832
    %v3834 = vlaneseq
    %v3835 = vshrl.u32 %v3834, 7
    %v3836 = vsub.s32 1, %v3835
    %v3837 = vrot.slane %v3828, %v3836
    %v3840 = vsub.f32 %v3786, %v3833
    %v3841 = vsub.f32 %v3787, %v3833
    %v3842 = vsub.f32 %v3788, %v3837
    %v3843 = vsub.f32 %v3789, %v3837
    %v3844 = vmul.f32 %v3840, 1.442695
    %v3845 = vpow.pop %v3844
    %v3846 = vmul.f32 %v3841, 1.442695
    %v3847 = vpow.pop %v3846
    %v3848 = vmul.f32 %v3842, 1.442695
    %v3849 = vpow.pop %v3848
    %v3850 = vmul.f32 %v3843, 1.442695
    %v3851 = vpow.pop %v3850
    %3856 = vset.pattern.permute.xlu0 0
    %3857 = vperm.xlu0 %3856, %v3845
    %v3858 = vpop.permute.xlu0 %3857
    %3859 = vset.pattern.permute.xlu0 0
    %3860 = vperm.xlu0 %3859, %v3847
    %v3861 = vpop.permute.xlu0 %3860
    %3862 = vset.pattern.permute.xlu0 0
    %3863 = vperm.xlu0 %3862, %v3849
    %v3864 = vpop.permute.xlu0 %3863
    %3865 = vset.pattern.permute.xlu0 0
    %3866 = vperm.xlu0 %3865, %v3851
    %v3867 = vpop.permute.xlu0 %3866
    %v3868 = vlaneseq
    %v3869 = vshrl.u32 %v3868, 7
    %v3870 = vsub.s32 %v427, %v3869
    %v3871 = vrot.slane %v3858, %v3870
    %v3872 = vlaneseq
    %v3873 = vshrl.u32 %v3872, 7
    %v3874 = vsub.s32 %v864, %v3873
    %v3875 = vrot.slane %v3861, %v3874
    %v3876 = vsel %vm869, %v3875, %v3871
    %v3877 = vlaneseq
    %v3878 = vshrl.u32 %v3877, 7
    %v3879 = vsub.s32 %v427, %v3878
    %v3880 = vrot.slane %v3864, %v3879
    %v3881 = vlaneseq
    %v3882 = vshrl.u32 %v3881, 7
    %v3883 = vsub.s32 %v864, %v3882
    %v3884 = vrot.slane %v3867, %v3883
    %v3885 = vsel %vm869, %v3884, %v3880
    %v3886 = vsel %vm436, %v3885, %v3876
    %v3888 = vsel %vm882, %v3886, 0.0
    %3889 = vadd.xlane.f32.xlu0 %v3888
    %v3890 = vpop.xlane.xlu0 %3889
    %v3891 = vrcp.pop %v3890
    %v3893 = vlaneseq
    %v3894 = vshrl.u32 %v3893, 7
    %v3895 = vsub.s32 0, %v3894
    %v3896 = vrot.slane %v3891, %v3895
    %v3897 = vlaneseq
    %v3898 = vshrl.u32 %v3897, 7
    %v3899 = vsub.s32 1, %v3898
    %v3900 = vrot.slane %v3891, %v3899
    %v3903 = vmul.f32 %v3845, %v3896
    %v3904 = vmul.f32 %v3847, %v3896
    %v3905 = vmul.f32 %v3849, %v3900
    %v3906 = vmul.f32 %v3851, %v3900
    %3908 = vset.pattern.permute.xlu0 0
    %3909 = vperm.xlu0 %3908, %v3903
    %v3910 = vpop.permute.xlu0 %3909
    %3913 = vset.pattern.permute.xlu0 0
    %3914 = vperm.xlu0 %3913, %v3904
    %v3915 = vpop.permute.xlu0 %3914
    %3918 = vset.pattern.permute.xlu0 0
    %3919 = vperm.xlu0 %3918, %v3905
    %v3920 = vpop.permute.xlu0 %3919
    %3923 = vset.pattern.permute.xlu0 0
    %3924 = vperm.xlu0 %3923, %v3906
    %v3925 = vpop.permute.xlu0 %3924
    %v3927 = vmul.f32 %v3910, %v82
    %v3928 = vmul.f32 %v3915, %v83
    %v3929 = vmul.f32 %v3920, %v84
    %v3930 = vmul.f32 %v3925, %v85
    %v3931 = vsel %vm211, %v3927, 0.0
    %v3932 = vsel %vm211, %v3928, 0.0
    %v3933 = vadd.f32 %v3931, %v3932
    %v3934 = vrot.slane %v3933, 4
    %v3935 = vadd.f32 %v3933, %v3934
    %v3936 = vrot.slane %v3935, 2
    %v3937 = vadd.f32 %v3935, %v3936
    %v3938 = vrot.slane %v3937, 1
    %v3939 = vadd.f32 %v3937, %v3938
    %v3940 = vsel %vm211, %v3929, 0.0
    %v3941 = vsel %vm211, %v3930, 0.0
    %v3942 = vadd.f32 %v3940, %v3941
    %v3943 = vrot.slane %v3942, 4
    %v3944 = vadd.f32 %v3942, %v3943
    %v3945 = vrot.slane %v3944, 2
    %v3946 = vadd.f32 %v3944, %v3945
    %v3947 = vrot.slane %v3946, 1
    %v3948 = vadd.f32 %v3946, %v3947
    %3949 = vmatprep.subr.mxu0 0.0
    %3950 = vmatpush1.msra.mxu0 %v117
    %3951 = vmatprep.subr.mxu0 0.0
    %3952 = vmatpush1.msra.mxu0 %v118
    %3953 = vmatprep.subr.mxu0 0.0
    %3954 = vmatpush1.msra.mxu0 %v119
    %3955 = vmatprep.subr.mxu0 0.0
    %3956 = vmatpush1.msra.mxu0 %v120
    %3957 = vmatprep.subr.mxu0 0.0
    %3958 = vmatpush1.msra.mxu0 0.0
    %3959 = vmatprep.subr.mxu0 0.0
    %3960 = vmatpush1.msra.mxu0 0.0
    %3961 = vmatprep.subr.mxu0 0.0
    %3962 = vmatpush1.msra.mxu0 0.0
    %3963 = vmatprep.subr.mxu0 0.0
    %3964 = vmatpush1.msra.mxu0 0.0
    %3965 = vmatprep.subr.mxu0 0.0
    %3966 = vmatpush1.msra.mxu0 0.0
    %3967 = vmatprep.subr.mxu0 0.0
    %3968 = vmatpush1.msra.mxu0 0.0
    %3969 = vmatprep.subr.mxu0 0.0
    %3970 = vmatpush1.msra.mxu0 0.0
    %3971 = vmatprep.subr.mxu0 0.0
    %3972 = vmatpush1.msra.mxu0 0.0
    %3973 = vmatprep.subr.mxu0 0.0
    %3974 = vmatpush1.msra.mxu0 0.0
    %3975 = vmatprep.subr.mxu0 0.0
    %3976 = vmatpush1.msra.mxu0 0.0
    %3977 = vmatprep.subr.mxu0 0.0
    %3978 = vmatpush1.msra.mxu0 0.0
    %3979 = vmatprep.subr.mxu0 0.0
    %3980 = vmatpush1.msra.mxu0 0.0
    %3981 = vmatprep.subr.mxu0 0.0
    %3982 = vmatpush1.msra.mxu0 0.0
    %3983 = vmatprep.subr.mxu0 0.0
    %3984 = vmatpush1.msra.mxu0 0.0
    %3985 = vmatprep.subr.mxu0 0.0
    %3986 = vmatpush1.msra.mxu0 0.0
    %3987 = vmatprep.subr.mxu0 0.0
    %3988 = vmatpush1.msra.mxu0 0.0
    %3989 = vmatprep.subr.mxu0 0.0
    %3990 = vmatpush1.msra.mxu0 0.0
    %3991 = vmatprep.subr.mxu0 0.0
    %3992 = vmatpush1.msra.mxu0 0.0
    %3993 = vmatprep.subr.mxu0 0.0
    %3994 = vmatpush1.msra.mxu0 0.0
    %3995 = vmatprep.subr.mxu0 0.0
    %3996 = vmatpush1.msra.mxu0 0.0
    %3997 = vmatprep.subr.mxu0 0.0
    %3998 = vmatpush1.msra.mxu0 0.0
    %3999 = vmatprep.subr.mxu0 0.0
    %4000 = vmatpush1.msra.mxu0 0.0
    %4001 = vmatprep.subr.mxu0 0.0
    %4002 = vmatpush1.msra.mxu0 0.0
    %4003 = vmatprep.subr.mxu0 0.0
    %4004 = vmatpush1.msra.mxu0 0.0
    %4005 = vmatprep.subr.mxu0 0.0
    %4006 = vmatpush1.msra.mxu0 0.0
    %4007 = vmatprep.subr.mxu0 0.0
    %4008 = vmatpush1.msra.mxu0 0.0
    %4009 = vmatprep.subr.mxu0 0.0
    %4010 = vmatpush1.msra.mxu0 0.0
    %4011 = vmatprep.subr.mxu0 0.0
    %4012 = vmatpush1.msra.mxu0 0.0
    %4013 = vmatprep.mubr.f32.mxu0 0.0
    %4014 = vmatmul.mubr.f32.gmra.mrb[0].mxu0 %v3490
    %v4015 = vpop.f32.mrb[0].mxu0
    %v4016 = vadd.f32 0.0, %v4015
    %v4017 = vpop.f32.mrb[0].mxu0
    %4018 = vdwg.mxu0
    %v4021 = vsel %vm436, %v3948, %v3939
    %v4022 = vsel %vm211, %v4021, 0
    %4024 = vmatprep.subr.mxu0 0.0
    %4025 = vmatpush1.msra.mxu0 %v113
    %4026 = vmatprep.subr.mxu0 0.0
    %4027 = vmatpush1.msra.mxu0 %v114
    %4028 = vmatprep.subr.mxu0 0.0
    %4029 = vmatpush1.msra.mxu0 %v115
    %4030 = vmatprep.subr.mxu0 0.0
    %4031 = vmatpush1.msra.mxu0 %v116
    %4032 = vmatprep.subr.mxu0 0.0
    %4033 = vmatpush1.msra.mxu0 0.0
    %4034 = vmatprep.subr.mxu0 0.0
    %4035 = vmatpush1.msra.mxu0 0.0
    %4036 = vmatprep.subr.mxu0 0.0
    %4037 = vmatpush1.msra.mxu0 0.0
    %4038 = vmatprep.subr.mxu0 0.0
    %4039 = vmatpush1.msra.mxu0 0.0
    %4040 = vmatprep.subr.mxu0 0.0
    %4041 = vmatpush1.msra.mxu0 0.0
    %4042 = vmatprep.subr.mxu0 0.0
    %4043 = vmatpush1.msra.mxu0 0.0
    %4044 = vmatprep.subr.mxu0 0.0
    %4045 = vmatpush1.msra.mxu0 0.0
    %4046 = vmatprep.subr.mxu0 0.0
    %4047 = vmatpush1.msra.mxu0 0.0
    %4048 = vmatprep.subr.mxu0 0.0
    %4049 = vmatpush1.msra.mxu0 0.0
    %4050 = vmatprep.subr.mxu0 0.0
    %4051 = vmatpush1.msra.mxu0 0.0
    %4052 = vmatprep.subr.mxu0 0.0
    %4053 = vmatpush1.msra.mxu0 0.0
    %4054 = vmatprep.subr.mxu0 0.0
    %4055 = vmatpush1.msra.mxu0 0.0
    %4056 = vmatprep.subr.mxu0 0.0
    %4057 = vmatpush1.msra.mxu0 0.0
    %4058 = vmatprep.subr.mxu0 0.0
    %4059 = vmatpush1.msra.mxu0 0.0
    %4060 = vmatprep.subr.mxu0 0.0
    %4061 = vmatpush1.msra.mxu0 0.0
    %4062 = vmatprep.subr.mxu0 0.0
    %4063 = vmatpush1.msra.mxu0 0.0
    %4064 = vmatprep.subr.mxu0 0.0
    %4065 = vmatpush1.msra.mxu0 0.0
    %4066 = vmatprep.subr.mxu0 0.0
    %4067 = vmatpush1.msra.mxu0 0.0
    %4068 = vmatprep.subr.mxu0 0.0
    %4069 = vmatpush1.msra.mxu0 0.0
    %4070 = vmatprep.subr.mxu0 0.0
    %4071 = vmatpush1.msra.mxu0 0.0
    %4072 = vmatprep.subr.mxu0 0.0
    %4073 = vmatpush1.msra.mxu0 0.0
    %4074 = vmatprep.subr.mxu0 0.0
    %4075 = vmatpush1.msra.mxu0 0.0
    %4076 = vmatprep.subr.mxu0 0.0
    %4077 = vmatpush1.msra.mxu0 0.0
    %4078 = vmatprep.subr.mxu0 0.0
    %4079 = vmatpush1.msra.mxu0 0.0
    %4080 = vmatprep.subr.mxu0 0.0
    %4081 = vmatpush1.msra.mxu0 0.0
    %4082 = vmatprep.subr.mxu0 0.0
    %4083 = vmatpush1.msra.mxu0 0.0
    %4084 = vmatprep.subr.mxu0 0.0
    %4085 = vmatpush1.msra.mxu0 0.0
    %4086 = vmatprep.subr.mxu0 0.0
    %4087 = vmatpush1.msra.mxu0 0.0
    %4088 = vmatprep.mubr.f32.mxu0 0.0
    %4089 = vmatmul.mubr.f32.gmra.mrb[0].mxu0 %v4022
    %v4090 = vpop.f32.mrb[0].mxu0
    %v4091 = vadd.f32 %v4016, %v4090
    %v4092 = vpop.f32.mrb[0].mxu0
    %4093 = vdwg.mxu0
    %v4094 = vadd.f32 %v4091, %v1155
    %4095 = vst.msk [vmem:[#allocation4] sm:$0x3] %vm766, %v4094
    %v4096 = vld [vmem:[%s18] sm:$0xff]
    %v4097 = vld [vmem:[%s18 + $0x8] sm:$0xff]
    %v4098 = vld [vmem:[%s18 + $0x10] sm:$0xff]
    %v4099 = vld [vmem:[%s18 + $0x18] sm:$0xff]
    %v4100 = vld [vmem:[%s18 + $0x20] sm:$0xff]
    %v4101 = vld [vmem:[%s18 + $0x28] sm:$0xff]
    %v4102 = vld [vmem:[%s18 + $0x30] sm:$0xff]
    %v4103 = vld [vmem:[%s18 + $0x38] sm:$0xff]
    %v4104 = vld [vmem:[%s18 + $0x40] sm:$0xff]
    %v4105 = vld [vmem:[%s18 + $0x48] sm:$0xff]
    %v4106 = vld [vmem:[%s18 + $0x50] sm:$0xff]
    %v4107 = vld [vmem:[%s18 + $0x58] sm:$0xff]
    %4108 = vmatprep.subr.mxu0 0.0
    %4109 = vmatpush1.msra.mxu0 %v4100
    %4110 = vmatprep.subr.mxu0 0.0
    %4111 = vmatpush1.msra.mxu0 %v4101
    %4112 = vmatprep.subr.mxu0 0.0
    %4113 = vmatpush1.msra.mxu0 %v4102
    %4114 = vmatprep.subr.mxu0 0.0
    %4115 = vmatpush1.msra.mxu0 %v4103
    %4116 = vmatprep.subr.mxu0 0.0
    %4117 = vmatpush1.msra.mxu0 %v4104
    %4118 = vmatprep.subr.mxu0 0.0
    %4119 = vmatpush1.msra.mxu0 %v4105
    %4120 = vmatprep.subr.mxu0 0.0
    %4121 = vmatpush1.msra.mxu0 %v4106
    %4122 = vmatprep.subr.mxu0 0.0
    %4123 = vmatpush1.msra.mxu0 %v4107
    %4124 = vmatprep.subr.mxu0 0.0
    %4125 = vmatpush1.msra.mxu0 0.0
    %4126 = vmatprep.subr.mxu0 0.0
    %4127 = vmatpush1.msra.mxu0 0.0
    %4128 = vmatprep.subr.mxu0 0.0
    %4129 = vmatpush1.msra.mxu0 0.0
    %4130 = vmatprep.subr.mxu0 0.0
    %4131 = vmatpush1.msra.mxu0 0.0
    %4132 = vmatprep.subr.mxu0 0.0
    %4133 = vmatpush1.msra.mxu0 0.0
    %4134 = vmatprep.subr.mxu0 0.0
    %4135 = vmatpush1.msra.mxu0 0.0
    %4136 = vmatprep.subr.mxu0 0.0
    %4137 = vmatpush1.msra.mxu0 0.0
    %4138 = vmatprep.subr.mxu0 0.0
    %4139 = vmatpush1.msra.mxu0 0.0
    %4140 = vmatprep.subr.mxu0 0.0
    %4141 = vmatpush1.msra.mxu0 0.0
    %4142 = vmatprep.subr.mxu0 0.0
    %4143 = vmatpush1.msra.mxu0 0.0
    %4144 = vmatprep.subr.mxu0 0.0
    %4145 = vmatpush1.msra.mxu0 0.0
    %4146 = vmatprep.subr.mxu0 0.0
    %4147 = vmatpush1.msra.mxu0 0.0
    %4148 = vmatprep.subr.mxu0 0.0
    %4149 = vmatpush1.msra.mxu0 0.0
    %4150 = vmatprep.subr.mxu0 0.0
    %4151 = vmatpush1.msra.mxu0 0.0
    %4152 = vmatprep.subr.mxu0 0.0
    %4153 = vmatpush1.msra.mxu0 0.0
    %4154 = vmatprep.subr.mxu0 0.0
    %4155 = vmatpush1.msra.mxu0 0.0
    %4156 = vmatprep.subr.mxu0 0.0
    %4157 = vmatpush1.msra.mxu0 0.0
    %4158 = vmatprep.subr.mxu0 0.0
    %4159 = vmatpush1.msra.mxu0 0.0
    %4160 = vmatprep.subr.mxu0 0.0
    %4161 = vmatpush1.msra.mxu0 0.0
    %4162 = vmatprep.subr.mxu0 0.0
    %4163 = vmatpush1.msra.mxu0 0.0
    %4164 = vmatprep.subr.mxu0 0.0
    %4165 = vmatpush1.msra.mxu0 0.0
    %4166 = vmatprep.subr.mxu0 0.0
    %4167 = vmatpush1.msra.mxu0 0.0
    %4168 = vmatprep.subr.mxu0 0.0
    %4169 = vmatpush1.msra.mxu0 0.0
    %4170 = vmatprep.subr.mxu0 0.0
    %4171 = vmatpush1.msra.mxu0 0.0
    %4172 = vmatprep.mubr.f32.mxu0 0.0
    %4173 = vmatmul.mubr.f32.gmra.mrb[0].mxu0 %v139
    %v4174 = vpop.f32.mrb[0].mxu0
    %v4175 = vadd.f32 0.0, %v4174
    %v4176 = vpop.f32.mrb[0].mxu0
    %4177 = vdwg.mxu0
    %v4179 = vsel %vm211, %v4094, 0
    %4181 = vmatprep.subr.mxu0 0.0
    %4182 = vmatpush1.msra.mxu0 %v4096
    %4183 = vmatprep.subr.mxu0 0.0
    %4184 = vmatpush1.msra.mxu0 %v4097
    %4185 = vmatprep.subr.mxu0 0.0
    %4186 = vmatpush1.msra.mxu0 %v4098
    %4187 = vmatprep.subr.mxu0 0.0
    %4188 = vmatpush1.msra.mxu0 %v4099
    %4189 = vmatprep.subr.mxu0 0.0
    %4190 = vmatpush1.msra.mxu0 0.0
    %4191 = vmatprep.subr.mxu0 0.0
    %4192 = vmatpush1.msra.mxu0 0.0
    %4193 = vmatprep.subr.mxu0 0.0
    %4194 = vmatpush1.msra.mxu0 0.0
    %4195 = vmatprep.subr.mxu0 0.0
    %4196 = vmatpush1.msra.mxu0 0.0
    %4197 = vmatprep.subr.mxu0 0.0
    %4198 = vmatpush1.msra.mxu0 0.0
    %4199 = vmatprep.subr.mxu0 0.0
    %4200 = vmatpush1.msra.mxu0 0.0
    %4201 = vmatprep.subr.mxu0 0.0
    %4202 = vmatpush1.msra.mxu0 0.0
    %4203 = vmatprep.subr.mxu0 0.0
    %4204 = vmatpush1.msra.mxu0 0.0
    %4205 = vmatprep.subr.mxu0 0.0
    %4206 = vmatpush1.msra.mxu0 0.0
    %4207 = vmatprep.subr.mxu0 0.0
    %4208 = vmatpush1.msra.mxu0 0.0
    %4209 = vmatprep.subr.mxu0 0.0
    %4210 = vmatpush1.msra.mxu0 0.0
    %4211 = vmatprep.subr.mxu0 0.0
    %4212 = vmatpush1.msra.mxu0 0.0
    %4213 = vmatprep.subr.mxu0 0.0
    %4214 = vmatpush1.msra.mxu0 0.0
    %4215 = vmatprep.subr.mxu0 0.0
    %4216 = vmatpush1.msra.mxu0 0.0
    %4217 = vmatprep.subr.mxu0 0.0
    %4218 = vmatpush1.msra.mxu0 0.0
    %4219 = vmatprep.subr.mxu0 0.0
    %4220 = vmatpush1.msra.mxu0 0.0
    %4221 = vmatprep.subr.mxu0 0.0
    %4222 = vmatpush1.msra.mxu0 0.0
    %4223 = vmatprep.subr.mxu0 0.0
    %4224 = vmatpush1.msra.mxu0 0.0
    %4225 = vmatprep.subr.mxu0 0.0
    %4226 = vmatpush1.msra.mxu0 0.0
    %4227 = vmatprep.subr.mxu0 0.0
    %4228 = vmatpush1.msra.mxu0 0.0
    %4229 = vmatprep.subr.mxu0 0.0
    %4230 = vmatpush1.msra.mxu0 0.0
    %4231 = vmatprep.subr.mxu0 0.0
    %4232 = vmatpush1.msra.mxu0 0.0
    %4233 = vmatprep.subr.mxu0 0.0
    %4234 = vmatpush1.msra.mxu0 0.0
    %4235 = vmatprep.subr.mxu0 0.0
    %4236 = vmatpush1.msra.mxu0 0.0
    %4237 = vmatprep.subr.mxu0 0.0
    %4238 = vmatpush1.msra.mxu0 0.0
    %4239 = vmatprep.subr.mxu0 0.0
    %4240 = vmatpush1.msra.mxu0 0.0
    %4241 = vmatprep.subr.mxu0 0.0
    %4242 = vmatpush1.msra.mxu0 0.0
    %4243 = vmatprep.subr.mxu0 0.0
    %4244 = vmatpush1.msra.mxu0 0.0
    %4245 = vmatprep.mubr.f32.mxu0 0.0
    %4246 = vmatmul.mubr.f32.gmra.mrb[0].mxu0 %v4179
    %v4247 = vpop.f32.mrb[0].mxu0
    %v4248 = vadd.f32 %v4175, %v4247
    %v4249 = vpop.f32.mrb[0].mxu0
    %4250 = vdwg.mxu0
    %v4251 = vld [vmem:[%s19] sm:$0x1]
    %v4253 = vlaneseq
    %v4254 = vshrl.u32 %v4253, 7
    %v4255 = vsub.s32 0, %v4254
    %v4256 = vrot.slane %v4251, %v4255
    %v4258 = vadd.f32 %v4248, %v4256
    %vm4259 = vcmp.gt.f32.partialorder %v4258, 0.0
    %v4260 = vmin.f32 %v4258, 0.0
    %v4261 = vmul.f32 %v4260, 1.442695
    %v4262 = vpow.pop %v4261
    %v4263 = vsub.f32 %v4262, 1.0
    %v4264 = vsel %vm4259, %v4258, %v4263
    %v4265 = vld [vmem:[%s20] sm:$0xff]
    %v4266 = vld [vmem:[%s20 + $0x8] sm:$0xff]
    %v4267 = vld [vmem:[%s20 + $0x10] sm:$0xff]
    %v4268 = vld [vmem:[%s20 + $0x18] sm:$0xff]
    %v4269 = vld [vmem:[%s21] sm:$0x1]
    %v4271 = vlaneseq
    %v4272 = vshrl.u32 %v4271, 7
    %v4273 = vsub.s32 0, %v4272
    %v4274 = vrot.slane %v4269, %v4273
    %v4277 = vsel %vm211, %v4264, 0
    %4279 = vmatprep.subr.mxu0 0.0
    %4280 = vmatpush1.msra.mxu0 %v4265
    %4281 = vmatprep.subr.mxu0 0.0
    %4282 = vmatpush1.msra.mxu0 %v4266
    %4283 = vmatprep.subr.mxu0 0.0
    %4284 = vmatpush1.msra.mxu0 %v4267
    %4285 = vmatprep.subr.mxu0 0.0
    %4286 = vmatpush1.msra.mxu0 %v4268
    %4287 = vmatprep.subr.mxu0 0.0
    %4288 = vmatpush1.msra.mxu0 0.0
    %4289 = vmatprep.subr.mxu0 0.0
    %4290 = vmatpush1.msra.mxu0 0.0
    %4291 = vmatprep.subr.mxu0 0.0
    %4292 = vmatpush1.msra.mxu0 0.0
    %4293 = vmatprep.subr.mxu0 0.0
    %4294 = vmatpush1.msra.mxu0 0.0
    %4295 = vmatprep.subr.mxu0 0.0
    %4296 = vmatpush1.msra.mxu0 0.0
    %4297 = vmatprep.subr.mxu0 0.0
    %4298 = vmatpush1.msra.mxu0 0.0
    %4299 = vmatprep.subr.mxu0 0.0
    %4300 = vmatpush1.msra.mxu0 0.0
    %4301 = vmatprep.subr.mxu0 0.0
    %4302 = vmatpush1.msra.mxu0 0.0
    %4303 = vmatprep.subr.mxu0 0.0
    %4304 = vmatpush1.msra.mxu0 0.0
    %4305 = vmatprep.subr.mxu0 0.0
    %4306 = vmatpush1.msra.mxu0 0.0
    %4307 = vmatprep.subr.mxu0 0.0
    %4308 = vmatpush1.msra.mxu0 0.0
    %4309 = vmatprep.subr.mxu0 0.0
    %4310 = vmatpush1.msra.mxu0 0.0
    %4311 = vmatprep.subr.mxu0 0.0
    %4312 = vmatpush1.msra.mxu0 0.0
    %4313 = vmatprep.subr.mxu0 0.0
    %4314 = vmatpush1.msra.mxu0 0.0
    %4315 = vmatprep.subr.mxu0 0.0
    %4316 = vmatpush1.msra.mxu0 0.0
    %4317 = vmatprep.subr.mxu0 0.0
    %4318 = vmatpush1.msra.mxu0 0.0
    %4319 = vmatprep.subr.mxu0 0.0
    %4320 = vmatpush1.msra.mxu0 0.0
    %4321 = vmatprep.subr.mxu0 0.0
    %4322 = vmatpush1.msra.mxu0 0.0
    %4323 = vmatprep.subr.mxu0 0.0
    %4324 = vmatpush1.msra.mxu0 0.0
    %4325 = vmatprep.subr.mxu0 0.0
    %4326 = vmatpush1.msra.mxu0 0.0
    %4327 = vmatprep.subr.mxu0 0.0
    %4328 = vmatpush1.msra.mxu0 0.0
    %4329 = vmatprep.subr.mxu0 0.0
    %4330 = vmatpush1.msra.mxu0 0.0
    %4331 = vmatprep.subr.mxu0 0.0
    %4332 = vmatpush1.msra.mxu0 0.0
    %4333 = vmatprep.subr.mxu0 0.0
    %4334 = vmatpush1.msra.mxu0 0.0
    %4335 = vmatprep.subr.mxu0 0.0
    %4336 = vmatpush1.msra.mxu0 0.0
    %4337 = vmatprep.subr.mxu0 0.0
    %4338 = vmatpush1.msra.mxu0 0.0
    %4339 = vmatprep.subr.mxu0 0.0
    %4340 = vmatpush1.msra.mxu0 0.0
    %4341 = vmatprep.subr.mxu0 0.0
    %4342 = vmatpush1.msra.mxu0 0.0
    %4343 = vmatprep.mubr.f32.mxu0 0.0
    %4344 = vmatmul.mubr.f32.gmra.mrb[0].mxu0 %v4277
    %v4345 = vpop.f32.mrb[0].mxu0
    %v4346 = vadd.f32 %v4274, %v4345
    %v4347 = vpop.f32.mrb[0].mxu0
    %4348 = vdwg.mxu0
    %vm4349 = vcmask 222208
    %4350 = vst.msk [vmem:[#allocation6] sm:$0x3] %vm4349, %v4346
    // Predicated region
    $region90: #{tpu_custom_call.1} parent=1 // pred_check
      _
    $region91: #{tpu_custom_call.1} parent=1 // pred_check_branch
      %4352 = sbr.rel (0) target = $region93
    $region92: #{tpu_custom_call.1} parent=1 // pred_region
      %s4354 = ssub.s32 32, 32
      %4355 = vsyncadd [#allocation5], %s4354
      %s4357 = sshll.u32 [#allocation4], 4
      %s4358 = int_to_ptr.vmem [resolvable:$true] %s4357
      %4360 = dma.vmem_to_hbm [thread:$0]  %s4358, 32, %s22, [#allocation5]
    $region93: #{tpu_custom_call.1} parent=1 // pred_fallthru
      _
    // Predicated region
    $region94: #{tpu_custom_call.1} parent=1 // pred_check
      _
    $region95: #{tpu_custom_call.1} parent=1 // pred_check_branch
      %4362 = sbr.rel (0) target = $region97
    $region96: #{tpu_custom_call.1} parent=1 // pred_region
      %s4364 = ssub.s32 32, 32
      %4365 = vsyncadd [#allocation7], %s4364
      %s4367 = sshll.u32 [#allocation6], 4
      %s4368 = int_to_ptr.vmem [resolvable:$true] %s4367
      %4370 = dma.vmem_to_hbm [thread:$0]  %s4368, 32, %s23, [#allocation7]
    $region97: #{tpu_custom_call.1} parent=1 // pred_fallthru
      _
    // Predicated region
    $region98: #{tpu_custom_call.1} parent=1 // pred_check
      _
    $region99: #{tpu_custom_call.1} parent=1 // pred_check_branch
      %4372 = sbr.rel (0) target = $region101
    $region100: #{tpu_custom_call.1} parent=1 // pred_region
      %4373 = dma.done [#allocation5], 32
    $region101: #{tpu_custom_call.1} parent=1 // pred_fallthru
      _
    // Predicated region
    $region102: #{tpu_custom_call.1} parent=1 // pred_check
      _
    $region103: #{tpu_custom_call.1} parent=1 // pred_check_branch
      %4375 = sbr.rel (0) target = $region105
    $region104: #{tpu_custom_call.1} parent=1 // pred_region
      %4376 = dma.done [#allocation7], 32
    $region105: #{tpu_custom_call.1} parent=1 // pred_fallthru
      _
    %4377 = vsyncpa [#allocation5], 1
    %4378 = vsyncpa [#allocation7], 1

</llo_original>
